<compile_context>
chip_gen: v6e
topology: v6e:2x2x1
jax: 0.10.0
libtpu: 0.0.40
codegen_flags: <defaults>
</compile_context>

<pallas_src>
import functools

import jax
import jax.numpy as jnp
from jax.experimental import pallas as pl
from jax.experimental.pallas import tpu as pltpu


def _round_up(n, m):
    return (n + m - 1) // m * m


def _nbytes(shape, dtype):
    n = 1
    for s in shape:
        n *= s
    return n * jnp.dtype(dtype).itemsize


def _device_kind():
    try:
        return jax.devices()[0].device_kind.lower()
    except Exception:
        return ""


def _pick_batch_tile(batch, tb_max):
    """Batch tile: multiple of 16 sublanes (bf16 packing), <= tb_max, minimal padding."""
    if batch <= tb_max:
        return _round_up(batch, 16)
    best_tb = tb_max
    best_pad = _round_up(batch, tb_max) - batch
    for tb in range(tb_max, 127, -16):  # keep the MXU M-dim >= 128 for large batches
        pad = _round_up(batch, tb) - batch
        if pad < best_pad:
            best_tb, best_pad = tb, pad
            if pad == 0:
                break
    return best_tb


# ---------------------------------------------------------------------------
# Pallas kernel: one batch tile of the fused VAE forward
# ---------------------------------------------------------------------------
def vae_kernel(
    x_ref,       # (TB, D_pad)          bf16, flattened image tile
    eps_ref,     # (TB, LAT_PAD)        f32, reparameterization noise (zero-padded)
    w1_ref,      # (D_pad, HID_PAD)     bf16
    b1_ref,      # (1, HID_PAD)         f32
    wmulv_ref,   # (HID_PAD, 2*LAT_PAD) bf16, fused [mu | logvar] projection
    bmulv_ref,   # (1, 2*LAT_PAD)       f32
    w2_ref,      # (LAT_PAD, HID_PAD)   bf16
    b2_ref,      # (1, HID_PAD)         f32
    w3_ref,      # (HID_PAD, D_pad)     bf16
    b3_ref,      # (1, D_pad)           f32
    out_ref,     # (TB, D_pad)          bf16, sigmoid reconstruction
    mulv_ref,    # (TB, 2*LAT_PAD)      f32, packed [mu | logvar] output slab
    *,
    bf16_sigmoid,
):
    lat_pad = eps_ref.shape[-1]
    cdt = w1_ref.dtype  # matmul compute dtype (bf16)

    # ---------------- encoder ----------------
    h = jnp.dot(x_ref[...], w1_ref[...], preferred_element_type=jnp.float32)
    h = jnp.maximum(h + b1_ref[...], 0.0)

    # fused mu|logvar projection: one lane-dense matmul, slice at a 128-lane boundary
    mulv = jnp.dot(h.astype(cdt), wmulv_ref[...],
                   preferred_element_type=jnp.float32) + bmulv_ref[...]
    z_mean = mulv[:, :lat_pad]
    z_log_var = mulv[:, lat_pad:]

    # ---------------- reparameterize (f32) ----------------
    z = z_mean + jnp.exp(0.5 * z_log_var) * eps_ref[...]

    # ---------------- decoder ----------------
    h2 = jnp.dot(z.astype(cdt), w2_ref[...], preferred_element_type=jnp.float32)
    h2 = jnp.maximum(h2 + b2_ref[...], 0.0)

    logits = jnp.dot(h2.astype(cdt), w3_ref[...],
                     preferred_element_type=jnp.float32) + b3_ref[...]

    if bf16_sigmoid:
        # v6e/v7x: bf16 EUP -> halve the transcendental vreg count; store is bf16 anyway.
        rec = jax.nn.sigmoid(logits.astype(jnp.bfloat16))
    else:
        # v5e: no bf16 VPU/EUP, keep the elementwise tail in f32.
        rec = jax.nn.sigmoid(logits)
    out_ref[...] = rec.astype(out_ref.dtype)
    mulv_ref[...] = mulv.astype(mulv_ref.dtype)


# ---------------------------------------------------------------------------
# One-time weight packing (hoisted out of the per-call wrapper)
# ---------------------------------------------------------------------------
def pack_params(params, *, compute_dtype=jnp.bfloat16):
    """Pad to 128-lane multiples, fuse [mu|logvar] projection, cast to bf16 once."""
    d_in, hidden = params["w1"].shape
    latent = params["wmu"].shape[1]
    d_pad = _round_up(d_in, 128)
    hid_pad = _round_up(hidden, 128)
    lat_pad = _round_up(latent, 128)

    def pad2(a, rows, cols):
        return jnp.pad(a, ((0, rows - a.shape[0]), (0, cols - a.shape[1])))

    wmulv = jnp.concatenate(
        [pad2(params["wmu"], hidden, lat_pad), pad2(params["wlv"], hidden, lat_pad)],
        axis=1)
    bmulv = jnp.concatenate(
        [pad2(params["bmu"], 1, lat_pad), pad2(params["blv"], 1, lat_pad)], axis=1)

    return {
        "dims": (d_in, hidden, latent, d_pad, hid_pad, lat_pad),
        "w1": pad2(params["w1"], d_pad, hid_pad).astype(compute_dtype),
        "b1": pad2(params["b1"], 1, hid_pad).astype(jnp.float32),
        "wmulv": pad2(wmulv, hid_pad, 2 * lat_pad).astype(compute_dtype),
        "bmulv": bmulv.astype(jnp.float32),
        "w2": pad2(params["w2"], lat_pad, hid_pad).astype(compute_dtype),
        "b2": pad2(params["b2"], 1, hid_pad).astype(jnp.float32),
        "w3": pad2(params["w3"], hid_pad, d_pad).astype(compute_dtype),
        "b3": pad2(params["b3"], 1, d_pad).astype(jnp.float32),
    }


# ---------------------------------------------------------------------------
# Python wrapper: layout plumbing + pallas_call
# ---------------------------------------------------------------------------
def vae_forward(x_nchw, eps, packed, *, tb_max=None, bf16_tail=None):
    """Fused VAE forward. Returns (out_nchw [bf16], z_mean, z_log_var)."""
    B, C, H, W = x_nchw.shape
    d_in, hidden, latent, d_pad, hid_pad, lat_pad = packed["dims"]
    assert d_in == C * H * W, "packed params do not match input image size"
    compute_dtype = packed["w1"].dtype
    out_dtype = jnp.bfloat16  # bf16 reconstruction: halves writeback bytes / VMEM

    kind = _device_kind()
    is_v5 = "v5" in kind
    if tb_max is None:
        tb_max = 128 if is_v5 else 256   # v5e MXU is 4x128x128; v6e/v7x is 2x256x256
    if bf16_tail is None:
        bf16_tail = not is_v5            # v5e has no bf16 VPU/EUP

    tb = _pick_batch_tile(B, tb_max)
    b_pad = _round_up(B, tb)
    grid = (b_pad // tb,)

    # --- inputs: cast first (halves pad bytes), pad only when actually needed ---
    x_flat = x_nchw.reshape(B, d_in).astype(compute_dtype)
    if b_pad != B or d_pad != d_in:
        x_flat = jnp.pad(x_flat, ((0, b_pad - B), (0, d_pad - d_in)))
    eps_p = eps.astype(jnp.float32)
    if b_pad != B or lat_pad != latent:
        eps_p = jnp.pad(eps_p, ((0, b_pad - B), (0, lat_pad - latent)))
    # TODO(synk): eps could be generated in-kernel via pltpu.prng_seed/stateful_normal
    # (drops one HBM stream); kept explicit for parity with the reference & validation.

    w1, b1 = packed["w1"], packed["b1"]
    wmulv, bmulv = packed["wmulv"], packed["bmulv"]
    w2, b2 = packed["w2"], packed["b2"]
    w3, b3 = packed["w3"], packed["b3"]

    def batch_spec(cols):
        return pl.BlockSpec((tb, cols), lambda i: (i, 0))

    # --- VMEM budget: 2x streams (double-buffered) + weights; clamp per chip gen ---
    stream_bytes = (_nbytes((tb, d_pad), compute_dtype)
                    + _nbytes((tb, lat_pad), jnp.float32)
                    + _nbytes((tb, d_pad), out_dtype)
                    + _nbytes((tb, 2 * lat_pad), jnp.float32))
    weight_bytes = sum(_nbytes(packed[k].shape, packed[k].dtype)
                       for k in ("w1", "b1", "wmulv", "bmulv", "w2", "b2", "w3", "b3"))
    vmem_clamp = (96 << 20) if (is_v5 or "v6" in kind) else (48 << 20)  # v7x: 64 MiB VMEM
    vmem_limit = int(min(max(2 * stream_bytes + 2 * weight_bytes + (8 << 20),
                             16 << 20), vmem_clamp))
    # TODO(synk): for large d_in/hidden on v7x (64 MiB VMEM), add an "arbitrary" grid
    # axis that K-tiles d_pad for the w1 matmul / N-tiles it for w3 instead of holding
    # both fully resident.

    # --- advisory cost estimate (weights counted once: constant index_map) ---
    flops = 2 * b_pad * (d_pad * hid_pad + hid_pad * 2 * lat_pad
                         + lat_pad * hid_pad + hid_pad * d_pad)
    bytes_accessed = (_nbytes((b_pad, d_pad), compute_dtype)
                      + _nbytes((b_pad, lat_pad), jnp.float32)
                      + weight_bytes
                      + _nbytes((b_pad, d_pad), out_dtype)
                      + _nbytes((b_pad, 2 * lat_pad), jnp.float32))

    kernel = functools.partial(vae_kernel, bf16_sigmoid=bf16_tail)

    def build_call(single_buffer_weights):
        if single_buffer_weights:
            def weight_spec(shape):
                # constant index_map -> block never changes; single-buffer it
                return pl.BlockSpec(shape, lambda i: (0, 0),
                                    pipeline_mode=pl.Buffered(1))
        else:
            def weight_spec(shape):
                return pl.BlockSpec(shape, lambda i: (0, 0))
        return pl.pallas_call(
            kernel,
            out_shape=(
                jax.ShapeDtypeStruct((b_pad, d_pad), out_dtype),
                jax.ShapeDtypeStruct((b_pad, 2 * lat_pad), jnp.float32),
            ),
            grid=grid,
            in_specs=[
                batch_spec(d_pad),                                   # x
                batch_spec(lat_pad),                                 # eps
                weight_spec(w1.shape), weight_spec(b1.shape),        # encoder layer 1
                weight_spec(wmulv.shape), weight_spec(bmulv.shape),  # fused mu|logvar
                weight_spec(w2.shape), weight_spec(b2.shape),        # decoder layer 1
                weight_spec(w3.shape), weight_spec(b3.shape),        # decoder layer 2
            ],
            out_specs=(batch_spec(d_pad), batch_spec(2 * lat_pad)),
            compiler_params=pltpu.CompilerParams(
                dimension_semantics=("parallel",),
                vmem_limit_bytes=vmem_limit,
            ),
            cost_estimate=pl.CostEstimate(
                flops=int(flops),
                transcendentals=int(b_pad * (lat_pad + d_pad)),
                bytes_accessed=int(bytes_accessed),
            ),
        )

    args = (x_flat, eps_p, w1, b1, wmulv, bmulv, w2, b2, w3, b3)
    try:
        out_flat, mulv = build_call(True)(*args)
    except Exception:
        # Fallback if this JAX build rejects pl.Buffered(1) single-buffering.
        out_flat, mulv = build_call(False)(*args)

    out = out_flat[:B, :d_in].reshape(B, C, H, W)
    z_mean = mulv[:B, :latent]
    z_log_var = mulv[:B, lat_pad:lat_pad + latent]
    return out, z_mean, z_log_var


def init_params(key, d_in, hidden, latent):
    """Deterministic synthetic parameter init (scaled normals)."""
    ks = jax.random.split(key, 6)
    scale = lambda fan_in: 1.0 / jnp.sqrt(jnp.float32(fan_in))
    return {
        "w1": jax.random.normal(ks[0], (d_in, hidden), jnp.float32) * scale(d_in),
        "b1": jnp.zeros((1, hidden), jnp.float32),
        "wmu": jax.random.normal(ks[1], (hidden, latent), jnp.float32) * scale(hidden),
        "bmu": jnp.zeros((1, latent), jnp.float32),
        "wlv": jax.random.normal(ks[2], (hidden, latent), jnp.float32) * scale(hidden),
        "blv": jnp.zeros((1, latent), jnp.float32),
        "w2": jax.random.normal(ks[3], (latent, hidden), jnp.float32) * scale(latent),
        "b2": jnp.zeros((1, hidden), jnp.float32),
        "w3": jax.random.normal(ks[4], (hidden, d_in), jnp.float32) * scale(hidden),
        "b3": jnp.zeros((1, d_in), jnp.float32),
    }


if __name__ == "__main__":
    # Small shapes consistent with the module's (B, C, H, W) contract.
    B, C, H, W = 2, 4, 16, 16
    HIDDEN = 64
    LATENT = 32
    D_IN = C * H * W

    root = jax.random.PRNGKey(0)
    k_x, k_eps, k_param = jax.random.split(root, 3)

    x = jax.random.uniform(k_x, (B, C, H, W), jnp.float32)       # "image" input
    eps = jax.random.normal(k_eps, (B, LATENT), jnp.float32)     # reparam noise
    params = init_params(k_param, D_IN, HIDDEN, LATENT)
    packed = pack_params(params)                                 # one-time weight packing

    out, z_mean, z_log_var = vae_forward(x, eps, packed)
    jax.block_until_ready((out, z_mean, z_log_var))

    # Shape contract of the reference module's forward.
    assert out.shape == (B, C, H, W)
    assert z_mean.shape == (B, LATENT)
    assert z_log_var.shape == (B, LATENT)

    # Pure-JAX reference: bf16 matmul inputs, f32 accumulation, f32 elementwise tail.
    cdt = jnp.bfloat16
    x_flat = x.reshape(B, D_IN).astype(cdt)
    h = jnp.maximum(
        jnp.dot(x_flat, params["w1"].astype(cdt),
                preferred_element_type=jnp.float32) + params["b1"], 0.0)
    mu_r = jnp.dot(h.astype(cdt), params["wmu"].astype(cdt),
                   preferred_element_type=jnp.float32) + params["bmu"]
    lv_r = jnp.dot(h.astype(cdt), params["wlv"].astype(cdt),
                   preferred_element_type=jnp.float32) + params["blv"]
    z_r = mu_r + jnp.exp(0.5 * lv_r) * eps
    h2 = jnp.maximum(
        jnp.dot(z_r.astype(cdt), params["w2"].astype(cdt),
                preferred_element_type=jnp.float32) + params["b2"], 0.0)
    out_r = jax.nn.sigmoid(
        jnp.dot(h2.astype(cdt), params["w3"].astype(cdt),
                preferred_element_type=jnp.float32) + params["b3"]
    ).reshape(B, C, H, W)

    # mu/logvar are f32 outputs (unchanged path); reconstruction is stored in bf16
    # (and sigmoid may run in bf16 on v6e/v7x), so use a looser tolerance there.
    assert jnp.allclose(z_mean, mu_r, atol=1e-3, rtol=1e-3)
    assert jnp.allclose(z_log_var, lv_r, atol=1e-3, rtol=1e-3)
    assert jnp.allclose(out.astype(jnp.float32), out_r, atol=2e-2, rtol=2e-2)

    print("KERNEL_OK")
</pallas_src>

<mosaic_0001>
module attributes {stable_mosaic.version = 11 : i64} {
  func.func @vae_kernel(%arg0: i32, %arg1: memref<16x1024xbf16, #tpu.memory_space<vmem>>, %arg2: memref<16x128xf32, #tpu.memory_space<vmem>>, %arg3: memref<1024x128xbf16, #tpu.memory_space<vmem>>, %arg4: memref<1x128xf32, #tpu.memory_space<vmem>>, %arg5: memref<128x256xbf16, #tpu.memory_space<vmem>>, %arg6: memref<1x256xf32, #tpu.memory_space<vmem>>, %arg7: memref<128x128xbf16, #tpu.memory_space<vmem>>, %arg8: memref<1x128xf32, #tpu.memory_space<vmem>>, %arg9: memref<128x1024xbf16, #tpu.memory_space<vmem>>, %arg10: memref<1x1024xf32, #tpu.memory_space<vmem>>, %arg11: memref<16x1024xbf16, #tpu.memory_space<vmem>>, %arg12: memref<16x256xf32, #tpu.memory_space<vmem>>) attributes {dimension_semantics = [#tpu.dimension_semantics<parallel>], iteration_bounds = array<i64: 1>, scalar_prefetch = 0 : i64, scratch_operands = 0 : i64, tpu.core_type = #tpu.core_type<tc>, window_params = [{transform_indices = @transform_0, window_bounds = array<i64: 16, 1024>}, {transform_indices = @transform_1, window_bounds = array<i64: 16, 128>}, {pipeline_mode = #tpu.pipeline_mode<synchronous>, transform_indices = @transform_2, window_bounds = array<i64: 1024, 128>}, {pipeline_mode = #tpu.pipeline_mode<synchronous>, transform_indices = @transform_3, window_bounds = array<i64: 1, 128>}, {pipeline_mode = #tpu.pipeline_mode<synchronous>, transform_indices = @transform_4, window_bounds = array<i64: 128, 256>}, {pipeline_mode = #tpu.pipeline_mode<synchronous>, transform_indices = @transform_5, window_bounds = array<i64: 1, 256>}, {pipeline_mode = #tpu.pipeline_mode<synchronous>, transform_indices = @transform_6, window_bounds = array<i64: 128, 128>}, {pipeline_mode = #tpu.pipeline_mode<synchronous>, transform_indices = @transform_7, window_bounds = array<i64: 1, 128>}, {pipeline_mode = #tpu.pipeline_mode<synchronous>, transform_indices = @transform_8, window_bounds = array<i64: 128, 1024>}, {pipeline_mode = #tpu.pipeline_mode<synchronous>, transform_indices = @transform_9, window_bounds = array<i64: 1, 1024>}, {transform_indices = @transform_10, window_bounds = array<i64: 16, 1024>}, {transform_indices = @transform_11, window_bounds = array<i64: 16, 256>}]} {
    %c0 = arith.constant 0 : index
    %c0_0 = arith.constant 0 : index
    %0 = vector.load %arg1[%c0, %c0_0] : memref<16x1024xbf16, #tpu.memory_space<vmem>>, vector<16x1024xbf16>
    %c0_1 = arith.constant 0 : index
    %c0_2 = arith.constant 0 : index
    %1 = vector.load %arg3[%c0_1, %c0_2] : memref<1024x128xbf16, #tpu.memory_space<vmem>>, vector<1024x128xbf16>
    %cst = arith.constant dense<0.000000e+00> : vector<16x128xf32>
    %2 = tpu.matmul %0, %1, %cst {dimension_numbers = #tpu.dot_dimension_numbers<[1], [0], [0], [1], [0, 0, 1, 1], [], []>} : vector<16x1024xbf16>, vector<1024x128xbf16>, vector<16x128xf32> -> vector<16x128xf32>
    %c0_3 = arith.constant 0 : index
    %c0_4 = arith.constant 0 : index
    %3 = vector.load %arg4[%c0_3, %c0_4] : memref<1x128xf32, #tpu.memory_space<vmem>>, vector<1x128xf32>
    %4 = vector.broadcast %3 : vector<1x128xf32> to vector<16x128xf32>
    %5 = arith.addf %2, %4 : vector<16x128xf32>
    %cst_5 = arith.constant 0.000000e+00 : f32
    %6 = vector.broadcast %cst_5 : f32 to vector<16x128xf32>
    %7 = arith.maximumf %5, %6 : vector<16x128xf32>
    %8 = arith.truncf %7 : vector<16x128xf32> to vector<16x128xbf16>
    %c0_6 = arith.constant 0 : index
    %c0_7 = arith.constant 0 : index
    %9 = vector.load %arg5[%c0_6, %c0_7] : memref<128x256xbf16, #tpu.memory_space<vmem>>, vector<128x256xbf16>
    %cst_8 = arith.constant dense<0.000000e+00> : vector<16x256xf32>
    %10 = tpu.matmul %8, %9, %cst_8 {dimension_numbers = #tpu.dot_dimension_numbers<[1], [0], [0], [1], [0, 0, 1, 1], [], []>} : vector<16x128xbf16>, vector<128x256xbf16>, vector<16x256xf32> -> vector<16x256xf32>
    %c0_9 = arith.constant 0 : index
    %c0_10 = arith.constant 0 : index
    %11 = vector.load %arg6[%c0_9, %c0_10] : memref<1x256xf32, #tpu.memory_space<vmem>>, vector<1x256xf32>
    %12 = vector.broadcast %11 : vector<1x256xf32> to vector<16x256xf32>
    %13 = arith.addf %10, %12 : vector<16x256xf32>
    %14 = vector.extract_strided_slice %13 {offsets = [0, 0], sizes = [16, 128], strides = [1, 1]} : vector<16x256xf32> to vector<16x128xf32>
    %15 = vector.extract_strided_slice %13 {offsets = [0, 128], sizes = [16, 128], strides = [1, 1]} : vector<16x256xf32> to vector<16x128xf32>
    %cst_11 = arith.constant 5.000000e-01 : f32
    %16 = vector.broadcast %cst_11 : f32 to vector<16x128xf32>
    %17 = arith.mulf %16, %15 : vector<16x128xf32>
    %18 = math.exp %17 : vector<16x128xf32>
    %c0_12 = arith.constant 0 : index
    %c0_13 = arith.constant 0 : index
    %19 = vector.load %arg2[%c0_12, %c0_13] : memref<16x128xf32, #tpu.memory_space<vmem>>, vector<16x128xf32>
    %20 = arith.mulf %18, %19 : vector<16x128xf32>
    %21 = arith.addf %14, %20 : vector<16x128xf32>
    %22 = arith.truncf %21 : vector<16x128xf32> to vector<16x128xbf16>
    %c0_14 = arith.constant 0 : index
    %c0_15 = arith.constant 0 : index
    %23 = vector.load %arg7[%c0_14, %c0_15] : memref<128x128xbf16, #tpu.memory_space<vmem>>, vector<128x128xbf16>
    %cst_16 = arith.constant dense<0.000000e+00> : vector<16x128xf32>
    %24 = tpu.matmul %22, %23, %cst_16 {dimension_numbers = #tpu.dot_dimension_numbers<[1], [0], [0], [1], [0, 0, 1, 1], [], []>} : vector<16x128xbf16>, vector<128x128xbf16>, vector<16x128xf32> -> vector<16x128xf32>
    %c0_17 = arith.constant 0 : index
    %c0_18 = arith.constant 0 : index
    %25 = vector.load %arg8[%c0_17, %c0_18] : memref<1x128xf32, #tpu.memory_space<vmem>>, vector<1x128xf32>
    %26 = vector.broadcast %25 : vector<1x128xf32> to vector<16x128xf32>
    %27 = arith.addf %24, %26 : vector<16x128xf32>
    %cst_19 = arith.constant 0.000000e+00 : f32
    %28 = vector.broadcast %cst_19 : f32 to vector<16x128xf32>
    %29 = arith.maximumf %27, %28 : vector<16x128xf32>
    %30 = arith.truncf %29 : vector<16x128xf32> to vector<16x128xbf16>
    %c0_20 = arith.constant 0 : index
    %c0_21 = arith.constant 0 : index
    %31 = vector.load %arg9[%c0_20, %c0_21] : memref<128x1024xbf16, #tpu.memory_space<vmem>>, vector<128x1024xbf16>
    %cst_22 = arith.constant dense<0.000000e+00> : vector<16x1024xf32>
    %32 = tpu.matmul %30, %31, %cst_22 {dimension_numbers = #tpu.dot_dimension_numbers<[1], [0], [0], [1], [0, 0, 1, 1], [], []>} : vector<16x128xbf16>, vector<128x1024xbf16>, vector<16x1024xf32> -> vector<16x1024xf32>
    %c0_23 = arith.constant 0 : index
    %c0_24 = arith.constant 0 : index
    %33 = vector.load %arg10[%c0_23, %c0_24] : memref<1x1024xf32, #tpu.memory_space<vmem>>, vector<1x1024xf32>
    %34 = vector.broadcast %33 : vector<1x1024xf32> to vector<16x1024xf32>
    %35 = arith.addf %32, %34 : vector<16x1024xf32>
    %36 = arith.truncf %35 : vector<16x1024xf32> to vector<16x1024xbf16>
    %37 = arith.negf %36 : vector<16x1024xbf16>
    %38 = math.exp %37 : vector<16x1024xbf16>
    %cst_25 = arith.constant 1.000000e+00 : bf16
    %39 = vector.broadcast %cst_25 : bf16 to vector<16x1024xbf16>
    %40 = arith.addf %39, %38 : vector<16x1024xbf16>
    %41 = arith.divf %39, %40 : vector<16x1024xbf16>
    %c0_26 = arith.constant 0 : index
    %c0_27 = arith.constant 0 : index
    %42 = vector.load %arg11[%c0_26, %c0_27] : memref<16x1024xbf16, #tpu.memory_space<vmem>>, vector<16x1024xbf16>
    tpu.vector_store %arg11[%c0_26, %c0_27], %41 {strides = array<i32>} : memref<16x1024xbf16, #tpu.memory_space<vmem>>, vector<16x1024xbf16>,
    %c0_28 = arith.constant 0 : index
    %c0_29 = arith.constant 0 : index
    %43 = vector.load %arg12[%c0_28, %c0_29] : memref<16x256xf32, #tpu.memory_space<vmem>>, vector<16x256xf32>
    tpu.vector_store %arg12[%c0_28, %c0_29], %13 {strides = array<i32>} : memref<16x256xf32, #tpu.memory_space<vmem>>, vector<16x256xf32>,
    return
  }
  func.func @transform_0(%arg0: i32) -> (i32, i32) {
    %c0_i32 = arith.constant 0 : i32
    %c0_i32_0 = arith.constant 0 : i32
    return %arg0, %c0_i32 : i32, i32
  }
  func.func @transform_1(%arg0: i32) -> (i32, i32) {
    %c0_i32 = arith.constant 0 : i32
    %c0_i32_0 = arith.constant 0 : i32
    return %arg0, %c0_i32 : i32, i32
  }
  func.func @transform_2(%arg0: i32) -> (i32, i32) {
    %c0_i32 = arith.constant 0 : i32
    %c0_i32_0 = arith.constant 0 : i32
    %c0_i32_1 = arith.constant 0 : i32
    return %c0_i32, %c0_i32_0 : i32, i32
  }
  func.func @transform_3(%arg0: i32) -> (i32, i32) {
    %c0_i32 = arith.constant 0 : i32
    %c0_i32_0 = arith.constant 0 : i32
    %c0_i32_1 = arith.constant 0 : i32
    return %c0_i32, %c0_i32_0 : i32, i32
  }
  func.func @transform_4(%arg0: i32) -> (i32, i32) {
    %c0_i32 = arith.constant 0 : i32
    %c0_i32_0 = arith.constant 0 : i32
    %c0_i32_1 = arith.constant 0 : i32
    return %c0_i32, %c0_i32_0 : i32, i32
  }
  func.func @transform_5(%arg0: i32) -> (i32, i32) {
    %c0_i32 = arith.constant 0 : i32
    %c0_i32_0 = arith.constant 0 : i32
    %c0_i32_1 = arith.constant 0 : i32
    return %c0_i32, %c0_i32_0 : i32, i32
  }
  func.func @transform_6(%arg0: i32) -> (i32, i32) {
    %c0_i32 = arith.constant 0 : i32
    %c0_i32_0 = arith.constant 0 : i32
    %c0_i32_1 = arith.constant 0 : i32
    return %c0_i32, %c0_i32_0 : i32, i32
  }
  func.func @transform_7(%arg0: i32) -> (i32, i32) {
    %c0_i32 = arith.constant 0 : i32
    %c0_i32_0 = arith.constant 0 : i32
    %c0_i32_1 = arith.constant 0 : i32
    return %c0_i32, %c0_i32_0 : i32, i32
  }
  func.func @transform_8(%arg0: i32) -> (i32, i32) {
    %c0_i32 = arith.constant 0 : i32
    %c0_i32_0 = arith.constant 0 : i32
    %c0_i32_1 = arith.constant 0 : i32
    return %c0_i32, %c0_i32_0 : i32, i32
  }
  func.func @transform_9(%arg0: i32) -> (i32, i32) {
    %c0_i32 = arith.constant 0 : i32
    %c0_i32_0 = arith.constant 0 : i32
    %c0_i32_1 = arith.constant 0 : i32
    return %c0_i32, %c0_i32_0 : i32, i32
  }
  func.func @transform_10(%arg0: i32) -> (i32, i32) {
    %c0_i32 = arith.constant 0 : i32
    %c0_i32_0 = arith.constant 0 : i32
    return %arg0, %c0_i32 : i32, i32
  }
  func.func @transform_11(%arg0: i32) -> (i32, i32) {
    %c0_i32 = arith.constant 0 : i32
    %c0_i32_0 = arith.constant 0 : i32
    return %arg0, %c0_i32 : i32, i32
  }
}

module attributes {stable_mosaic.version = 11 : i64} {
  func.func @vae_kernel(%arg0: i32, %arg1: memref<16x1024xbf16, #tpu.memory_space<vmem>>, %arg2: memref<16x128xf32, #tpu.memory_space<vmem>>, %arg3: memref<1024x128xbf16, #tpu.memory_space<vmem>>, %arg4: memref<1x128xf32, #tpu.memory_space<vmem>>, %arg5: memref<128x256xbf16, #tpu.memory_space<vmem>>, %arg6: memref<1x256xf32, #tpu.memory_space<vmem>>, %arg7: memref<128x128xbf16, #tpu.memory_space<vmem>>, %arg8: memref<1x128xf32, #tpu.memory_space<vmem>>, %arg9: memref<128x1024xbf16, #tpu.memory_space<vmem>>, %arg10: memref<1x1024xf32, #tpu.memory_space<vmem>>, %arg11: memref<16x1024xbf16, #tpu.memory_space<vmem>>, %arg12: memref<16x256xf32, #tpu.memory_space<vmem>>) attributes {dimension_semantics = [#tpu.dimension_semantics<parallel>], iteration_bounds = array<i64: 1>, scalar_prefetch = 0 : i64, scratch_operands = 0 : i64, tpu.core_type = #tpu.core_type<tc>, window_params = [{transform_indices = @transform_0, window_bounds = array<i64: 16, 1024>}, {transform_indices = @transform_1, window_bounds = array<i64: 16, 128>}, {pipeline_mode = #tpu.pipeline_mode<synchronous>, transform_indices = @transform_2, window_bounds = array<i64: 1024, 128>}, {pipeline_mode = #tpu.pipeline_mode<synchronous>, transform_indices = @transform_3, window_bounds = array<i64: 1, 128>}, {pipeline_mode = #tpu.pipeline_mode<synchronous>, transform_indices = @transform_4, window_bounds = array<i64: 128, 256>}, {pipeline_mode = #tpu.pipeline_mode<synchronous>, transform_indices = @transform_5, window_bounds = array<i64: 1, 256>}, {pipeline_mode = #tpu.pipeline_mode<synchronous>, transform_indices = @transform_6, window_bounds = array<i64: 128, 128>}, {pipeline_mode = #tpu.pipeline_mode<synchronous>, transform_indices = @transform_7, window_bounds = array<i64: 1, 128>}, {pipeline_mode = #tpu.pipeline_mode<synchronous>, transform_indices = @transform_8, window_bounds = array<i64: 128, 1024>}, {pipeline_mode = #tpu.pipeline_mode<synchronous>, transform_indices = @transform_9, window_bounds = array<i64: 1, 1024>}, {transform_indices = @transform_10, window_bounds = array<i64: 16, 1024>}, {transform_indices = @transform_11, window_bounds = array<i64: 16, 256>}]} {
    %c0 = arith.constant 0 : index
    %c0_0 = arith.constant 0 : index
    %0 = vector.load %arg1[%c0, %c0_0] : memref<16x1024xbf16, #tpu.memory_space<vmem>>, vector<16x1024xbf16>
    %c0_1 = arith.constant 0 : index
    %c0_2 = arith.constant 0 : index
    %1 = vector.load %arg3[%c0_1, %c0_2] : memref<1024x128xbf16, #tpu.memory_space<vmem>>, vector<1024x128xbf16>
    %cst = arith.constant dense<0.000000e+00> : vector<16x128xf32>
    %2 = tpu.matmul %0, %1, %cst {dimension_numbers = #tpu.dot_dimension_numbers<[1], [0], [0], [1], [0, 0, 1, 1], [], []>} : vector<16x1024xbf16>, vector<1024x128xbf16>, vector<16x128xf32> -> vector<16x128xf32>
    %c0_3 = arith.constant 0 : index
    %c0_4 = arith.constant 0 : index
    %3 = vector.load %arg4[%c0_3, %c0_4] : memref<1x128xf32, #tpu.memory_space<vmem>>, vector<1x128xf32>
    %4 = vector.broadcast %3 : vector<1x128xf32> to vector<16x128xf32>
    %5 = arith.addf %2, %4 : vector<16x128xf32>
    %cst_5 = arith.constant 0.000000e+00 : f32
    %6 = vector.broadcast %cst_5 : f32 to vector<16x128xf32>
    %7 = arith.maximumf %5, %6 : vector<16x128xf32>
    %8 = arith.truncf %7 : vector<16x128xf32> to vector<16x128xbf16>
    %c0_6 = arith.constant 0 : index
    %c0_7 = arith.constant 0 : index
    %9 = vector.load %arg5[%c0_6, %c0_7] : memref<128x256xbf16, #tpu.memory_space<vmem>>, vector<128x256xbf16>
    %cst_8 = arith.constant dense<0.000000e+00> : vector<16x256xf32>
    %10 = tpu.matmul %8, %9, %cst_8 {dimension_numbers = #tpu.dot_dimension_numbers<[1], [0], [0], [1], [0, 0, 1, 1], [], []>} : vector<16x128xbf16>, vector<128x256xbf16>, vector<16x256xf32> -> vector<16x256xf32>
    %c0_9 = arith.constant 0 : index
    %c0_10 = arith.constant 0 : index
    %11 = vector.load %arg6[%c0_9, %c0_10] : memref<1x256xf32, #tpu.memory_space<vmem>>, vector<1x256xf32>
    %12 = vector.broadcast %11 : vector<1x256xf32> to vector<16x256xf32>
    %13 = arith.addf %10, %12 : vector<16x256xf32>
    %14 = vector.extract_strided_slice %13 {offsets = [0, 0], sizes = [16, 128], strides = [1, 1]} : vector<16x256xf32> to vector<16x128xf32>
    %15 = vector.extract_strided_slice %13 {offsets = [0, 128], sizes = [16, 128], strides = [1, 1]} : vector<16x256xf32> to vector<16x128xf32>
    %cst_11 = arith.constant 5.000000e-01 : f32
    %16 = vector.broadcast %cst_11 : f32 to vector<16x128xf32>
    %17 = arith.mulf %16, %15 : vector<16x128xf32>
    %18 = math.exp %17 : vector<16x128xf32>
    %c0_12 = arith.constant 0 : index
    %c0_13 = arith.constant 0 : index
    %19 = vector.load %arg2[%c0_12, %c0_13] : memref<16x128xf32, #tpu.memory_space<vmem>>, vector<16x128xf32>
    %20 = arith.mulf %18, %19 : vector<16x128xf32>
    %21 = arith.addf %14, %20 : vector<16x128xf32>
    %22 = arith.truncf %21 : vector<16x128xf32> to vector<16x128xbf16>
    %c0_14 = arith.constant 0 : index
    %c0_15 = arith.constant 0 : index
    %23 = vector.load %arg7[%c0_14, %c0_15] : memref<128x128xbf16, #tpu.memory_space<vmem>>, vector<128x128xbf16>
    %cst_16 = arith.constant dense<0.000000e+00> : vector<16x128xf32>
    %24 = tpu.matmul %22, %23, %cst_16 {dimension_numbers = #tpu.dot_dimension_numbers<[1], [0], [0], [1], [0, 0, 1, 1], [], []>} : vector<16x128xbf16>, vector<128x128xbf16>, vector<16x128xf32> -> vector<16x128xf32>
    %c0_17 = arith.constant 0 : index
    %c0_18 = arith.constant 0 : index
    %25 = vector.load %arg8[%c0_17, %c0_18] : memref<1x128xf32, #tpu.memory_space<vmem>>, vector<1x128xf32>
    %26 = vector.broadcast %25 : vector<1x128xf32> to vector<16x128xf32>
    %27 = arith.addf %24, %26 : vector<16x128xf32>
    %cst_19 = arith.constant 0.000000e+00 : f32
    %28 = vector.broadcast %cst_19 : f32 to vector<16x128xf32>
    %29 = arith.maximumf %27, %28 : vector<16x128xf32>
    %30 = arith.truncf %29 : vector<16x128xf32> to vector<16x128xbf16>
    %c0_20 = arith.constant 0 : index
    %c0_21 = arith.constant 0 : index
    %31 = vector.load %arg9[%c0_20, %c0_21] : memref<128x1024xbf16, #tpu.memory_space<vmem>>, vector<128x1024xbf16>
    %cst_22 = arith.constant dense<0.000000e+00> : vector<16x1024xf32>
    %32 = tpu.matmul %30, %31, %cst_22 {dimension_numbers = #tpu.dot_dimension_numbers<[1], [0], [0], [1], [0, 0, 1, 1], [], []>} : vector<16x128xbf16>, vector<128x1024xbf16>, vector<16x1024xf32> -> vector<16x1024xf32>
    %c0_23 = arith.constant 0 : index
    %c0_24 = arith.constant 0 : index
    %33 = vector.load %arg10[%c0_23, %c0_24] : memref<1x1024xf32, #tpu.memory_space<vmem>>, vector<1x1024xf32>
    %34 = vector.broadcast %33 : vector<1x1024xf32> to vector<16x1024xf32>
    %35 = arith.addf %32, %34 : vector<16x1024xf32>
    %36 = arith.truncf %35 : vector<16x1024xf32> to vector<16x1024xbf16>
    %37 = arith.negf %36 : vector<16x1024xbf16>
    %38 = math.exp %37 : vector<16x1024xbf16>
    %cst_25 = arith.constant 1.000000e+00 : bf16
    %39 = vector.broadcast %cst_25 : bf16 to vector<16x1024xbf16>
    %40 = arith.addf %39, %38 : vector<16x1024xbf16>
    %41 = arith.divf %39, %40 : vector<16x1024xbf16>
    %c0_26 = arith.constant 0 : index
    %c0_27 = arith.constant 0 : index
    %42 = vector.load %arg11[%c0_26, %c0_27] : memref<16x1024xbf16, #tpu.memory_space<vmem>>, vector<16x1024xbf16>
    tpu.vector_store %arg11[%c0_26, %c0_27], %41 {strides = array<i32>} : memref<16x1024xbf16, #tpu.memory_space<vmem>>, vector<16x1024xbf16>,
    %c0_28 = arith.constant 0 : index
    %c0_29 = arith.constant 0 : index
    %43 = vector.load %arg12[%c0_28, %c0_29] : memref<16x256xf32, #tpu.memory_space<vmem>>, vector<16x256xf32>
    tpu.vector_store %arg12[%c0_28, %c0_29], %13 {strides = array<i32>} : memref<16x256xf32, #tpu.memory_space<vmem>>, vector<16x256xf32>,
    return
  }
  func.func @transform_0(%arg0: i32) -> (i32, i32) {
    %c0_i32 = arith.constant 0 : i32
    %c0_i32_0 = arith.constant 0 : i32
    return %arg0, %c0_i32 : i32, i32
  }
  func.func @transform_1(%arg0: i32) -> (i32, i32) {
    %c0_i32 = arith.constant 0 : i32
    %c0_i32_0 = arith.constant 0 : i32
    return %arg0, %c0_i32 : i32, i32
  }
  func.func @transform_2(%arg0: i32) -> (i32, i32) {
    %c0_i32 = arith.constant 0 : i32
    %c0_i32_0 = arith.constant 0 : i32
    %c0_i32_1 = arith.constant 0 : i32
    return %c0_i32, %c0_i32_0 : i32, i32
  }
  func.func @transform_3(%arg0: i32) -> (i32, i32) {
    %c0_i32 = arith.constant 0 : i32
    %c0_i32_0 = arith.constant 0 : i32
    %c0_i32_1 = arith.constant 0 : i32
    return %c0_i32, %c0_i32_0 : i32, i32
  }
  func.func @transform_4(%arg0: i32) -> (i32, i32) {
    %c0_i32 = arith.constant 0 : i32
    %c0_i32_0 = arith.constant 0 : i32
    %c0_i32_1 = arith.constant 0 : i32
    return %c0_i32, %c0_i32_0 : i32, i32
  }
  func.func @transform_5(%arg0: i32) -> (i32, i32) {
    %c0_i32 = arith.constant 0 : i32
    %c0_i32_0 = arith.constant 0 : i32
    %c0_i32_1 = arith.constant 0 : i32
    return %c0_i32, %c0_i32_0 : i32, i32
  }
  func.func @transform_6(%arg0: i32) -> (i32, i32) {
    %c0_i32 = arith.constant 0 : i32
    %c0_i32_0 = arith.constant 0 : i32
    %c0_i32_1 = arith.constant 0 : i32
    return %c0_i32, %c0_i32_0 : i32, i32
  }
  func.func @transform_7(%arg0: i32) -> (i32, i32) {
    %c0_i32 = arith.constant 0 : i32
    %c0_i32_0 = arith.constant 0 : i32
    %c0_i32_1 = arith.constant 0 : i32
    return %c0_i32, %c0_i32_0 : i32, i32
  }
  func.func @transform_8(%arg0: i32) -> (i32, i32) {
    %c0_i32 = arith.constant 0 : i32
    %c0_i32_0 = arith.constant 0 : i32
    %c0_i32_1 = arith.constant 0 : i32
    return %c0_i32, %c0_i32_0 : i32, i32
  }
  func.func @transform_9(%arg0: i32) -> (i32, i32) {
    %c0_i32 = arith.constant 0 : i32
    %c0_i32_0 = arith.constant 0 : i32
    %c0_i32_1 = arith.constant 0 : i32
    return %c0_i32, %c0_i32_0 : i32, i32
  }
  func.func @transform_10(%arg0: i32) -> (i32, i32) {
    %c0_i32 = arith.constant 0 : i32
    %c0_i32_0 = arith.constant 0 : i32
    return %arg0, %c0_i32 : i32, i32
  }
  func.func @transform_11(%arg0: i32) -> (i32, i32) {
    %c0_i32 = arith.constant 0 : i32
    %c0_i32_0 = arith.constant 0 : i32
    return %arg0, %c0_i32 : i32, i32
  }
}

</mosaic_0001>

<llo_original>
// kernel: tpu_custom_call.1
$region0: #{tpu_custom_call.1}
  #allocation0 [shape = 'u32[]', space=smem, size = 0x4, offset = 0x4, fixed_abs, tag = 'smem constant byte address 0x4 - core index']
  #allocation1 [shape = 'u32[144,128]{1,0:T(1,128)}', space=vmem, size = 0x12000, scoped, tag = 'internal scratch']
  %s0 = inlined_call_operand.hbm [shape: bf16[16,1024], index: 0, kind: input, shape index: {}]
  %s1 = inlined_call_operand.hbm [shape: f32[16,128], index: 1, kind: input, shape index: {}]
  %s2 = inlined_call_operand.hbm [shape: bf16[1024,128], index: 2, kind: input, shape index: {}]
  %s3 = inlined_call_operand.vmem [shape: f32[1,128], index: 3, kind: input, shape index: {}]
  %s4 = inlined_call_operand.hbm [shape: bf16[128,256], index: 4, kind: input, shape index: {}]
  %s5 = inlined_call_operand.vmem [shape: f32[1,256], index: 5, kind: input, shape index: {}]
  %s6 = inlined_call_operand.hbm [shape: bf16[128,128], index: 6, kind: input, shape index: {}]
  %s7 = inlined_call_operand.vmem [shape: f32[1,128], index: 7, kind: input, shape index: {}]
  %s8 = inlined_call_operand.hbm [shape: bf16[128,1024], index: 8, kind: input, shape index: {}]
  %s9 = inlined_call_operand.vmem [shape: f32[1,1024], index: 9, kind: input, shape index: {}]
  %s10 = inlined_call_operand.hbm [shape: bf16[16,1024], index: 10, kind: output, shape index: {0}]
  %s11 = inlined_call_operand.hbm [shape: f32[16,256], index: 11, kind: output, shape index: {1}]
  %12 = xla_tuple %s10, %s11
  %s13 = sld [smem:[#allocation0]]
  $region82: #{tpu_custom_call.1} parent=0
    _
  %s15 = ssub.s32 1, %s13
  %s16 = scalar_select 0, %s15, %s13
  $region1: #{tpu_custom_call.1} parent=0
    #allocation2 [shape = 'u8[32768]{0}', space=vmem, size = 0x8000, scoped, tag = 'input window, operand 0, single buffered']
    #allocation3 [shape = 's32[1]{0}', space=sflag, size = 0x4, scoped, tag = 'scoped memory for tpu_custom_call.1']
    #allocation4 [shape = 's32[1]{0}', space=sflag, size = 0x4, scoped, tag = 'scoped memory for tpu_custom_call.1']
    #allocation5 [shape = 'u8[8192]{0}', space=vmem, size = 0x2000, scoped, tag = 'input window, operand 1, single buffered']
    #allocation6 [shape = 's32[1]{0}', space=sflag, size = 0x4, scoped, tag = 'scoped memory for tpu_custom_call.1']
    #allocation7 [shape = 'u8[262144]{0}', space=vmem, size = 0x40000, scoped, tag = 'input window, operand 2, single buffered']
    #allocation8 [shape = 'u8[65536]{0}', space=vmem, size = 0x10000, scoped, tag = 'input window, operand 4, single buffered']
    #allocation9 [shape = 's32[1]{0}', space=sflag, size = 0x4, scoped, tag = 'scoped memory for tpu_custom_call.1']
    #allocation10 [shape = 'u8[32768]{0}', space=vmem, size = 0x8000, scoped, tag = 'input window, operand 6, single buffered']
    #allocation11 [shape = 'u8[262144]{0}', space=vmem, size = 0x40000, scoped, tag = 'input window, operand 8, single buffered']
    #allocation12 [shape = 's32[1]{0}', space=sflag, size = 0x4, scoped, tag = 'scoped memory for tpu_custom_call.1']
    #allocation13 [shape = 'u8[32768]{0}', space=vmem, size = 0x8000, scoped, tag = 'output window, operand 0, single buffered']
    #allocation14 [shape = 'u8[16384]{0}', space=vmem, size = 0x4000, scoped, tag = 'output window, operand 1, single buffered']
    #allocation15 [shape = 's32[1]{0}', space=sflag, size = 0x4, scoped, tag = 'scoped memory for tpu_custom_call.1']
    %17 = vsyncpa [#allocation3], 0
    %18 = vsyncpa [#allocation6], 0
    %19 = vsyncpa [#allocation9], 0
    %20 = vsyncpa [#allocation12], 0
    %21 = vsyncpa [#allocation4], 0
    %22 = vsyncpa [#allocation15], 0
    // Predicated region
    $region2: #{tpu_custom_call.1} parent=1 // pred_check
      _
    $region3: #{tpu_custom_call.1} parent=1 // pred_check_branch
      %24 = sbr.rel (0) target = $region5
    $region4: #{tpu_custom_call.1} parent=1 // pred_region
      %s26 = ssub.s32 1024, 1024
      %27 = vsyncadd [#allocation3], %s26
      %s28 = sshll.u32 [#allocation2], 4
      %s29 = int_to_ptr.vmem [resolvable:$true] %s28
      %34 = dma.hbm_to_vmem [thread:$0]  %s0, 1024, %s29, [#allocation3], 512, 512, 32
    $region5: #{tpu_custom_call.1} parent=1 // pred_fallthru
      _
    // Predicated region
    $region6: #{tpu_custom_call.1} parent=1 // pred_check
      _
    $region7: #{tpu_custom_call.1} parent=1 // pred_check_branch
      %36 = sbr.rel (0) target = $region9
    $region8: #{tpu_custom_call.1} parent=1 // pred_region
      %s38 = ssub.s32 256, 256
      %39 = vsyncadd [#allocation6], %s38
      %s40 = sshll.u32 [#allocation5], 4
      %s41 = int_to_ptr.vmem [resolvable:$true] %s40
      %46 = dma.hbm_to_vmem [thread:$0]  %s1, 256, %s41, [#allocation6], 128, 128, 8
    $region9: #{tpu_custom_call.1} parent=1 // pred_fallthru
      _
    // Predicated region
    $region10: #{tpu_custom_call.1} parent=1 // pred_check
      _
    $region11: #{tpu_custom_call.1} parent=1 // pred_check_branch
      %48 = sbr.rel (0) target = $region13
    $region12: #{tpu_custom_call.1} parent=1 // pred_region
      %s50 = ssub.s32 8192, 8192
      %51 = vsyncadd [#allocation6], %s50
      %s52 = sshll.u32 [#allocation7], 4
      %s53 = int_to_ptr.vmem [resolvable:$true] %s52
      %58 = dma.hbm_to_vmem [thread:$0]  %s2, 8192, %s53, [#allocation6], 64, 64, 4
    $region13: #{tpu_custom_call.1} parent=1 // pred_fallthru
      _
    // Predicated region
    $region14: #{tpu_custom_call.1} parent=1 // pred_check
      _
    $region15: #{tpu_custom_call.1} parent=1 // pred_check_branch
      %60 = sbr.rel (0) target = $region17
    $region16: #{tpu_custom_call.1} parent=1 // pred_region
      _
    $region17: #{tpu_custom_call.1} parent=1 // pred_fallthru
      _
    // Predicated region
    $region18: #{tpu_custom_call.1} parent=1 // pred_check
      _
    $region19: #{tpu_custom_call.1} parent=1 // pred_check_branch
      %62 = sbr.rel (0) target = $region21
    $region20: #{tpu_custom_call.1} parent=1 // pred_region
      %s64 = ssub.s32 2048, 2048
      %65 = vsyncadd [#allocation9], %s64
      %s66 = sshll.u32 [#allocation8], 4
      %s67 = int_to_ptr.vmem [resolvable:$true] %s66
      %72 = dma.hbm_to_vmem [thread:$0]  %s4, 2048, %s67, [#allocation9], 128, 128, 8
    $region21: #{tpu_custom_call.1} parent=1 // pred_fallthru
      _
    // Predicated region
    $region22: #{tpu_custom_call.1} parent=1 // pred_check
      _
    $region23: #{tpu_custom_call.1} parent=1 // pred_check_branch
      %74 = sbr.rel (0) target = $region25
    $region24: #{tpu_custom_call.1} parent=1 // pred_region
      _
    $region25: #{tpu_custom_call.1} parent=1 // pred_fallthru
      _
    // Predicated region
    $region26: #{tpu_custom_call.1} parent=1 // pred_check
      _
    $region27: #{tpu_custom_call.1} parent=1 // pred_check_branch
      %76 = sbr.rel (0) target = $region29
    $region28: #{tpu_custom_call.1} parent=1 // pred_region
      %s78 = ssub.s32 1024, 1024
      %79 = vsyncadd [#allocation9], %s78
      %s80 = sshll.u32 [#allocation10], 4
      %s81 = int_to_ptr.vmem [resolvable:$true] %s80
      %86 = dma.hbm_to_vmem [thread:$0]  %s6, 1024, %s81, [#allocation9], 64, 64, 4
    $region29: #{tpu_custom_call.1} parent=1 // pred_fallthru
      _
    // Predicated region
    $region30: #{tpu_custom_call.1} parent=1 // pred_check
      _
    $region31: #{tpu_custom_call.1} parent=1 // pred_check_branch
      %88 = sbr.rel (0) target = $region33
    $region32: #{tpu_custom_call.1} parent=1 // pred_region
      _
    $region33: #{tpu_custom_call.1} parent=1 // pred_fallthru
      _
    // Predicated region
    $region34: #{tpu_custom_call.1} parent=1 // pred_check
      _
    $region35: #{tpu_custom_call.1} parent=1 // pred_check_branch
      %90 = sbr.rel (0) target = $region37
    $region36: #{tpu_custom_call.1} parent=1 // pred_region
      %s92 = ssub.s32 8192, 8192
      %93 = vsyncadd [#allocation12], %s92
      %s94 = sshll.u32 [#allocation11], 4
      %s95 = int_to_ptr.vmem [resolvable:$true] %s94
      %100 = dma.hbm_to_vmem [thread:$0]  %s8, 8192, %s95, [#allocation12], 512, 512, 32
    $region37: #{tpu_custom_call.1} parent=1 // pred_fallthru
      _
    // Predicated region
    $region38: #{tpu_custom_call.1} parent=1 // pred_check
      _
    $region39: #{tpu_custom_call.1} parent=1 // pred_check_branch
      %102 = sbr.rel (0) target = $region41
    $region40: #{tpu_custom_call.1} parent=1 // pred_region
      _
    $region41: #{tpu_custom_call.1} parent=1 // pred_fallthru
      _
    // Predicated region
    $region42: #{tpu_custom_call.1} parent=1 // pred_check
      _
    $region43: #{tpu_custom_call.1} parent=1 // pred_check_branch
      %104 = sbr.rel (0) target = $region45
    $region44: #{tpu_custom_call.1} parent=1 // pred_region
      %105 = dma.done [#allocation3], 1024
    $region45: #{tpu_custom_call.1} parent=1 // pred_fallthru
      _
    // Predicated region
    $region46: #{tpu_custom_call.1} parent=1 // pred_check
      _
    $region47: #{tpu_custom_call.1} parent=1 // pred_check_branch
      %107 = sbr.rel (0) target = $region49
    $region48: #{tpu_custom_call.1} parent=1 // pred_region
      %108 = dma.done [#allocation6], 256
    $region49: #{tpu_custom_call.1} parent=1 // pred_fallthru
      _
    // Predicated region
    $region50: #{tpu_custom_call.1} parent=1 // pred_check
      _
    $region51: #{tpu_custom_call.1} parent=1 // pred_check_branch
      %110 = sbr.rel (0) target = $region53
    $region52: #{tpu_custom_call.1} parent=1 // pred_region
      %111 = dma.done [#allocation6], 8192
    $region53: #{tpu_custom_call.1} parent=1 // pred_fallthru
      _
    // Predicated region
    $region54: #{tpu_custom_call.1} parent=1 // pred_check
      _
    $region55: #{tpu_custom_call.1} parent=1 // pred_check_branch
      %113 = sbr.rel (0) target = $region57
    $region56: #{tpu_custom_call.1} parent=1 // pred_region
      %114 = dma.done [#allocation9], 2048
    $region57: #{tpu_custom_call.1} parent=1 // pred_fallthru
      _
    // Predicated region
    $region58: #{tpu_custom_call.1} parent=1 // pred_check
      _
    $region59: #{tpu_custom_call.1} parent=1 // pred_check_branch
      %116 = sbr.rel (0) target = $region61
    $region60: #{tpu_custom_call.1} parent=1 // pred_region
      %117 = dma.done [#allocation9], 1024
    $region61: #{tpu_custom_call.1} parent=1 // pred_fallthru
      _
    // Predicated region
    $region62: #{tpu_custom_call.1} parent=1 // pred_check
      _
    $region63: #{tpu_custom_call.1} parent=1 // pred_check_branch
      %119 = sbr.rel (0) target = $region65
    $region64: #{tpu_custom_call.1} parent=1 // pred_region
      %120 = dma.done [#allocation12], 8192
    $region65: #{tpu_custom_call.1} parent=1 // pred_fallthru
      _
    %v123 = vld [vmem:[#allocation2] sm:$0xff]
    %v124 = vld [vmem:[#allocation2 + $0x8] sm:$0xff]
    %v125 = vld [vmem:[#allocation2 + $0x10] sm:$0xff]
    %v126 = vld [vmem:[#allocation2 + $0x18] sm:$0xff]
    %v127 = vld [vmem:[#allocation2 + $0x20] sm:$0xff]
    %v128 = vld [vmem:[#allocation2 + $0x28] sm:$0xff]
    %v129 = vld [vmem:[#allocation2 + $0x30] sm:$0xff]
    %v130 = vld [vmem:[#allocation2 + $0x38] sm:$0xff]
    %v131 = vld [vmem:[#allocation7] sm:$0xf]
    %v132 = vld [vmem:[#allocation7 + $0x4] sm:$0xf]
    %v133 = vld [vmem:[#allocation7 + $0x8] sm:$0xf]
    %v134 = vld [vmem:[#allocation7 + $0xc] sm:$0xf]
    %v135 = vld [vmem:[#allocation7 + $0x10] sm:$0xf]
    %v136 = vld [vmem:[#allocation7 + $0x14] sm:$0xf]
    %v137 = vld [vmem:[#allocation7 + $0x18] sm:$0xf]
    %v138 = vld [vmem:[#allocation7 + $0x1c] sm:$0xf]
    %v139 = vld [vmem:[#allocation7 + $0x20] sm:$0xf]
    %v140 = vld [vmem:[#allocation7 + $0x24] sm:$0xf]
    %v141 = vld [vmem:[#allocation7 + $0x28] sm:$0xf]
    %v142 = vld [vmem:[#allocation7 + $0x2c] sm:$0xf]
    %v143 = vld [vmem:[#allocation7 + $0x30] sm:$0xf]
    %v144 = vld [vmem:[#allocation7 + $0x34] sm:$0xf]
    %v145 = vld [vmem:[#allocation7 + $0x38] sm:$0xf]
    %v146 = vld [vmem:[#allocation7 + $0x3c] sm:$0xf]
    %v147 = vld [vmem:[#allocation7 + $0x40] sm:$0xf]
    %v148 = vld [vmem:[#allocation7 + $0x44] sm:$0xf]
    %v149 = vld [vmem:[#allocation7 + $0x48] sm:$0xf]
    %v150 = vld [vmem:[#allocation7 + $0x4c] sm:$0xf]
    %v151 = vld [vmem:[#allocation7 + $0x50] sm:$0xf]
    %v152 = vld [vmem:[#allocation7 + $0x54] sm:$0xf]
    %v153 = vld [vmem:[#allocation7 + $0x58] sm:$0xf]
    %v154 = vld [vmem:[#allocation7 + $0x5c] sm:$0xf]
    %v155 = vld [vmem:[#allocation7 + $0x60] sm:$0xf]
    %v156 = vld [vmem:[#allocation7 + $0x64] sm:$0xf]
    %v157 = vld [vmem:[#allocation7 + $0x68] sm:$0xf]
    %v158 = vld [vmem:[#allocation7 + $0x6c] sm:$0xf]
    %v159 = vld [vmem:[#allocation7 + $0x70] sm:$0xf]
    %v160 = vld [vmem:[#allocation7 + $0x74] sm:$0xf]
    %v161 = vld [vmem:[#allocation7 + $0x78] sm:$0xf]
    %v162 = vld [vmem:[#allocation7 + $0x7c] sm:$0xf]
    %v163 = vld [vmem:[#allocation7 + $0x80] sm:$0xf]
    %v164 = vld [vmem:[#allocation7 + $0x84] sm:$0xf]
    %v165 = vld [vmem:[#allocation7 + $0x88] sm:$0xf]
    %v166 = vld [vmem:[#allocation7 + $0x8c] sm:$0xf]
    %v167 = vld [vmem:[#allocation7 + $0x90] sm:$0xf]
    %v168 = vld [vmem:[#allocation7 + $0x94] sm:$0xf]
    %v169 = vld [vmem:[#allocation7 + $0x98] sm:$0xf]
    %v170 = vld [vmem:[#allocation7 + $0x9c] sm:$0xf]
    %v171 = vld [vmem:[#allocation7 + $0xa0] sm:$0xf]
    %v172 = vld [vmem:[#allocation7 + $0xa4] sm:$0xf]
    %v173 = vld [vmem:[#allocation7 + $0xa8] sm:$0xf]
    %v174 = vld [vmem:[#allocation7 + $0xac] sm:$0xf]
    %v175 = vld [vmem:[#allocation7 + $0xb0] sm:$0xf]
    %v176 = vld [vmem:[#allocation7 + $0xb4] sm:$0xf]
    %v177 = vld [vmem:[#allocation7 + $0xb8] sm:$0xf]
    %v178 = vld [vmem:[#allocation7 + $0xbc] sm:$0xf]
    %v179 = vld [vmem:[#allocation7 + $0xc0] sm:$0xf]
    %v180 = vld [vmem:[#allocation7 + $0xc4] sm:$0xf]
    %v181 = vld [vmem:[#allocation7 + $0xc8] sm:$0xf]
    %v182 = vld [vmem:[#allocation7 + $0xcc] sm:$0xf]
    %v183 = vld [vmem:[#allocation7 + $0xd0] sm:$0xf]
    %v184 = vld [vmem:[#allocation7 + $0xd4] sm:$0xf]
    %v185 = vld [vmem:[#allocation7 + $0xd8] sm:$0xf]
    %v186 = vld [vmem:[#allocation7 + $0xdc] sm:$0xf]
    %v187 = vld [vmem:[#allocation7 + $0xe0] sm:$0xf]
    %v188 = vld [vmem:[#allocation7 + $0xe4] sm:$0xf]
    %v189 = vld [vmem:[#allocation7 + $0xe8] sm:$0xf]
    %v190 = vld [vmem:[#allocation7 + $0xec] sm:$0xf]
    %v191 = vld [vmem:[#allocation7 + $0xf0] sm:$0xf]
    %v192 = vld [vmem:[#allocation7 + $0xf4] sm:$0xf]
    %v193 = vld [vmem:[#allocation7 + $0xf8] sm:$0xf]
    %v194 = vld [vmem:[#allocation7 + $0xfc] sm:$0xf]
    %v195 = vld [vmem:[#allocation7 + $0x100] sm:$0xf]
    %v196 = vld [vmem:[#allocation7 + $0x104] sm:$0xf]
    %v197 = vld [vmem:[#allocation7 + $0x108] sm:$0xf]
    %v198 = vld [vmem:[#allocation7 + $0x10c] sm:$0xf]
    %v199 = vld [vmem:[#allocation7 + $0x110] sm:$0xf]
    %v200 = vld [vmem:[#allocation7 + $0x114] sm:$0xf]
    %v201 = vld [vmem:[#allocation7 + $0x118] sm:$0xf]
    %v202 = vld [vmem:[#allocation7 + $0x11c] sm:$0xf]
    %v203 = vld [vmem:[#allocation7 + $0x120] sm:$0xf]
    %v204 = vld [vmem:[#allocation7 + $0x124] sm:$0xf]
    %v205 = vld [vmem:[#allocation7 + $0x128] sm:$0xf]
    %v206 = vld [vmem:[#allocation7 + $0x12c] sm:$0xf]
    %v207 = vld [vmem:[#allocation7 + $0x130] sm:$0xf]
    %v208 = vld [vmem:[#allocation7 + $0x134] sm:$0xf]
    %v209 = vld [vmem:[#allocation7 + $0x138] sm:$0xf]
    %v210 = vld [vmem:[#allocation7 + $0x13c] sm:$0xf]
    %v211 = vld [vmem:[#allocation7 + $0x140] sm:$0xf]
    %v212 = vld [vmem:[#allocation7 + $0x144] sm:$0xf]
    %v213 = vld [vmem:[#allocation7 + $0x148] sm:$0xf]
    %v214 = vld [vmem:[#allocation7 + $0x14c] sm:$0xf]
    %v215 = vld [vmem:[#allocation7 + $0x150] sm:$0xf]
    %v216 = vld [vmem:[#allocation7 + $0x154] sm:$0xf]
    %v217 = vld [vmem:[#allocation7 + $0x158] sm:$0xf]
    %v218 = vld [vmem:[#allocation7 + $0x15c] sm:$0xf]
    %v219 = vld [vmem:[#allocation7 + $0x160] sm:$0xf]
    %v220 = vld [vmem:[#allocation7 + $0x164] sm:$0xf]
    %v221 = vld [vmem:[#allocation7 + $0x168] sm:$0xf]
    %v222 = vld [vmem:[#allocation7 + $0x16c] sm:$0xf]
    %v223 = vld [vmem:[#allocation7 + $0x170] sm:$0xf]
    %v224 = vld [vmem:[#allocation7 + $0x174] sm:$0xf]
    %v225 = vld [vmem:[#allocation7 + $0x178] sm:$0xf]
    %v226 = vld [vmem:[#allocation7 + $0x17c] sm:$0xf]
    %v227 = vld [vmem:[#allocation7 + $0x180] sm:$0xf]
    %v228 = vld [vmem:[#allocation7 + $0x184] sm:$0xf]
    %v229 = vld [vmem:[#allocation7 + $0x188] sm:$0xf]
    %v230 = vld [vmem:[#allocation7 + $0x18c] sm:$0xf]
    %v231 = vld [vmem:[#allocation7 + $0x190] sm:$0xf]
    %v232 = vld [vmem:[#allocation7 + $0x194] sm:$0xf]
    %v233 = vld [vmem:[#allocation7 + $0x198] sm:$0xf]
    %v234 = vld [vmem:[#allocation7 + $0x19c] sm:$0xf]
    %v235 = vld [vmem:[#allocation7 + $0x1a0] sm:$0xf]
    %v236 = vld [vmem:[#allocation7 + $0x1a4] sm:$0xf]
    %v237 = vld [vmem:[#allocation7 + $0x1a8] sm:$0xf]
    %v238 = vld [vmem:[#allocation7 + $0x1ac] sm:$0xf]
    %v239 = vld [vmem:[#allocation7 + $0x1b0] sm:$0xf]
    %v240 = vld [vmem:[#allocation7 + $0x1b4] sm:$0xf]
    %v241 = vld [vmem:[#allocation7 + $0x1b8] sm:$0xf]
    %v242 = vld [vmem:[#allocation7 + $0x1bc] sm:$0xf]
    %v243 = vld [vmem:[#allocation7 + $0x1c0] sm:$0xf]
    %v244 = vld [vmem:[#allocation7 + $0x1c4] sm:$0xf]
    %v245 = vld [vmem:[#allocation7 + $0x1c8] sm:$0xf]
    %v246 = vld [vmem:[#allocation7 + $0x1cc] sm:$0xf]
    %v247 = vld [vmem:[#allocation7 + $0x1d0] sm:$0xf]
    %v248 = vld [vmem:[#allocation7 + $0x1d4] sm:$0xf]
    %v249 = vld [vmem:[#allocation7 + $0x1d8] sm:$0xf]
    %v250 = vld [vmem:[#allocation7 + $0x1dc] sm:$0xf]
    %v251 = vld [vmem:[#allocation7 + $0x1e0] sm:$0xf]
    %v252 = vld [vmem:[#allocation7 + $0x1e4] sm:$0xf]
    %v253 = vld [vmem:[#allocation7 + $0x1e8] sm:$0xf]
    %v254 = vld [vmem:[#allocation7 + $0x1ec] sm:$0xf]
    %v255 = vld [vmem:[#allocation7 + $0x1f0] sm:$0xf]
    %v256 = vld [vmem:[#allocation7 + $0x1f4] sm:$0xf]
    %v257 = vld [vmem:[#allocation7 + $0x1f8] sm:$0xf]
    %v258 = vld [vmem:[#allocation7 + $0x1fc] sm:$0xf]
    %v259 = vld [vmem:[%s3] sm:$0x1]
    %v261 = vlaneseq
    %v262 = vshrl.u32 %v261, 7
    %v263 = vsub.s32 0, %v262
    %v264 = vrot.slane %v259, %v263
    %v274 = vunpack.c.l.b16 %v123
    %v275 = vunpack.c.h.b16 %v123
    %v276 = vunpack.c.l.b16 %v124
    %v277 = vunpack.c.h.b16 %v124
    %v278 = vunpack.c.l.b16 %v125
    %v279 = vunpack.c.h.b16 %v125
    %v280 = vunpack.c.l.b16 %v126
    %v281 = vunpack.c.h.b16 %v126
    %v282 = vunpack.c.l.b16 %v127
    %v283 = vunpack.c.h.b16 %v127
    %v284 = vunpack.c.l.b16 %v128
    %v285 = vunpack.c.h.b16 %v128
    %v286 = vunpack.c.l.b16 %v129
    %v287 = vunpack.c.h.b16 %v129
    %v288 = vunpack.c.l.b16 %v130
    %v289 = vunpack.c.h.b16 %v130
    %v290 = vpack.c.b16 %v282, %v274
    %v291 = vpack.c.b16 %v283, %v275
    %v292 = vpack.c.b16 %v284, %v276
    %v293 = vpack.c.b16 %v285, %v277
    %v294 = vpack.c.b16 %v286, %v278
    %v295 = vpack.c.b16 %v287, %v279
    %v296 = vpack.c.b16 %v288, %v280
    %v297 = vpack.c.b16 %v289, %v281
    %v434 = vunpack.c.l.b16 %v131
    %v435 = vunpack.c.l.b16 %v132
    %v436 = vunpack.c.l.b16 %v133
    %v437 = vunpack.c.l.b16 %v134
    %v438 = vunpack.c.l.b16 %v135
    %v439 = vunpack.c.l.b16 %v136
    %v440 = vunpack.c.l.b16 %v137
    %v441 = vunpack.c.l.b16 %v138
    %v442 = vunpack.c.l.b16 %v139
    %v443 = vunpack.c.l.b16 %v140
    %v444 = vunpack.c.l.b16 %v141
    %v445 = vunpack.c.l.b16 %v142
    %v446 = vunpack.c.l.b16 %v143
    %v447 = vunpack.c.l.b16 %v144
    %v448 = vunpack.c.l.b16 %v145
    %v449 = vunpack.c.l.b16 %v146
    %v450 = vunpack.c.l.b16 %v147
    %v451 = vunpack.c.l.b16 %v148
    %v452 = vunpack.c.l.b16 %v149
    %v453 = vunpack.c.l.b16 %v150
    %v454 = vunpack.c.l.b16 %v151
    %v455 = vunpack.c.l.b16 %v152
    %v456 = vunpack.c.l.b16 %v153
    %v457 = vunpack.c.l.b16 %v154
    %v458 = vunpack.c.l.b16 %v155
    %v459 = vunpack.c.l.b16 %v156
    %v460 = vunpack.c.l.b16 %v157
    %v461 = vunpack.c.l.b16 %v158
    %v462 = vunpack.c.l.b16 %v159
    %v463 = vunpack.c.l.b16 %v160
    %v464 = vunpack.c.l.b16 %v161
    %v465 = vunpack.c.l.b16 %v162
    %v466 = vunpack.c.l.b16 %v163
    %v467 = vunpack.c.l.b16 %v164
    %v468 = vunpack.c.l.b16 %v165
    %v469 = vunpack.c.l.b16 %v166
    %v470 = vunpack.c.l.b16 %v167
    %v471 = vunpack.c.l.b16 %v168
    %v472 = vunpack.c.l.b16 %v169
    %v473 = vunpack.c.l.b16 %v170
    %v474 = vunpack.c.l.b16 %v171
    %v475 = vunpack.c.l.b16 %v172
    %v476 = vunpack.c.l.b16 %v173
    %v477 = vunpack.c.l.b16 %v174
    %v478 = vunpack.c.l.b16 %v175
    %v479 = vunpack.c.l.b16 %v176
    %v480 = vunpack.c.l.b16 %v177
    %v481 = vunpack.c.l.b16 %v178
    %v482 = vunpack.c.l.b16 %v179
    %v483 = vunpack.c.l.b16 %v180
    %v484 = vunpack.c.l.b16 %v181
    %v485 = vunpack.c.l.b16 %v182
    %v486 = vunpack.c.l.b16 %v183
    %v487 = vunpack.c.l.b16 %v184
    %v488 = vunpack.c.l.b16 %v185
    %v489 = vunpack.c.l.b16 %v186
    %v490 = vunpack.c.l.b16 %v187
    %v491 = vunpack.c.l.b16 %v188
    %v492 = vunpack.c.l.b16 %v189
    %v493 = vunpack.c.l.b16 %v190
    %v494 = vunpack.c.l.b16 %v191
    %v495 = vunpack.c.l.b16 %v192
    %v496 = vunpack.c.l.b16 %v193
    %v497 = vunpack.c.l.b16 %v194
    %v498 = vunpack.c.l.b16 %v195
    %v499 = vunpack.c.l.b16 %v196
    %v500 = vunpack.c.l.b16 %v197
    %v501 = vunpack.c.l.b16 %v198
    %v502 = vunpack.c.l.b16 %v199
    %v503 = vunpack.c.l.b16 %v200
    %v504 = vunpack.c.l.b16 %v201
    %v505 = vunpack.c.l.b16 %v202
    %v506 = vunpack.c.l.b16 %v203
    %v507 = vunpack.c.l.b16 %v204
    %v508 = vunpack.c.l.b16 %v205
    %v509 = vunpack.c.l.b16 %v206
    %v510 = vunpack.c.l.b16 %v207
    %v511 = vunpack.c.l.b16 %v208
    %v512 = vunpack.c.l.b16 %v209
    %v513 = vunpack.c.l.b16 %v210
    %v514 = vunpack.c.l.b16 %v211
    %v515 = vunpack.c.l.b16 %v212
    %v516 = vunpack.c.l.b16 %v213
    %v517 = vunpack.c.l.b16 %v214
    %v518 = vunpack.c.l.b16 %v215
    %v519 = vunpack.c.l.b16 %v216
    %v520 = vunpack.c.l.b16 %v217
    %v521 = vunpack.c.l.b16 %v218
    %v522 = vunpack.c.l.b16 %v219
    %v523 = vunpack.c.l.b16 %v220
    %v524 = vunpack.c.l.b16 %v221
    %v525 = vunpack.c.l.b16 %v222
    %v526 = vunpack.c.l.b16 %v223
    %v527 = vunpack.c.l.b16 %v224
    %v528 = vunpack.c.l.b16 %v225
    %v529 = vunpack.c.l.b16 %v226
    %v530 = vunpack.c.l.b16 %v227
    %v531 = vunpack.c.l.b16 %v228
    %v532 = vunpack.c.l.b16 %v229
    %v533 = vunpack.c.l.b16 %v230
    %v534 = vunpack.c.l.b16 %v231
    %v535 = vunpack.c.l.b16 %v232
    %v536 = vunpack.c.l.b16 %v233
    %v537 = vunpack.c.l.b16 %v234
    %v538 = vunpack.c.l.b16 %v235
    %v539 = vunpack.c.l.b16 %v236
    %v540 = vunpack.c.l.b16 %v237
    %v541 = vunpack.c.l.b16 %v238
    %v542 = vunpack.c.l.b16 %v239
    %v543 = vunpack.c.l.b16 %v240
    %v544 = vunpack.c.l.b16 %v241
    %v545 = vunpack.c.l.b16 %v242
    %v546 = vunpack.c.l.b16 %v243
    %v547 = vunpack.c.l.b16 %v244
    %v548 = vunpack.c.l.b16 %v245
    %v549 = vunpack.c.l.b16 %v246
    %v550 = vunpack.c.l.b16 %v247
    %v551 = vunpack.c.l.b16 %v248
    %v552 = vunpack.c.l.b16 %v249
    %v553 = vunpack.c.l.b16 %v250
    %v554 = vunpack.c.l.b16 %v251
    %v555 = vunpack.c.l.b16 %v252
    %v556 = vunpack.c.l.b16 %v253
    %v557 = vunpack.c.l.b16 %v254
    %v558 = vunpack.c.l.b16 %v255
    %v559 = vunpack.c.l.b16 %v256
    %v560 = vunpack.c.l.b16 %v257
    %v561 = vunpack.c.l.b16 %v258
    %v562 = vpack.c.b16 %v435, %v434
    %v563 = vpack.c.b16 %v437, %v436
    %v564 = vpack.c.b16 %v439, %v438
    %v565 = vpack.c.b16 %v441, %v440
    %v566 = vpack.c.b16 %v443, %v442
    %v567 = vpack.c.b16 %v445, %v444
    %v568 = vpack.c.b16 %v447, %v446
    %v569 = vpack.c.b16 %v449, %v448
    %v570 = vpack.c.b16 %v451, %v450
    %v571 = vpack.c.b16 %v453, %v452
    %v572 = vpack.c.b16 %v455, %v454
    %v573 = vpack.c.b16 %v457, %v456
    %v574 = vpack.c.b16 %v459, %v458
    %v575 = vpack.c.b16 %v461, %v460
    %v576 = vpack.c.b16 %v463, %v462
    %v577 = vpack.c.b16 %v465, %v464
    %v578 = vpack.c.b16 %v467, %v466
    %v579 = vpack.c.b16 %v469, %v468
    %v580 = vpack.c.b16 %v471, %v470
    %v581 = vpack.c.b16 %v473, %v472
    %v582 = vpack.c.b16 %v475, %v474
    %v583 = vpack.c.b16 %v477, %v476
    %v584 = vpack.c.b16 %v479, %v478
    %v585 = vpack.c.b16 %v481, %v480
    %v586 = vpack.c.b16 %v483, %v482
    %v587 = vpack.c.b16 %v485, %v484
    %v588 = vpack.c.b16 %v487, %v486
    %v589 = vpack.c.b16 %v489, %v488
    %v590 = vpack.c.b16 %v491, %v490
    %v591 = vpack.c.b16 %v493, %v492
    %v592 = vpack.c.b16 %v495, %v494
    %v593 = vpack.c.b16 %v497, %v496
    %v594 = vpack.c.b16 %v499, %v498
    %v595 = vpack.c.b16 %v501, %v500
    %v596 = vpack.c.b16 %v503, %v502
    %v597 = vpack.c.b16 %v505, %v504
    %v598 = vpack.c.b16 %v507, %v506
    %v599 = vpack.c.b16 %v509, %v508
    %v600 = vpack.c.b16 %v511, %v510
    %v601 = vpack.c.b16 %v513, %v512
    %v602 = vpack.c.b16 %v515, %v514
    %v603 = vpack.c.b16 %v517, %v516
    %v604 = vpack.c.b16 %v519, %v518
    %v605 = vpack.c.b16 %v521, %v520
    %v606 = vpack.c.b16 %v523, %v522
    %v607 = vpack.c.b16 %v525, %v524
    %v608 = vpack.c.b16 %v527, %v526
    %v609 = vpack.c.b16 %v529, %v528
    %v610 = vpack.c.b16 %v531, %v530
    %v611 = vpack.c.b16 %v533, %v532
    %v612 = vpack.c.b16 %v535, %v534
    %v613 = vpack.c.b16 %v537, %v536
    %v614 = vpack.c.b16 %v539, %v538
    %v615 = vpack.c.b16 %v541, %v540
    %v616 = vpack.c.b16 %v543, %v542
    %v617 = vpack.c.b16 %v545, %v544
    %v618 = vpack.c.b16 %v547, %v546
    %v619 = vpack.c.b16 %v549, %v548
    %v620 = vpack.c.b16 %v551, %v550
    %v621 = vpack.c.b16 %v553, %v552
    %v622 = vpack.c.b16 %v555, %v554
    %v623 = vpack.c.b16 %v557, %v556
    %v624 = vpack.c.b16 %v559, %v558
    %v625 = vpack.c.b16 %v561, %v560
    %690 = vmatprep.subr.bf16.mxu0 0
    %691 = vmatpush1.bf16.msra.mxu0 %v569
    %692 = vmatprep.subr.bf16.mxu0 0
    %693 = vmatpush1.bf16.msra.mxu0 %v568
    %694 = vmatprep.subr.bf16.mxu0 0
    %695 = vmatpush1.bf16.msra.mxu0 %v567
    %696 = vmatprep.subr.bf16.mxu0 0
    %697 = vmatpush1.bf16.msra.mxu0 %v566
    %698 = vmatprep.subr.bf16.mxu0 0
    %699 = vmatpush1.bf16.msra.mxu0 %v565
    %700 = vmatprep.subr.bf16.mxu0 0
    %701 = vmatpush1.bf16.msra.mxu0 %v564
    %702 = vmatprep.subr.bf16.mxu0 0
    %703 = vmatpush1.bf16.msra.mxu0 %v563
    %704 = vmatprep.subr.bf16.mxu0 0
    %705 = vmatpush1.bf16.msra.mxu0 %v562
    %706 = vmatprep.subr.bf16.mxu0 0
    %707 = vmatpush2.bf16.msra.mxu0 %v577
    %708 = vmatprep.subr.bf16.mxu0 0
    %709 = vmatpush2.bf16.msra.mxu0 %v576
    %710 = vmatprep.subr.bf16.mxu0 0
    %711 = vmatpush2.bf16.msra.mxu0 %v575
    %712 = vmatprep.subr.bf16.mxu0 0
    %713 = vmatpush2.bf16.msra.mxu0 %v574
    %714 = vmatprep.subr.bf16.mxu0 0
    %715 = vmatpush2.bf16.msra.mxu0 %v573
    %716 = vmatprep.subr.bf16.mxu0 0
    %717 = vmatpush2.bf16.msra.mxu0 %v572
    %718 = vmatprep.subr.bf16.mxu0 0
    %719 = vmatpush2.bf16.msra.mxu0 %v571
    %720 = vmatprep.subr.bf16.mxu0 0
    %721 = vmatpush2.bf16.msra.mxu0 %v570
    %722 = vmatprep.mubr.bf16.mxu0 %v291
    %723 = vmatmul.mubr.bf16.gmra.mxu0 %v290
    %v724 = vpop.f32.mrf.mxu0
    %v725 = vadd.f32 %v264, %v724
    %v726 = vpop.f32.mrf.mxu0
    %v727 = vpop.f32.mrf.mxu0
    %v728 = vadd.f32 %v264, %v727
    %v729 = vpop.f32.mrf.mxu0
    %730 = vdwg.mxu0
    %731 = vmatprep.subr.bf16.mxu0 0
    %732 = vmatpush1.bf16.msra.mxu0 %v585
    %733 = vmatprep.subr.bf16.mxu0 0
    %734 = vmatpush1.bf16.msra.mxu0 %v584
    %735 = vmatprep.subr.bf16.mxu0 0
    %736 = vmatpush1.bf16.msra.mxu0 %v583
    %737 = vmatprep.subr.bf16.mxu0 0
    %738 = vmatpush1.bf16.msra.mxu0 %v582
    %739 = vmatprep.subr.bf16.mxu0 0
    %740 = vmatpush1.bf16.msra.mxu0 %v581
    %741 = vmatprep.subr.bf16.mxu0 0
    %742 = vmatpush1.bf16.msra.mxu0 %v580
    %743 = vmatprep.subr.bf16.mxu0 0
    %744 = vmatpush1.bf16.msra.mxu0 %v579
    %745 = vmatprep.subr.bf16.mxu0 0
    %746 = vmatpush1.bf16.msra.mxu0 %v578
    %747 = vmatprep.subr.bf16.mxu0 0
    %748 = vmatpush2.bf16.msra.mxu0 %v593
    %749 = vmatprep.subr.bf16.mxu0 0
    %750 = vmatpush2.bf16.msra.mxu0 %v592
    %751 = vmatprep.subr.bf16.mxu0 0
    %752 = vmatpush2.bf16.msra.mxu0 %v591
    %753 = vmatprep.subr.bf16.mxu0 0
    %754 = vmatpush2.bf16.msra.mxu0 %v590
    %755 = vmatprep.subr.bf16.mxu0 0
    %756 = vmatpush2.bf16.msra.mxu0 %v589
    %757 = vmatprep.subr.bf16.mxu0 0
    %758 = vmatpush2.bf16.msra.mxu0 %v588
    %759 = vmatprep.subr.bf16.mxu0 0
    %760 = vmatpush2.bf16.msra.mxu0 %v587
    %761 = vmatprep.subr.bf16.mxu0 0
    %762 = vmatpush2.bf16.msra.mxu0 %v586
    %763 = vmatprep.mubr.bf16.mxu0 %v293
    %764 = vmatmul.mubr.bf16.gmra.mxu0 %v292
    %v765 = vpop.f32.mrf.mxu0
    %v766 = vadd.f32 %v725, %v765
    %v767 = vpop.f32.mrf.mxu0
    %v768 = vpop.f32.mrf.mxu0
    %v769 = vadd.f32 %v728, %v768
    %v770 = vpop.f32.mrf.mxu0
    %771 = vdwg.mxu0
    %772 = vmatprep.subr.bf16.mxu0 0
    %773 = vmatpush1.bf16.msra.mxu0 %v601
    %774 = vmatprep.subr.bf16.mxu0 0
    %775 = vmatpush1.bf16.msra.mxu0 %v600
    %776 = vmatprep.subr.bf16.mxu0 0
    %777 = vmatpush1.bf16.msra.mxu0 %v599
    %778 = vmatprep.subr.bf16.mxu0 0
    %779 = vmatpush1.bf16.msra.mxu0 %v598
    %780 = vmatprep.subr.bf16.mxu0 0
    %781 = vmatpush1.bf16.msra.mxu0 %v597
    %782 = vmatprep.subr.bf16.mxu0 0
    %783 = vmatpush1.bf16.msra.mxu0 %v596
    %784 = vmatprep.subr.bf16.mxu0 0
    %785 = vmatpush1.bf16.msra.mxu0 %v595
    %786 = vmatprep.subr.bf16.mxu0 0
    %787 = vmatpush1.bf16.msra.mxu0 %v594
    %788 = vmatprep.subr.bf16.mxu0 0
    %789 = vmatpush2.bf16.msra.mxu0 %v609
    %790 = vmatprep.subr.bf16.mxu0 0
    %791 = vmatpush2.bf16.msra.mxu0 %v608
    %792 = vmatprep.subr.bf16.mxu0 0
    %793 = vmatpush2.bf16.msra.mxu0 %v607
    %794 = vmatprep.subr.bf16.mxu0 0
    %795 = vmatpush2.bf16.msra.mxu0 %v606
    %796 = vmatprep.subr.bf16.mxu0 0
    %797 = vmatpush2.bf16.msra.mxu0 %v605
    %798 = vmatprep.subr.bf16.mxu0 0
    %799 = vmatpush2.bf16.msra.mxu0 %v604
    %800 = vmatprep.subr.bf16.mxu0 0
    %801 = vmatpush2.bf16.msra.mxu0 %v603
    %802 = vmatprep.subr.bf16.mxu0 0
    %803 = vmatpush2.bf16.msra.mxu0 %v602
    %804 = vmatprep.mubr.bf16.mxu0 %v295
    %805 = vmatmul.mubr.bf16.gmra.mxu0 %v294
    %v806 = vpop.f32.mrf.mxu0
    %v807 = vadd.f32 %v766, %v806
    %v808 = vpop.f32.mrf.mxu0
    %v809 = vpop.f32.mrf.mxu0
    %v810 = vadd.f32 %v769, %v809
    %v811 = vpop.f32.mrf.mxu0
    %812 = vdwg.mxu0
    %813 = vmatprep.subr.bf16.mxu0 0
    %814 = vmatpush1.bf16.msra.mxu0 %v617
    %815 = vmatprep.subr.bf16.mxu0 0
    %816 = vmatpush1.bf16.msra.mxu0 %v616
    %817 = vmatprep.subr.bf16.mxu0 0
    %818 = vmatpush1.bf16.msra.mxu0 %v615
    %819 = vmatprep.subr.bf16.mxu0 0
    %820 = vmatpush1.bf16.msra.mxu0 %v614
    %821 = vmatprep.subr.bf16.mxu0 0
    %822 = vmatpush1.bf16.msra.mxu0 %v613
    %823 = vmatprep.subr.bf16.mxu0 0
    %824 = vmatpush1.bf16.msra.mxu0 %v612
    %825 = vmatprep.subr.bf16.mxu0 0
    %826 = vmatpush1.bf16.msra.mxu0 %v611
    %827 = vmatprep.subr.bf16.mxu0 0
    %828 = vmatpush1.bf16.msra.mxu0 %v610
    %829 = vmatprep.subr.bf16.mxu0 0
    %830 = vmatpush2.bf16.msra.mxu0 %v625
    %831 = vmatprep.subr.bf16.mxu0 0
    %832 = vmatpush2.bf16.msra.mxu0 %v624
    %833 = vmatprep.subr.bf16.mxu0 0
    %834 = vmatpush2.bf16.msra.mxu0 %v623
    %835 = vmatprep.subr.bf16.mxu0 0
    %836 = vmatpush2.bf16.msra.mxu0 %v622
    %837 = vmatprep.subr.bf16.mxu0 0
    %838 = vmatpush2.bf16.msra.mxu0 %v621
    %839 = vmatprep.subr.bf16.mxu0 0
    %840 = vmatpush2.bf16.msra.mxu0 %v620
    %841 = vmatprep.subr.bf16.mxu0 0
    %842 = vmatpush2.bf16.msra.mxu0 %v619
    %843 = vmatprep.subr.bf16.mxu0 0
    %844 = vmatpush2.bf16.msra.mxu0 %v618
    %845 = vmatprep.mubr.bf16.mxu0 %v297
    %846 = vmatmul.mubr.bf16.gmra.mxu0 %v296
    %v847 = vpop.f32.mrf.mxu0
    %v848 = vadd.f32 %v807, %v847
    %v849 = vpop.f32.mrf.mxu0
    %v850 = vpop.f32.mrf.mxu0
    %v851 = vadd.f32 %v810, %v850
    %v852 = vpop.f32.mrf.mxu0
    %853 = vdwg.mxu0
    %v854 = vmax.f32 %v848, 0.0
    %v855 = vmax.f32 %v851, 0.0
    %v856 = vpack.c.bf16 %v855, %v854
    %v857 = vld [vmem:[#allocation8] sm:$0xff]
    %v858 = vld [vmem:[#allocation8 + $0x8] sm:$0xff]
    %v859 = vld [vmem:[#allocation8 + $0x10] sm:$0xff]
    %v860 = vld [vmem:[#allocation8 + $0x18] sm:$0xff]
    %v861 = vld [vmem:[#allocation8 + $0x20] sm:$0xff]
    %v862 = vld [vmem:[#allocation8 + $0x28] sm:$0xff]
    %v863 = vld [vmem:[#allocation8 + $0x30] sm:$0xff]
    %v864 = vld [vmem:[#allocation8 + $0x38] sm:$0xff]
    %v865 = vld [vmem:[#allocation8 + $0x40] sm:$0xff]
    %v866 = vld [vmem:[#allocation8 + $0x48] sm:$0xff]
    %v867 = vld [vmem:[#allocation8 + $0x50] sm:$0xff]
    %v868 = vld [vmem:[#allocation8 + $0x58] sm:$0xff]
    %v869 = vld [vmem:[#allocation8 + $0x60] sm:$0xff]
    %v870 = vld [vmem:[#allocation8 + $0x68] sm:$0xff]
    %v871 = vld [vmem:[#allocation8 + $0x70] sm:$0xff]
    %v872 = vld [vmem:[#allocation8 + $0x78] sm:$0xff]
    %v873 = vld [vmem:[%s5] sm:$0x3]
    %v875 = vlaneseq
    %v876 = vshrl.u32 %v875, 7
    %v877 = vsub.s32 0, %v876
    %v878 = vrot.slane %v873, %v877
    %v879 = vlaneseq
    %v880 = vshrl.u32 %v879, 7
    %v881 = vsub.s32 1, %v880
    %v882 = vrot.slane %v873, %v881
    %v901 = vunpack.c.l.b16 %v857
    %v902 = vunpack.c.h.b16 %v857
    %v903 = vunpack.c.l.b16 %v858
    %v904 = vunpack.c.h.b16 %v858
    %v905 = vunpack.c.l.b16 %v859
    %v906 = vunpack.c.h.b16 %v859
    %v907 = vunpack.c.l.b16 %v860
    %v908 = vunpack.c.h.b16 %v860
    %v909 = vunpack.c.l.b16 %v861
    %v910 = vunpack.c.h.b16 %v861
    %v911 = vunpack.c.l.b16 %v862
    %v912 = vunpack.c.h.b16 %v862
    %v913 = vunpack.c.l.b16 %v863
    %v914 = vunpack.c.h.b16 %v863
    %v915 = vunpack.c.l.b16 %v864
    %v916 = vunpack.c.h.b16 %v864
    %v917 = vunpack.c.l.b16 %v865
    %v918 = vunpack.c.h.b16 %v865
    %v919 = vunpack.c.l.b16 %v866
    %v920 = vunpack.c.h.b16 %v866
    %v921 = vunpack.c.l.b16 %v867
    %v922 = vunpack.c.h.b16 %v867
    %v923 = vunpack.c.l.b16 %v868
    %v924 = vunpack.c.h.b16 %v868
    %v925 = vunpack.c.l.b16 %v869
    %v926 = vunpack.c.h.b16 %v869
    %v927 = vunpack.c.l.b16 %v870
    %v928 = vunpack.c.h.b16 %v870
    %v929 = vunpack.c.l.b16 %v871
    %v930 = vunpack.c.h.b16 %v871
    %v931 = vunpack.c.l.b16 %v872
    %v932 = vunpack.c.h.b16 %v872
    %v933 = vpack.c.b16 %v903, %v901
    %v934 = vpack.c.b16 %v904, %v902
    %v935 = vpack.c.b16 %v907, %v905
    %v936 = vpack.c.b16 %v908, %v906
    %v937 = vpack.c.b16 %v911, %v909
    %v938 = vpack.c.b16 %v912, %v910
    %v939 = vpack.c.b16 %v915, %v913
    %v940 = vpack.c.b16 %v916, %v914
    %v941 = vpack.c.b16 %v919, %v917
    %v942 = vpack.c.b16 %v920, %v918
    %v943 = vpack.c.b16 %v923, %v921
    %v944 = vpack.c.b16 %v924, %v922
    %v945 = vpack.c.b16 %v927, %v925
    %v946 = vpack.c.b16 %v928, %v926
    %v947 = vpack.c.b16 %v931, %v929
    %v948 = vpack.c.b16 %v932, %v930
    %965 = vmatprep.subr.bf16.mxu0 %v948
    %966 = vmatpush1.bf16.msra.mxu0 %v947
    %967 = vmatprep.subr.bf16.mxu0 %v946
    %968 = vmatpush1.bf16.msra.mxu0 %v945
    %969 = vmatprep.subr.bf16.mxu0 %v944
    %970 = vmatpush1.bf16.msra.mxu0 %v943
    %971 = vmatprep.subr.bf16.mxu0 %v942
    %972 = vmatpush1.bf16.msra.mxu0 %v941
    %973 = vmatprep.subr.bf16.mxu0 %v940
    %974 = vmatpush1.bf16.msra.mxu0 %v939
    %975 = vmatprep.subr.bf16.mxu0 %v938
    %976 = vmatpush1.bf16.msra.mxu0 %v937
    %977 = vmatprep.subr.bf16.mxu0 %v936
    %978 = vmatpush1.bf16.msra.mxu0 %v935
    %979 = vmatprep.subr.bf16.mxu0 %v934
    %980 = vmatpush1.bf16.msra.mxu0 %v933
    %981 = vmatprep.subr.bf16.mxu0 0
    %982 = vmatpush2.bf16.msra.mxu0 0
    %983 = vmatprep.subr.bf16.mxu0 0
    %984 = vmatpush2.bf16.msra.mxu0 0
    %985 = vmatprep.subr.bf16.mxu0 0
    %986 = vmatpush2.bf16.msra.mxu0 0
    %987 = vmatprep.subr.bf16.mxu0 0
    %988 = vmatpush2.bf16.msra.mxu0 0
    %989 = vmatprep.subr.bf16.mxu0 0
    %990 = vmatpush2.bf16.msra.mxu0 0
    %991 = vmatprep.subr.bf16.mxu0 0
    %992 = vmatpush2.bf16.msra.mxu0 0
    %993 = vmatprep.subr.bf16.mxu0 0
    %994 = vmatpush2.bf16.msra.mxu0 0
    %995 = vmatprep.subr.bf16.mxu0 0
    %996 = vmatpush2.bf16.msra.mxu0 0
    %997 = vmatprep.mubr.bf16.mxu0 0
    %998 = vmatmul.mubr.bf16.gmra.mxu0 %v856
    %v999 = vpop.f32.mrf.mxu0
    %v1000 = vadd.f32 %v878, %v999
    %v1001 = vpop.f32.mrf.mxu0
    %v1002 = vadd.f32 %v882, %v1001
    %v1003 = vpop.f32.mrf.mxu0
    %v1004 = vadd.f32 %v878, %v1003
    %v1005 = vpop.f32.mrf.mxu0
    %v1006 = vadd.f32 %v882, %v1005
    %1007 = vdwg.mxu0
    %v1008 = vmul.f32 %v1002, 0.5
    %v1009 = vmul.f32 %v1006, 0.5
    %v1010 = vmul.f32 %v1008, 1.442695
    %v1011 = vpow.pop %v1010
    %v1012 = vmul.f32 %v1009, 1.442695
    %v1013 = vpow.pop %v1012
    %v1014 = vld [vmem:[#allocation5] sm:$0xff]
    %v1015 = vld [vmem:[#allocation5 + $0x8] sm:$0xff]
    %v1016 = vmul.f32 %v1011, %v1014
    %v1017 = vmul.f32 %v1013, %v1015
    %v1018 = vadd.f32 %v1000, %v1016
    %v1019 = vadd.f32 %v1004, %v1017
    %v1020 = vpack.c.bf16 %v1019, %v1018
    %v1021 = vld [vmem:[#allocation10] sm:$0xf]
    %v1022 = vld [vmem:[#allocation10 + $0x4] sm:$0xf]
    %v1023 = vld [vmem:[#allocation10 + $0x8] sm:$0xf]
    %v1024 = vld [vmem:[#allocation10 + $0xc] sm:$0xf]
    %v1025 = vld [vmem:[#allocation10 + $0x10] sm:$0xf]
    %v1026 = vld [vmem:[#allocation10 + $0x14] sm:$0xf]
    %v1027 = vld [vmem:[#allocation10 + $0x18] sm:$0xf]
    %v1028 = vld [vmem:[#allocation10 + $0x1c] sm:$0xf]
    %v1029 = vld [vmem:[#allocation10 + $0x20] sm:$0xf]
    %v1030 = vld [vmem:[#allocation10 + $0x24] sm:$0xf]
    %v1031 = vld [vmem:[#allocation10 + $0x28] sm:$0xf]
    %v1032 = vld [vmem:[#allocation10 + $0x2c] sm:$0xf]
    %v1033 = vld [vmem:[#allocation10 + $0x30] sm:$0xf]
    %v1034 = vld [vmem:[#allocation10 + $0x34] sm:$0xf]
    %v1035 = vld [vmem:[#allocation10 + $0x38] sm:$0xf]
    %v1036 = vld [vmem:[#allocation10 + $0x3c] sm:$0xf]
    %v1037 = vld [vmem:[%s7] sm:$0x1]
    %v1039 = vlaneseq
    %v1040 = vshrl.u32 %v1039, 7
    %v1041 = vsub.s32 0, %v1040
    %v1042 = vrot.slane %v1037, %v1041
    %v1060 = vunpack.c.l.b16 %v1021
    %v1061 = vunpack.c.l.b16 %v1022
    %v1062 = vunpack.c.l.b16 %v1023
    %v1063 = vunpack.c.l.b16 %v1024
    %v1064 = vunpack.c.l.b16 %v1025
    %v1065 = vunpack.c.l.b16 %v1026
    %v1066 = vunpack.c.l.b16 %v1027
    %v1067 = vunpack.c.l.b16 %v1028
    %v1068 = vunpack.c.l.b16 %v1029
    %v1069 = vunpack.c.l.b16 %v1030
    %v1070 = vunpack.c.l.b16 %v1031
    %v1071 = vunpack.c.l.b16 %v1032
    %v1072 = vunpack.c.l.b16 %v1033
    %v1073 = vunpack.c.l.b16 %v1034
    %v1074 = vunpack.c.l.b16 %v1035
    %v1075 = vunpack.c.l.b16 %v1036
    %v1076 = vpack.c.b16 %v1061, %v1060
    %v1077 = vpack.c.b16 %v1063, %v1062
    %v1078 = vpack.c.b16 %v1065, %v1064
    %v1079 = vpack.c.b16 %v1067, %v1066
    %v1080 = vpack.c.b16 %v1069, %v1068
    %v1081 = vpack.c.b16 %v1071, %v1070
    %v1082 = vpack.c.b16 %v1073, %v1072
    %v1083 = vpack.c.b16 %v1075, %v1074
    %1092 = vmatprep.subr.bf16.mxu0 0
    %1093 = vmatpush1.bf16.msra.mxu0 %v1083
    %1094 = vmatprep.subr.bf16.mxu0 0
    %1095 = vmatpush1.bf16.msra.mxu0 %v1082
    %1096 = vmatprep.subr.bf16.mxu0 0
    %1097 = vmatpush1.bf16.msra.mxu0 %v1081
    %1098 = vmatprep.subr.bf16.mxu0 0
    %1099 = vmatpush1.bf16.msra.mxu0 %v1080
    %1100 = vmatprep.subr.bf16.mxu0 0
    %1101 = vmatpush1.bf16.msra.mxu0 %v1079
    %1102 = vmatprep.subr.bf16.mxu0 0
    %1103 = vmatpush1.bf16.msra.mxu0 %v1078
    %1104 = vmatprep.subr.bf16.mxu0 0
    %1105 = vmatpush1.bf16.msra.mxu0 %v1077
    %1106 = vmatprep.subr.bf16.mxu0 0
    %1107 = vmatpush1.bf16.msra.mxu0 %v1076
    %1108 = vmatprep.subr.bf16.mxu0 0
    %1109 = vmatpush2.bf16.msra.mxu0 0
    %1110 = vmatprep.subr.bf16.mxu0 0
    %1111 = vmatpush2.bf16.msra.mxu0 0
    %1112 = vmatprep.subr.bf16.mxu0 0
    %1113 = vmatpush2.bf16.msra.mxu0 0
    %1114 = vmatprep.subr.bf16.mxu0 0
    %1115 = vmatpush2.bf16.msra.mxu0 0
    %1116 = vmatprep.subr.bf16.mxu0 0
    %1117 = vmatpush2.bf16.msra.mxu0 0
    %1118 = vmatprep.subr.bf16.mxu0 0
    %1119 = vmatpush2.bf16.msra.mxu0 0
    %1120 = vmatprep.subr.bf16.mxu0 0
    %1121 = vmatpush2.bf16.msra.mxu0 0
    %1122 = vmatprep.subr.bf16.mxu0 0
    %1123 = vmatpush2.bf16.msra.mxu0 0
    %1124 = vmatprep.mubr.bf16.mxu0 0
    %1125 = vmatmul.mubr.bf16.gmra.mxu0 %v1020
    %v1126 = vpop.f32.mrf.mxu0
    %v1127 = vadd.f32 %v1042, %v1126
    %v1128 = vpop.f32.mrf.mxu0
    %v1129 = vpop.f32.mrf.mxu0
    %v1130 = vadd.f32 %v1042, %v1129
    %v1131 = vpop.f32.mrf.mxu0
    %1132 = vdwg.mxu0
    %v1133 = vmax.f32 %v1127, 0.0
    %v1134 = vmax.f32 %v1130, 0.0
    %v1135 = vpack.c.bf16 %v1134, %v1133
    %v1136 = vld [vmem:[#allocation11] sm:$0xff]
    %v1137 = vld [vmem:[#allocation11 + $0x8] sm:$0xff]
    %v1138 = vld [vmem:[#allocation11 + $0x10] sm:$0xff]
    %v1139 = vld [vmem:[#allocation11 + $0x18] sm:$0xff]
    %v1140 = vld [vmem:[#allocation11 + $0x20] sm:$0xff]
    %v1141 = vld [vmem:[#allocation11 + $0x28] sm:$0xff]
    %v1142 = vld [vmem:[#allocation11 + $0x30] sm:$0xff]
    %v1143 = vld [vmem:[#allocation11 + $0x38] sm:$0xff]
    %v1144 = vld [vmem:[#allocation11 + $0x40] sm:$0xff]
    %v1145 = vld [vmem:[#allocation11 + $0x48] sm:$0xff]
    %v1146 = vld [vmem:[#allocation11 + $0x50] sm:$0xff]
    %v1147 = vld [vmem:[#allocation11 + $0x58] sm:$0xff]
    %v1148 = vld [vmem:[#allocation11 + $0x60] sm:$0xff]
    %v1149 = vld [vmem:[#allocation11 + $0x68] sm:$0xff]
    %v1150 = vld [vmem:[#allocation11 + $0x70] sm:$0xff]
    %v1151 = vld [vmem:[#allocation11 + $0x78] sm:$0xff]
    %v1152 = vld [vmem:[#allocation11 + $0x80] sm:$0xff]
    %v1153 = vld [vmem:[#allocation11 + $0x88] sm:$0xff]
    %v1154 = vld [vmem:[#allocation11 + $0x90] sm:$0xff]
    %v1155 = vld [vmem:[#allocation11 + $0x98] sm:$0xff]
    %v1156 = vld [vmem:[#allocation11 + $0xa0] sm:$0xff]
    %v1157 = vld [vmem:[#allocation11 + $0xa8] sm:$0xff]
    %v1158 = vld [vmem:[#allocation11 + $0xb0] sm:$0xff]
    %v1159 = vld [vmem:[#allocation11 + $0xb8] sm:$0xff]
    %v1160 = vld [vmem:[#allocation11 + $0xc0] sm:$0xff]
    %v1161 = vld [vmem:[#allocation11 + $0xc8] sm:$0xff]
    %v1162 = vld [vmem:[#allocation11 + $0xd0] sm:$0xff]
    %v1163 = vld [vmem:[#allocation11 + $0xd8] sm:$0xff]
    %v1164 = vld [vmem:[#allocation11 + $0xe0] sm:$0xff]
    %v1165 = vld [vmem:[#allocation11 + $0xe8] sm:$0xff]
    %v1166 = vld [vmem:[#allocation11 + $0xf0] sm:$0xff]
    %v1167 = vld [vmem:[#allocation11 + $0xf8] sm:$0xff]
    %v1168 = vld [vmem:[#allocation11 + $0x100] sm:$0xff]
    %v1169 = vld [vmem:[#allocation11 + $0x108] sm:$0xff]
    %v1170 = vld [vmem:[#allocation11 + $0x110] sm:$0xff]
    %v1171 = vld [vmem:[#allocation11 + $0x118] sm:$0xff]
    %v1172 = vld [vmem:[#allocation11 + $0x120] sm:$0xff]
    %v1173 = vld [vmem:[#allocation11 + $0x128] sm:$0xff]
    %v1174 = vld [vmem:[#allocation11 + $0x130] sm:$0xff]
    %v1175 = vld [vmem:[#allocation11 + $0x138] sm:$0xff]
    %v1176 = vld [vmem:[#allocation11 + $0x140] sm:$0xff]
    %v1177 = vld [vmem:[#allocation11 + $0x148] sm:$0xff]
    %v1178 = vld [vmem:[#allocation11 + $0x150] sm:$0xff]
    %v1179 = vld [vmem:[#allocation11 + $0x158] sm:$0xff]
    %v1180 = vld [vmem:[#allocation11 + $0x160] sm:$0xff]
    %v1181 = vld [vmem:[#allocation11 + $0x168] sm:$0xff]
    %v1182 = vld [vmem:[#allocation11 + $0x170] sm:$0xff]
    %v1183 = vld [vmem:[#allocation11 + $0x178] sm:$0xff]
    %v1184 = vld [vmem:[#allocation11 + $0x180] sm:$0xff]
    %v1185 = vld [vmem:[#allocation11 + $0x188] sm:$0xff]
    %v1186 = vld [vmem:[#allocation11 + $0x190] sm:$0xff]
    %v1187 = vld [vmem:[#allocation11 + $0x198] sm:$0xff]
    %v1188 = vld [vmem:[#allocation11 + $0x1a0] sm:$0xff]
    %v1189 = vld [vmem:[#allocation11 + $0x1a8] sm:$0xff]
    %v1190 = vld [vmem:[#allocation11 + $0x1b0] sm:$0xff]
    %v1191 = vld [vmem:[#allocation11 + $0x1b8] sm:$0xff]
    %v1192 = vld [vmem:[#allocation11 + $0x1c0] sm:$0xff]
    %v1193 = vld [vmem:[#allocation11 + $0x1c8] sm:$0xff]
    %v1194 = vld [vmem:[#allocation11 + $0x1d0] sm:$0xff]
    %v1195 = vld [vmem:[#allocation11 + $0x1d8] sm:$0xff]
    %v1196 = vld [vmem:[#allocation11 + $0x1e0] sm:$0xff]
    %v1197 = vld [vmem:[#allocation11 + $0x1e8] sm:$0xff]
    %v1198 = vld [vmem:[#allocation11 + $0x1f0] sm:$0xff]
    %v1199 = vld [vmem:[#allocation11 + $0x1f8] sm:$0xff]
    %v1200 = vld [vmem:[%s9] sm:$0xff]
    %v1202 = vlaneseq
    %v1203 = vshrl.u32 %v1202, 7
    %v1204 = vsub.s32 0, %v1203
    %v1205 = vrot.slane %v1200, %v1204
    %v1206 = vlaneseq
    %v1207 = vshrl.u32 %v1206, 7
    %v1208 = vsub.s32 1, %v1207
    %v1209 = vrot.slane %v1200, %v1208
    %v1210 = vlaneseq
    %v1211 = vshrl.u32 %v1210, 7
    %v1212 = vsub.s32 2, %v1211
    %v1213 = vrot.slane %v1200, %v1212
    %v1214 = vlaneseq
    %v1215 = vshrl.u32 %v1214, 7
    %v1216 = vsub.s32 3, %v1215
    %v1217 = vrot.slane %v1200, %v1216
    %v1218 = vlaneseq
    %v1219 = vshrl.u32 %v1218, 7
    %v1220 = vsub.s32 4, %v1219
    %v1221 = vrot.slane %v1200, %v1220
    %v1222 = vlaneseq
    %v1223 = vshrl.u32 %v1222, 7
    %v1224 = vsub.s32 5, %v1223
    %v1225 = vrot.slane %v1200, %v1224
    %v1226 = vlaneseq
    %v1227 = vshrl.u32 %v1226, 7
    %v1228 = vsub.s32 6, %v1227
    %v1229 = vrot.slane %v1200, %v1228
    %v1230 = vlaneseq
    %v1231 = vshrl.u32 %v1230, 7
    %v1232 = vsub.s32 7, %v1231
    %v1233 = vrot.slane %v1200, %v1232
    %v1306 = vunpack.c.l.b16 %v1136
    %v1307 = vunpack.c.h.b16 %v1136
    %v1308 = vunpack.c.l.b16 %v1137
    %v1309 = vunpack.c.h.b16 %v1137
    %v1310 = vunpack.c.l.b16 %v1138
    %v1311 = vunpack.c.h.b16 %v1138
    %v1312 = vunpack.c.l.b16 %v1139
    %v1313 = vunpack.c.h.b16 %v1139
    %v1314 = vunpack.c.l.b16 %v1140
    %v1315 = vunpack.c.h.b16 %v1140
    %v1316 = vunpack.c.l.b16 %v1141
    %v1317 = vunpack.c.h.b16 %v1141
    %v1318 = vunpack.c.l.b16 %v1142
    %v1319 = vunpack.c.h.b16 %v1142
    %v1320 = vunpack.c.l.b16 %v1143
    %v1321 = vunpack.c.h.b16 %v1143
    %v1322 = vunpack.c.l.b16 %v1144
    %v1323 = vunpack.c.h.b16 %v1144
    %v1324 = vunpack.c.l.b16 %v1145
    %v1325 = vunpack.c.h.b16 %v1145
    %v1326 = vunpack.c.l.b16 %v1146
    %v1327 = vunpack.c.h.b16 %v1146
    %v1328 = vunpack.c.l.b16 %v1147
    %v1329 = vunpack.c.h.b16 %v1147
    %v1330 = vunpack.c.l.b16 %v1148
    %v1331 = vunpack.c.h.b16 %v1148
    %v1332 = vunpack.c.l.b16 %v1149
    %v1333 = vunpack.c.h.b16 %v1149
    %v1334 = vunpack.c.l.b16 %v1150
    %v1335 = vunpack.c.h.b16 %v1150
    %v1336 = vunpack.c.l.b16 %v1151
    %v1337 = vunpack.c.h.b16 %v1151
    %v1338 = vunpack.c.l.b16 %v1152
    %v1339 = vunpack.c.h.b16 %v1152
    %v1340 = vunpack.c.l.b16 %v1153
    %v1341 = vunpack.c.h.b16 %v1153
    %v1342 = vunpack.c.l.b16 %v1154
    %v1343 = vunpack.c.h.b16 %v1154
    %v1344 = vunpack.c.l.b16 %v1155
    %v1345 = vunpack.c.h.b16 %v1155
    %v1346 = vunpack.c.l.b16 %v1156
    %v1347 = vunpack.c.h.b16 %v1156
    %v1348 = vunpack.c.l.b16 %v1157
    %v1349 = vunpack.c.h.b16 %v1157
    %v1350 = vunpack.c.l.b16 %v1158
    %v1351 = vunpack.c.h.b16 %v1158
    %v1352 = vunpack.c.l.b16 %v1159
    %v1353 = vunpack.c.h.b16 %v1159
    %v1354 = vunpack.c.l.b16 %v1160
    %v1355 = vunpack.c.h.b16 %v1160
    %v1356 = vunpack.c.l.b16 %v1161
    %v1357 = vunpack.c.h.b16 %v1161
    %v1358 = vunpack.c.l.b16 %v1162
    %v1359 = vunpack.c.h.b16 %v1162
    %v1360 = vunpack.c.l.b16 %v1163
    %v1361 = vunpack.c.h.b16 %v1163
    %v1362 = vunpack.c.l.b16 %v1164
    %v1363 = vunpack.c.h.b16 %v1164
    %v1364 = vunpack.c.l.b16 %v1165
    %v1365 = vunpack.c.h.b16 %v1165
    %v1366 = vunpack.c.l.b16 %v1166
    %v1367 = vunpack.c.h.b16 %v1166
    %v1368 = vunpack.c.l.b16 %v1167
    %v1369 = vunpack.c.h.b16 %v1167
    %v1370 = vunpack.c.l.b16 %v1168
    %v1371 = vunpack.c.h.b16 %v1168
    %v1372 = vunpack.c.l.b16 %v1169
    %v1373 = vunpack.c.h.b16 %v1169
    %v1374 = vunpack.c.l.b16 %v1170
    %v1375 = vunpack.c.h.b16 %v1170
    %v1376 = vunpack.c.l.b16 %v1171
    %v1377 = vunpack.c.h.b16 %v1171
    %v1378 = vunpack.c.l.b16 %v1172
    %v1379 = vunpack.c.h.b16 %v1172
    %v1380 = vunpack.c.l.b16 %v1173
    %v1381 = vunpack.c.h.b16 %v1173
    %v1382 = vunpack.c.l.b16 %v1174
    %v1383 = vunpack.c.h.b16 %v1174
    %v1384 = vunpack.c.l.b16 %v1175
    %v1385 = vunpack.c.h.b16 %v1175
    %v1386 = vunpack.c.l.b16 %v1176
    %v1387 = vunpack.c.h.b16 %v1176
    %v1388 = vunpack.c.l.b16 %v1177
    %v1389 = vunpack.c.h.b16 %v1177
    %v1390 = vunpack.c.l.b16 %v1178
    %v1391 = vunpack.c.h.b16 %v1178
    %v1392 = vunpack.c.l.b16 %v1179
    %v1393 = vunpack.c.h.b16 %v1179
    %v1394 = vunpack.c.l.b16 %v1180
    %v1395 = vunpack.c.h.b16 %v1180
    %v1396 = vunpack.c.l.b16 %v1181
    %v1397 = vunpack.c.h.b16 %v1181
    %v1398 = vunpack.c.l.b16 %v1182
    %v1399 = vunpack.c.h.b16 %v1182
    %v1400 = vunpack.c.l.b16 %v1183
    %v1401 = vunpack.c.h.b16 %v1183
    %v1402 = vunpack.c.l.b16 %v1184
    %v1403 = vunpack.c.h.b16 %v1184
    %v1404 = vunpack.c.l.b16 %v1185
    %v1405 = vunpack.c.h.b16 %v1185
    %v1406 = vunpack.c.l.b16 %v1186
    %v1407 = vunpack.c.h.b16 %v1186
    %v1408 = vunpack.c.l.b16 %v1187
    %v1409 = vunpack.c.h.b16 %v1187
    %v1410 = vunpack.c.l.b16 %v1188
    %v1411 = vunpack.c.h.b16 %v1188
    %v1412 = vunpack.c.l.b16 %v1189
    %v1413 = vunpack.c.h.b16 %v1189
    %v1414 = vunpack.c.l.b16 %v1190
    %v1415 = vunpack.c.h.b16 %v1190
    %v1416 = vunpack.c.l.b16 %v1191
    %v1417 = vunpack.c.h.b16 %v1191
    %v1418 = vunpack.c.l.b16 %v1192
    %v1419 = vunpack.c.h.b16 %v1192
    %v1420 = vunpack.c.l.b16 %v1193
    %v1421 = vunpack.c.h.b16 %v1193
    %v1422 = vunpack.c.l.b16 %v1194
    %v1423 = vunpack.c.h.b16 %v1194
    %v1424 = vunpack.c.l.b16 %v1195
    %v1425 = vunpack.c.h.b16 %v1195
    %v1426 = vunpack.c.l.b16 %v1196
    %v1427 = vunpack.c.h.b16 %v1196
    %v1428 = vunpack.c.l.b16 %v1197
    %v1429 = vunpack.c.h.b16 %v1197
    %v1430 = vunpack.c.l.b16 %v1198
    %v1431 = vunpack.c.h.b16 %v1198
    %v1432 = vunpack.c.l.b16 %v1199
    %v1433 = vunpack.c.h.b16 %v1199
    %v1434 = vpack.c.b16 %v1314, %v1306
    %v1435 = vpack.c.b16 %v1315, %v1307
    %v1436 = vpack.c.b16 %v1316, %v1308
    %v1437 = vpack.c.b16 %v1317, %v1309
    %v1438 = vpack.c.b16 %v1318, %v1310
    %v1439 = vpack.c.b16 %v1319, %v1311
    %v1440 = vpack.c.b16 %v1320, %v1312
    %v1441 = vpack.c.b16 %v1321, %v1313
    %v1442 = vpack.c.b16 %v1330, %v1322
    %v1443 = vpack.c.b16 %v1331, %v1323
    %v1444 = vpack.c.b16 %v1332, %v1324
    %v1445 = vpack.c.b16 %v1333, %v1325
    %v1446 = vpack.c.b16 %v1334, %v1326
    %v1447 = vpack.c.b16 %v1335, %v1327
    %v1448 = vpack.c.b16 %v1336, %v1328
    %v1449 = vpack.c.b16 %v1337, %v1329
    %v1450 = vpack.c.b16 %v1346, %v1338
    %v1451 = vpack.c.b16 %v1347, %v1339
    %v1452 = vpack.c.b16 %v1348, %v1340
    %v1453 = vpack.c.b16 %v1349, %v1341
    %v1454 = vpack.c.b16 %v1350, %v1342
    %v1455 = vpack.c.b16 %v1351, %v1343
    %v1456 = vpack.c.b16 %v1352, %v1344
    %v1457 = vpack.c.b16 %v1353, %v1345
    %v1458 = vpack.c.b16 %v1362, %v1354
    %v1459 = vpack.c.b16 %v1363, %v1355
    %v1460 = vpack.c.b16 %v1364, %v1356
    %v1461 = vpack.c.b16 %v1365, %v1357
    %v1462 = vpack.c.b16 %v1366, %v1358
    %v1463 = vpack.c.b16 %v1367, %v1359
    %v1464 = vpack.c.b16 %v1368, %v1360
    %v1465 = vpack.c.b16 %v1369, %v1361
    %v1466 = vpack.c.b16 %v1378, %v1370
    %v1467 = vpack.c.b16 %v1379, %v1371
    %v1468 = vpack.c.b16 %v1380, %v1372
    %v1469 = vpack.c.b16 %v1381, %v1373
    %v1470 = vpack.c.b16 %v1382, %v1374
    %v1471 = vpack.c.b16 %v1383, %v1375
    %v1472 = vpack.c.b16 %v1384, %v1376
    %v1473 = vpack.c.b16 %v1385, %v1377
    %v1474 = vpack.c.b16 %v1394, %v1386
    %v1475 = vpack.c.b16 %v1395, %v1387
    %v1476 = vpack.c.b16 %v1396, %v1388
    %v1477 = vpack.c.b16 %v1397, %v1389
    %v1478 = vpack.c.b16 %v1398, %v1390
    %v1479 = vpack.c.b16 %v1399, %v1391
    %v1480 = vpack.c.b16 %v1400, %v1392
    %v1481 = vpack.c.b16 %v1401, %v1393
    %v1482 = vpack.c.b16 %v1410, %v1402
    %v1483 = vpack.c.b16 %v1411, %v1403
    %v1484 = vpack.c.b16 %v1412, %v1404
    %v1485 = vpack.c.b16 %v1413, %v1405
    %v1486 = vpack.c.b16 %v1414, %v1406
    %v1487 = vpack.c.b16 %v1415, %v1407
    %v1488 = vpack.c.b16 %v1416, %v1408
    %v1489 = vpack.c.b16 %v1417, %v1409
    %v1490 = vpack.c.b16 %v1426, %v1418
    %v1491 = vpack.c.b16 %v1427, %v1419
    %v1492 = vpack.c.b16 %v1428, %v1420
    %v1493 = vpack.c.b16 %v1429, %v1421
    %v1494 = vpack.c.b16 %v1430, %v1422
    %v1495 = vpack.c.b16 %v1431, %v1423
    %v1496 = vpack.c.b16 %v1432, %v1424
    %v1497 = vpack.c.b16 %v1433, %v1425
    %1562 = vmatprep.subr.bf16.mxu0 %v1491
    %1563 = vmatpush1.bf16.msra.mxu0 %v1490
    %1564 = vmatprep.subr.bf16.mxu0 %v1483
    %1565 = vmatpush1.bf16.msra.mxu0 %v1482
    %1566 = vmatprep.subr.bf16.mxu0 %v1475
    %1567 = vmatpush1.bf16.msra.mxu0 %v1474
    %1568 = vmatprep.subr.bf16.mxu0 %v1467
    %1569 = vmatpush1.bf16.msra.mxu0 %v1466
    %1570 = vmatprep.subr.bf16.mxu0 %v1459
    %1571 = vmatpush1.bf16.msra.mxu0 %v1458
    %1572 = vmatprep.subr.bf16.mxu0 %v1451
    %1573 = vmatpush1.bf16.msra.mxu0 %v1450
    %1574 = vmatprep.subr.bf16.mxu0 %v1443
    %1575 = vmatpush1.bf16.msra.mxu0 %v1442
    %1576 = vmatprep.subr.bf16.mxu0 %v1435
    %1577 = vmatpush1.bf16.msra.mxu0 %v1434
    %1578 = vmatprep.subr.bf16.mxu0 0
    %1579 = vmatpush2.bf16.msra.mxu0 0
    %1580 = vmatprep.subr.bf16.mxu0 0
    %1581 = vmatpush2.bf16.msra.mxu0 0
    %1582 = vmatprep.subr.bf16.mxu0 0
    %1583 = vmatpush2.bf16.msra.mxu0 0
    %1584 = vmatprep.subr.bf16.mxu0 0
    %1585 = vmatpush2.bf16.msra.mxu0 0
    %1586 = vmatprep.subr.bf16.mxu0 0
    %1587 = vmatpush2.bf16.msra.mxu0 0
    %1588 = vmatprep.subr.bf16.mxu0 0
    %1589 = vmatpush2.bf16.msra.mxu0 0
    %1590 = vmatprep.subr.bf16.mxu0 0
    %1591 = vmatpush2.bf16.msra.mxu0 0
    %1592 = vmatprep.subr.bf16.mxu0 0
    %1593 = vmatpush2.bf16.msra.mxu0 0
    %1594 = vmatprep.mubr.bf16.mxu0 0
    %1595 = vmatmul.mubr.bf16.gmra.mxu0 %v1135
    %v1596 = vpop.f32.mrf.mxu0
    %v1597 = vadd.f32 %v1205, %v1596
    %v1598 = vpop.f32.mrf.mxu0
    %v1599 = vadd.f32 %v1209, %v1598
    %v1600 = vpop.f32.mrf.mxu0
    %v1601 = vadd.f32 %v1205, %v1600
    %v1602 = vpop.f32.mrf.mxu0
    %v1603 = vadd.f32 %v1209, %v1602
    %1604 = vdwg.mxu0
    %1605 = vmatprep.subr.bf16.mxu0 %v1493
    %1606 = vmatpush1.bf16.msra.mxu0 %v1492
    %1607 = vmatprep.subr.bf16.mxu0 %v1485
    %1608 = vmatpush1.bf16.msra.mxu0 %v1484
    %1609 = vmatprep.subr.bf16.mxu0 %v1477
    %1610 = vmatpush1.bf16.msra.mxu0 %v1476
    %1611 = vmatprep.subr.bf16.mxu0 %v1469
    %1612 = vmatpush1.bf16.msra.mxu0 %v1468
    %1613 = vmatprep.subr.bf16.mxu0 %v1461
    %1614 = vmatpush1.bf16.msra.mxu0 %v1460
    %1615 = vmatprep.subr.bf16.mxu0 %v1453
    %1616 = vmatpush1.bf16.msra.mxu0 %v1452
    %1617 = vmatprep.subr.bf16.mxu0 %v1445
    %1618 = vmatpush1.bf16.msra.mxu0 %v1444
    %1619 = vmatprep.subr.bf16.mxu0 %v1437
    %1620 = vmatpush1.bf16.msra.mxu0 %v1436
    %1621 = vmatprep.subr.bf16.mxu0 0
    %1622 = vmatpush2.bf16.msra.mxu0 0
    %1623 = vmatprep.subr.bf16.mxu0 0
    %1624 = vmatpush2.bf16.msra.mxu0 0
    %1625 = vmatprep.subr.bf16.mxu0 0
    %1626 = vmatpush2.bf16.msra.mxu0 0
    %1627 = vmatprep.subr.bf16.mxu0 0
    %1628 = vmatpush2.bf16.msra.mxu0 0
    %1629 = vmatprep.subr.bf16.mxu0 0
    %1630 = vmatpush2.bf16.msra.mxu0 0
    %1631 = vmatprep.subr.bf16.mxu0 0
    %1632 = vmatpush2.bf16.msra.mxu0 0
    %1633 = vmatprep.subr.bf16.mxu0 0
    %1634 = vmatpush2.bf16.msra.mxu0 0
    %1635 = vmatprep.subr.bf16.mxu0 0
    %1636 = vmatpush2.bf16.msra.mxu0 0
    %1637 = vmatprep.mubr.bf16.mxu0 0
    %1638 = vmatmul.mubr.bf16.gmra.mxu0 %v1135
    %v1639 = vpop.f32.mrf.mxu0
    %v1640 = vadd.f32 %v1213, %v1639
    %v1641 = vpop.f32.mrf.mxu0
    %v1642 = vadd.f32 %v1217, %v1641
    %v1643 = vpop.f32.mrf.mxu0
    %v1644 = vadd.f32 %v1213, %v1643
    %v1645 = vpop.f32.mrf.mxu0
    %v1646 = vadd.f32 %v1217, %v1645
    %1647 = vdwg.mxu0
    %1648 = vmatprep.subr.bf16.mxu0 %v1495
    %1649 = vmatpush1.bf16.msra.mxu0 %v1494
    %1650 = vmatprep.subr.bf16.mxu0 %v1487
    %1651 = vmatpush1.bf16.msra.mxu0 %v1486
    %1652 = vmatprep.subr.bf16.mxu0 %v1479
    %1653 = vmatpush1.bf16.msra.mxu0 %v1478
    %1654 = vmatprep.subr.bf16.mxu0 %v1471
    %1655 = vmatpush1.bf16.msra.mxu0 %v1470
    %1656 = vmatprep.subr.bf16.mxu0 %v1463
    %1657 = vmatpush1.bf16.msra.mxu0 %v1462
    %1658 = vmatprep.subr.bf16.mxu0 %v1455
    %1659 = vmatpush1.bf16.msra.mxu0 %v1454
    %1660 = vmatprep.subr.bf16.mxu0 %v1447
    %1661 = vmatpush1.bf16.msra.mxu0 %v1446
    %1662 = vmatprep.subr.bf16.mxu0 %v1439
    %1663 = vmatpush1.bf16.msra.mxu0 %v1438
    %1664 = vmatprep.subr.bf16.mxu0 0
    %1665 = vmatpush2.bf16.msra.mxu0 0
    %1666 = vmatprep.subr.bf16.mxu0 0
    %1667 = vmatpush2.bf16.msra.mxu0 0
    %1668 = vmatprep.subr.bf16.mxu0 0
    %1669 = vmatpush2.bf16.msra.mxu0 0
    %1670 = vmatprep.subr.bf16.mxu0 0
    %1671 = vmatpush2.bf16.msra.mxu0 0
    %1672 = vmatprep.subr.bf16.mxu0 0
    %1673 = vmatpush2.bf16.msra.mxu0 0
    %1674 = vmatprep.subr.bf16.mxu0 0
    %1675 = vmatpush2.bf16.msra.mxu0 0
    %1676 = vmatprep.subr.bf16.mxu0 0
    %1677 = vmatpush2.bf16.msra.mxu0 0
    %1678 = vmatprep.subr.bf16.mxu0 0
    %1679 = vmatpush2.bf16.msra.mxu0 0
    %1680 = vmatprep.mubr.bf16.mxu0 0
    %1681 = vmatmul.mubr.bf16.gmra.mxu0 %v1135
    %v1682 = vpop.f32.mrf.mxu0
    %v1683 = vadd.f32 %v1221, %v1682
    %v1684 = vpop.f32.mrf.mxu0
    %v1685 = vadd.f32 %v1225, %v1684
    %v1686 = vpop.f32.mrf.mxu0
    %v1687 = vadd.f32 %v1221, %v1686
    %v1688 = vpop.f32.mrf.mxu0
    %v1689 = vadd.f32 %v1225, %v1688
    %1690 = vdwg.mxu0
    %1691 = vmatprep.subr.bf16.mxu0 %v1497
    %1692 = vmatpush1.bf16.msra.mxu0 %v1496
    %1693 = vmatprep.subr.bf16.mxu0 %v1489
    %1694 = vmatpush1.bf16.msra.mxu0 %v1488
    %1695 = vmatprep.subr.bf16.mxu0 %v1481
    %1696 = vmatpush1.bf16.msra.mxu0 %v1480
    %1697 = vmatprep.subr.bf16.mxu0 %v1473
    %1698 = vmatpush1.bf16.msra.mxu0 %v1472
    %1699 = vmatprep.subr.bf16.mxu0 %v1465
    %1700 = vmatpush1.bf16.msra.mxu0 %v1464
    %1701 = vmatprep.subr.bf16.mxu0 %v1457
    %1702 = vmatpush1.bf16.msra.mxu0 %v1456
    %1703 = vmatprep.subr.bf16.mxu0 %v1449
    %1704 = vmatpush1.bf16.msra.mxu0 %v1448
    %1705 = vmatprep.subr.bf16.mxu0 %v1441
    %1706 = vmatpush1.bf16.msra.mxu0 %v1440
    %1707 = vmatprep.subr.bf16.mxu0 0
    %1708 = vmatpush2.bf16.msra.mxu0 0
    %1709 = vmatprep.subr.bf16.mxu0 0
    %1710 = vmatpush2.bf16.msra.mxu0 0
    %1711 = vmatprep.subr.bf16.mxu0 0
    %1712 = vmatpush2.bf16.msra.mxu0 0
    %1713 = vmatprep.subr.bf16.mxu0 0
    %1714 = vmatpush2.bf16.msra.mxu0 0
    %1715 = vmatprep.subr.bf16.mxu0 0
    %1716 = vmatpush2.bf16.msra.mxu0 0
    %1717 = vmatprep.subr.bf16.mxu0 0
    %1718 = vmatpush2.bf16.msra.mxu0 0
    %1719 = vmatprep.subr.bf16.mxu0 0
    %1720 = vmatpush2.bf16.msra.mxu0 0
    %1721 = vmatprep.subr.bf16.mxu0 0
    %1722 = vmatpush2.bf16.msra.mxu0 0
    %1723 = vmatprep.mubr.bf16.mxu0 0
    %1724 = vmatmul.mubr.bf16.gmra.mxu0 %v1135
    %v1725 = vpop.f32.mrf.mxu0
    %v1726 = vadd.f32 %v1229, %v1725
    %v1727 = vpop.f32.mrf.mxu0
    %v1728 = vadd.f32 %v1233, %v1727
    %v1729 = vpop.f32.mrf.mxu0
    %v1730 = vadd.f32 %v1229, %v1729
    %v1731 = vpop.f32.mrf.mxu0
    %v1732 = vadd.f32 %v1233, %v1731
    %1733 = vdwg.mxu0
    %v1734 = vpack.c.bf16 %v1601, %v1597
    %v1735 = vpack.c.bf16 %v1603, %v1599
    %v1736 = vpack.c.bf16 %v1644, %v1640
    %v1737 = vpack.c.bf16 %v1646, %v1642
    %v1738 = vpack.c.bf16 %v1687, %v1683
    %v1739 = vpack.c.bf16 %v1689, %v1685
    %v1740 = vpack.c.bf16 %v1730, %v1726
    %v1741 = vpack.c.bf16 %v1732, %v1728
    %v1742 = vxor.u32 %v1734, 2147516416
    %v1743 = vxor.u32 %v1735, 2147516416
    %v1744 = vxor.u32 %v1736, 2147516416
    %v1745 = vxor.u32 %v1737, 2147516416
    %v1746 = vxor.u32 %v1738, 2147516416
    %v1747 = vxor.u32 %v1739, 2147516416
    %v1748 = vxor.u32 %v1740, 2147516416
    %v1749 = vxor.u32 %v1741, 2147516416
    %v1751 = vmul.bf16 %v1742, 1069105081
    %v1752 = vpow.bf16.pop %v1751
    %v1754 = vmul.bf16 %v1743, 1069105081
    %v1755 = vpow.bf16.pop %v1754
    %v1757 = vmul.bf16 %v1744, 1069105081
    %v1758 = vpow.bf16.pop %v1757
    %v1760 = vmul.bf16 %v1745, 1069105081
    %v1761 = vpow.bf16.pop %v1760
    %v1763 = vmul.bf16 %v1746, 1069105081
    %v1764 = vpow.bf16.pop %v1763
    %v1766 = vmul.bf16 %v1747, 1069105081
    %v1767 = vpow.bf16.pop %v1766
    %v1769 = vmul.bf16 %v1748, 1069105081
    %v1770 = vpow.bf16.pop %v1769
    %v1772 = vmul.bf16 %v1749, 1069105081
    %v1773 = vpow.bf16.pop %v1772
    %v1774 = vadd.bf16 %v1752, 1065369472
    %v1775 = vadd.bf16 %v1755, 1065369472
    %v1776 = vadd.bf16 %v1758, 1065369472
    %v1777 = vadd.bf16 %v1761, 1065369472
    %v1778 = vadd.bf16 %v1764, 1065369472
    %v1779 = vadd.bf16 %v1767, 1065369472
    %v1780 = vadd.bf16 %v1770, 1065369472
    %v1781 = vadd.bf16 %v1773, 1065369472
    %v1782 = vrcp.bf16.pop %v1774
    %v1783 = vmul.bf16 1065369472, %v1782
    %v1784 = vrcp.bf16.pop %v1775
    %v1785 = vmul.bf16 1065369472, %v1784
    %v1786 = vrcp.bf16.pop %v1776
    %v1787 = vmul.bf16 1065369472, %v1786
    %v1788 = vrcp.bf16.pop %v1777
    %v1789 = vmul.bf16 1065369472, %v1788
    %v1790 = vrcp.bf16.pop %v1778
    %v1791 = vmul.bf16 1065369472, %v1790
    %v1792 = vrcp.bf16.pop %v1779
    %v1793 = vmul.bf16 1065369472, %v1792
    %v1794 = vrcp.bf16.pop %v1780
    %v1795 = vmul.bf16 1065369472, %v1794
    %v1796 = vrcp.bf16.pop %v1781
    %v1797 = vmul.bf16 1065369472, %v1796
    %v1806 = vunpack.c.l.b16 %v1783
    %v1807 = vunpack.c.l.b16 %v1785
    %v1808 = vunpack.c.l.b16 %v1787
    %v1809 = vunpack.c.l.b16 %v1789
    %v1810 = vunpack.c.l.b16 %v1791
    %v1811 = vunpack.c.l.b16 %v1793
    %v1812 = vunpack.c.l.b16 %v1795
    %v1813 = vunpack.c.l.b16 %v1797
    %v1814 = vunpack.c.h.b16 %v1783
    %v1815 = vunpack.c.h.b16 %v1785
    %v1816 = vunpack.c.h.b16 %v1787
    %v1817 = vunpack.c.h.b16 %v1789
    %v1818 = vunpack.c.h.b16 %v1791
    %v1819 = vunpack.c.h.b16 %v1793
    %v1820 = vunpack.c.h.b16 %v1795
    %v1821 = vunpack.c.h.b16 %v1797
    %v1822 = vpack.c.b16 %v1807, %v1806
    %v1823 = vpack.c.b16 %v1809, %v1808
    %v1824 = vpack.c.b16 %v1811, %v1810
    %v1825 = vpack.c.b16 %v1813, %v1812
    %v1826 = vpack.c.b16 %v1815, %v1814
    %v1827 = vpack.c.b16 %v1817, %v1816
    %v1828 = vpack.c.b16 %v1819, %v1818
    %v1829 = vpack.c.b16 %v1821, %v1820
    %1838 = vst [vmem:[#allocation13] sm:$0xff] %v1822
    %1839 = vst [vmem:[#allocation13 + $0x8] sm:$0xff] %v1823
    %1840 = vst [vmem:[#allocation13 + $0x10] sm:$0xff] %v1824
    %1841 = vst [vmem:[#allocation13 + $0x18] sm:$0xff] %v1825
    %1842 = vst [vmem:[#allocation13 + $0x20] sm:$0xff] %v1826
    %1843 = vst [vmem:[#allocation13 + $0x28] sm:$0xff] %v1827
    %1844 = vst [vmem:[#allocation13 + $0x30] sm:$0xff] %v1828
    %1845 = vst [vmem:[#allocation13 + $0x38] sm:$0xff] %v1829
    %1846 = vst [vmem:[#allocation14] sm:$0xff] %v1000
    %1847 = vst [vmem:[#allocation14 + $0x8] sm:$0xff] %v1002
    %1848 = vst [vmem:[#allocation14 + $0x10] sm:$0xff] %v1004
    %1849 = vst [vmem:[#allocation14 + $0x18] sm:$0xff] %v1006
    // Predicated region
    $region66: #{tpu_custom_call.1} parent=1 // pred_check
      _
    $region67: #{tpu_custom_call.1} parent=1 // pred_check_branch
      %1851 = sbr.rel (0) target = $region69
    $region68: #{tpu_custom_call.1} parent=1 // pred_region
      %s1853 = ssub.s32 1024, 1024
      %1854 = vsyncadd [#allocation4], %s1853
      %s1855 = sshll.u32 [#allocation13], 4
      %s1856 = int_to_ptr.vmem [resolvable:$true] %s1855
      %1861 = dma.vmem_to_hbm [thread:$0]  %s1856, 1024, %s10, [#allocation4], 512, 512, 32
    $region69: #{tpu_custom_call.1} parent=1 // pred_fallthru
      _
    // Predicated region
    $region70: #{tpu_custom_call.1} parent=1 // pred_check
      _
    $region71: #{tpu_custom_call.1} parent=1 // pred_check_branch
      %1863 = sbr.rel (0) target = $region73
    $region72: #{tpu_custom_call.1} parent=1 // pred_region
      %s1865 = ssub.s32 512, 512
      %1866 = vsyncadd [#allocation15], %s1865
      %s1867 = sshll.u32 [#allocation14], 4
      %s1868 = int_to_ptr.vmem [resolvable:$true] %s1867
      %1873 = dma.vmem_to_hbm [thread:$0]  %s1868, 512, %s11, [#allocation15], 256, 256, 16
    $region73: #{tpu_custom_call.1} parent=1 // pred_fallthru
      _
    // Predicated region
    $region74: #{tpu_custom_call.1} parent=1 // pred_check
      _
    $region75: #{tpu_custom_call.1} parent=1 // pred_check_branch
      %1875 = sbr.rel (0) target = $region77
    $region76: #{tpu_custom_call.1} parent=1 // pred_region
      %1876 = dma.done [#allocation4], 1024
    $region77: #{tpu_custom_call.1} parent=1 // pred_fallthru
      _
    // Predicated region
    $region78: #{tpu_custom_call.1} parent=1 // pred_check
      _
    $region79: #{tpu_custom_call.1} parent=1 // pred_check_branch
      %1878 = sbr.rel (0) target = $region81
    $region80: #{tpu_custom_call.1} parent=1 // pred_region
      %1879 = dma.done [#allocation15], 512
    $region81: #{tpu_custom_call.1} parent=1 // pred_fallthru
      _
    %1880 = vsyncpa [#allocation3], 1
    %1881 = vsyncpa [#allocation6], 1
    %1882 = vsyncpa [#allocation9], 1
    %1883 = vsyncpa [#allocation12], 1
    %1884 = vsyncpa [#allocation4], 1
    %1885 = vsyncpa [#allocation15], 1

// kernel: tpu_custom_call.1
$region0: #{tpu_custom_call.1}
  #allocation0 [shape = 'u32[]', space=smem, size = 0x4, offset = 0x4, fixed_abs, tag = 'smem constant byte address 0x4 - core index']
  #allocation1 [shape = 'u32[144,128]{1,0:T(1,128)}', space=vmem, size = 0x12000, scoped, tag = 'internal scratch']
  %s0 = inlined_call_operand.hbm [shape: bf16[16,1024], index: 0, kind: input, shape index: {}]
  %s1 = inlined_call_operand.hbm [shape: f32[16,128], index: 1, kind: input, shape index: {}]
  %s2 = inlined_call_operand.hbm [shape: bf16[1024,128], index: 2, kind: input, shape index: {}]
  %s3 = inlined_call_operand.vmem [shape: f32[1,128], index: 3, kind: input, shape index: {}]
  %s4 = inlined_call_operand.hbm [shape: bf16[128,256], index: 4, kind: input, shape index: {}]
  %s5 = inlined_call_operand.vmem [shape: f32[1,256], index: 5, kind: input, shape index: {}]
  %s6 = inlined_call_operand.hbm [shape: bf16[128,128], index: 6, kind: input, shape index: {}]
  %s7 = inlined_call_operand.vmem [shape: f32[1,128], index: 7, kind: input, shape index: {}]
  %s8 = inlined_call_operand.hbm [shape: bf16[128,1024], index: 8, kind: input, shape index: {}]
  %s9 = inlined_call_operand.vmem [shape: f32[1,1024], index: 9, kind: input, shape index: {}]
  %s10 = inlined_call_operand.hbm [shape: bf16[16,1024], index: 10, kind: output, shape index: {0}]
  %s11 = inlined_call_operand.hbm [shape: f32[16,256], index: 11, kind: output, shape index: {1}]
  %12 = xla_tuple %s10, %s11
  %s13 = sld [smem:[#allocation0]]
  $region82: #{tpu_custom_call.1} parent=0
    _
  %s15 = ssub.s32 1, %s13
  %s16 = scalar_select 0, %s15, %s13
  $region1: #{tpu_custom_call.1} parent=0
    #allocation2 [shape = 'u8[32768]{0}', space=vmem, size = 0x8000, scoped, tag = 'input window, operand 0, single buffered']
    #allocation3 [shape = 's32[1]{0}', space=sflag, size = 0x4, scoped, tag = 'scoped memory for tpu_custom_call.1']
    #allocation4 [shape = 's32[1]{0}', space=sflag, size = 0x4, scoped, tag = 'scoped memory for tpu_custom_call.1']
    #allocation5 [shape = 'u8[8192]{0}', space=vmem, size = 0x2000, scoped, tag = 'input window, operand 1, single buffered']
    #allocation6 [shape = 's32[1]{0}', space=sflag, size = 0x4, scoped, tag = 'scoped memory for tpu_custom_call.1']
    #allocation7 [shape = 'u8[262144]{0}', space=vmem, size = 0x40000, scoped, tag = 'input window, operand 2, single buffered']
    #allocation8 [shape = 'u8[65536]{0}', space=vmem, size = 0x10000, scoped, tag = 'input window, operand 4, single buffered']
    #allocation9 [shape = 's32[1]{0}', space=sflag, size = 0x4, scoped, tag = 'scoped memory for tpu_custom_call.1']
    #allocation10 [shape = 'u8[32768]{0}', space=vmem, size = 0x8000, scoped, tag = 'input window, operand 6, single buffered']
    #allocation11 [shape = 'u8[262144]{0}', space=vmem, size = 0x40000, scoped, tag = 'input window, operand 8, single buffered']
    #allocation12 [shape = 's32[1]{0}', space=sflag, size = 0x4, scoped, tag = 'scoped memory for tpu_custom_call.1']
    #allocation13 [shape = 'u8[32768]{0}', space=vmem, size = 0x8000, scoped, tag = 'output window, operand 0, single buffered']
    #allocation14 [shape = 'u8[16384]{0}', space=vmem, size = 0x4000, scoped, tag = 'output window, operand 1, single buffered']
    #allocation15 [shape = 's32[1]{0}', space=sflag, size = 0x4, scoped, tag = 'scoped memory for tpu_custom_call.1']
    %17 = vsyncpa [#allocation3], 0
    %18 = vsyncpa [#allocation6], 0
    %19 = vsyncpa [#allocation9], 0
    %20 = vsyncpa [#allocation12], 0
    %21 = vsyncpa [#allocation4], 0
    %22 = vsyncpa [#allocation15], 0
    // Predicated region
    $region2: #{tpu_custom_call.1} parent=1 // pred_check
      _
    $region3: #{tpu_custom_call.1} parent=1 // pred_check_branch
      %24 = sbr.rel (0) target = $region5
    $region4: #{tpu_custom_call.1} parent=1 // pred_region
      %s26 = ssub.s32 1024, 1024
      %27 = vsyncadd [#allocation3], %s26
      %s28 = sshll.u32 [#allocation2], 4
      %s29 = int_to_ptr.vmem [resolvable:$true] %s28
      %34 = dma.hbm_to_vmem [thread:$0]  %s0, 1024, %s29, [#allocation3], 512, 512, 32
    $region5: #{tpu_custom_call.1} parent=1 // pred_fallthru
      _
    // Predicated region
    $region6: #{tpu_custom_call.1} parent=1 // pred_check
      _
    $region7: #{tpu_custom_call.1} parent=1 // pred_check_branch
      %36 = sbr.rel (0) target = $region9
    $region8: #{tpu_custom_call.1} parent=1 // pred_region
      %s38 = ssub.s32 256, 256
      %39 = vsyncadd [#allocation6], %s38
      %s40 = sshll.u32 [#allocation5], 4
      %s41 = int_to_ptr.vmem [resolvable:$true] %s40
      %46 = dma.hbm_to_vmem [thread:$0]  %s1, 256, %s41, [#allocation6], 128, 128, 8
    $region9: #{tpu_custom_call.1} parent=1 // pred_fallthru
      _
    // Predicated region
    $region10: #{tpu_custom_call.1} parent=1 // pred_check
      _
    $region11: #{tpu_custom_call.1} parent=1 // pred_check_branch
      %48 = sbr.rel (0) target = $region13
    $region12: #{tpu_custom_call.1} parent=1 // pred_region
      %s50 = ssub.s32 8192, 8192
      %51 = vsyncadd [#allocation6], %s50
      %s52 = sshll.u32 [#allocation7], 4
      %s53 = int_to_ptr.vmem [resolvable:$true] %s52
      %58 = dma.hbm_to_vmem [thread:$0]  %s2, 8192, %s53, [#allocation6], 64, 64, 4
    $region13: #{tpu_custom_call.1} parent=1 // pred_fallthru
      _
    // Predicated region
    $region14: #{tpu_custom_call.1} parent=1 // pred_check
      _
    $region15: #{tpu_custom_call.1} parent=1 // pred_check_branch
      %60 = sbr.rel (0) target = $region17
    $region16: #{tpu_custom_call.1} parent=1 // pred_region
      _
    $region17: #{tpu_custom_call.1} parent=1 // pred_fallthru
      _
    // Predicated region
    $region18: #{tpu_custom_call.1} parent=1 // pred_check
      _
    $region19: #{tpu_custom_call.1} parent=1 // pred_check_branch
      %62 = sbr.rel (0) target = $region21
    $region20: #{tpu_custom_call.1} parent=1 // pred_region
      %s64 = ssub.s32 2048, 2048
      %65 = vsyncadd [#allocation9], %s64
      %s66 = sshll.u32 [#allocation8], 4
      %s67 = int_to_ptr.vmem [resolvable:$true] %s66
      %72 = dma.hbm_to_vmem [thread:$0]  %s4, 2048, %s67, [#allocation9], 128, 128, 8
    $region21: #{tpu_custom_call.1} parent=1 // pred_fallthru
      _
    // Predicated region
    $region22: #{tpu_custom_call.1} parent=1 // pred_check
      _
    $region23: #{tpu_custom_call.1} parent=1 // pred_check_branch
      %74 = sbr.rel (0) target = $region25
    $region24: #{tpu_custom_call.1} parent=1 // pred_region
      _
    $region25: #{tpu_custom_call.1} parent=1 // pred_fallthru
      _
    // Predicated region
    $region26: #{tpu_custom_call.1} parent=1 // pred_check
      _
    $region27: #{tpu_custom_call.1} parent=1 // pred_check_branch
      %76 = sbr.rel (0) target = $region29
    $region28: #{tpu_custom_call.1} parent=1 // pred_region
      %s78 = ssub.s32 1024, 1024
      %79 = vsyncadd [#allocation9], %s78
      %s80 = sshll.u32 [#allocation10], 4
      %s81 = int_to_ptr.vmem [resolvable:$true] %s80
      %86 = dma.hbm_to_vmem [thread:$0]  %s6, 1024, %s81, [#allocation9], 64, 64, 4
    $region29: #{tpu_custom_call.1} parent=1 // pred_fallthru
      _
    // Predicated region
    $region30: #{tpu_custom_call.1} parent=1 // pred_check
      _
    $region31: #{tpu_custom_call.1} parent=1 // pred_check_branch
      %88 = sbr.rel (0) target = $region33
    $region32: #{tpu_custom_call.1} parent=1 // pred_region
      _
    $region33: #{tpu_custom_call.1} parent=1 // pred_fallthru
      _
    // Predicated region
    $region34: #{tpu_custom_call.1} parent=1 // pred_check
      _
    $region35: #{tpu_custom_call.1} parent=1 // pred_check_branch
      %90 = sbr.rel (0) target = $region37
    $region36: #{tpu_custom_call.1} parent=1 // pred_region
      %s92 = ssub.s32 8192, 8192
      %93 = vsyncadd [#allocation12], %s92
      %s94 = sshll.u32 [#allocation11], 4
      %s95 = int_to_ptr.vmem [resolvable:$true] %s94
      %100 = dma.hbm_to_vmem [thread:$0]  %s8, 8192, %s95, [#allocation12], 512, 512, 32
    $region37: #{tpu_custom_call.1} parent=1 // pred_fallthru
      _
    // Predicated region
    $region38: #{tpu_custom_call.1} parent=1 // pred_check
      _
    $region39: #{tpu_custom_call.1} parent=1 // pred_check_branch
      %102 = sbr.rel (0) target = $region41
    $region40: #{tpu_custom_call.1} parent=1 // pred_region
      _
    $region41: #{tpu_custom_call.1} parent=1 // pred_fallthru
      _
    // Predicated region
    $region42: #{tpu_custom_call.1} parent=1 // pred_check
      _
    $region43: #{tpu_custom_call.1} parent=1 // pred_check_branch
      %104 = sbr.rel (0) target = $region45
    $region44: #{tpu_custom_call.1} parent=1 // pred_region
      %105 = dma.done [#allocation3], 1024
    $region45: #{tpu_custom_call.1} parent=1 // pred_fallthru
      _
    // Predicated region
    $region46: #{tpu_custom_call.1} parent=1 // pred_check
      _
    $region47: #{tpu_custom_call.1} parent=1 // pred_check_branch
      %107 = sbr.rel (0) target = $region49
    $region48: #{tpu_custom_call.1} parent=1 // pred_region
      %108 = dma.done [#allocation6], 256
    $region49: #{tpu_custom_call.1} parent=1 // pred_fallthru
      _
    // Predicated region
    $region50: #{tpu_custom_call.1} parent=1 // pred_check
      _
    $region51: #{tpu_custom_call.1} parent=1 // pred_check_branch
      %110 = sbr.rel (0) target = $region53
    $region52: #{tpu_custom_call.1} parent=1 // pred_region
      %111 = dma.done [#allocation6], 8192
    $region53: #{tpu_custom_call.1} parent=1 // pred_fallthru
      _
    // Predicated region
    $region54: #{tpu_custom_call.1} parent=1 // pred_check
      _
    $region55: #{tpu_custom_call.1} parent=1 // pred_check_branch
      %113 = sbr.rel (0) target = $region57
    $region56: #{tpu_custom_call.1} parent=1 // pred_region
      %114 = dma.done [#allocation9], 2048
    $region57: #{tpu_custom_call.1} parent=1 // pred_fallthru
      _
    // Predicated region
    $region58: #{tpu_custom_call.1} parent=1 // pred_check
      _
    $region59: #{tpu_custom_call.1} parent=1 // pred_check_branch
      %116 = sbr.rel (0) target = $region61
    $region60: #{tpu_custom_call.1} parent=1 // pred_region
      %117 = dma.done [#allocation9], 1024
    $region61: #{tpu_custom_call.1} parent=1 // pred_fallthru
      _
    // Predicated region
    $region62: #{tpu_custom_call.1} parent=1 // pred_check
      _
    $region63: #{tpu_custom_call.1} parent=1 // pred_check_branch
      %119 = sbr.rel (0) target = $region65
    $region64: #{tpu_custom_call.1} parent=1 // pred_region
      %120 = dma.done [#allocation12], 8192
    $region65: #{tpu_custom_call.1} parent=1 // pred_fallthru
      _
    %v123 = vld [vmem:[#allocation2] sm:$0xff]
    %v124 = vld [vmem:[#allocation2 + $0x8] sm:$0xff]
    %v125 = vld [vmem:[#allocation2 + $0x10] sm:$0xff]
    %v126 = vld [vmem:[#allocation2 + $0x18] sm:$0xff]
    %v127 = vld [vmem:[#allocation2 + $0x20] sm:$0xff]
    %v128 = vld [vmem:[#allocation2 + $0x28] sm:$0xff]
    %v129 = vld [vmem:[#allocation2 + $0x30] sm:$0xff]
    %v130 = vld [vmem:[#allocation2 + $0x38] sm:$0xff]
    %v131 = vld [vmem:[#allocation7] sm:$0xf]
    %v132 = vld [vmem:[#allocation7 + $0x4] sm:$0xf]
    %v133 = vld [vmem:[#allocation7 + $0x8] sm:$0xf]
    %v134 = vld [vmem:[#allocation7 + $0xc] sm:$0xf]
    %v135 = vld [vmem:[#allocation7 + $0x10] sm:$0xf]
    %v136 = vld [vmem:[#allocation7 + $0x14] sm:$0xf]
    %v137 = vld [vmem:[#allocation7 + $0x18] sm:$0xf]
    %v138 = vld [vmem:[#allocation7 + $0x1c] sm:$0xf]
    %v139 = vld [vmem:[#allocation7 + $0x20] sm:$0xf]
    %v140 = vld [vmem:[#allocation7 + $0x24] sm:$0xf]
    %v141 = vld [vmem:[#allocation7 + $0x28] sm:$0xf]
    %v142 = vld [vmem:[#allocation7 + $0x2c] sm:$0xf]
    %v143 = vld [vmem:[#allocation7 + $0x30] sm:$0xf]
    %v144 = vld [vmem:[#allocation7 + $0x34] sm:$0xf]
    %v145 = vld [vmem:[#allocation7 + $0x38] sm:$0xf]
    %v146 = vld [vmem:[#allocation7 + $0x3c] sm:$0xf]
    %v147 = vld [vmem:[#allocation7 + $0x40] sm:$0xf]
    %v148 = vld [vmem:[#allocation7 + $0x44] sm:$0xf]
    %v149 = vld [vmem:[#allocation7 + $0x48] sm:$0xf]
    %v150 = vld [vmem:[#allocation7 + $0x4c] sm:$0xf]
    %v151 = vld [vmem:[#allocation7 + $0x50] sm:$0xf]
    %v152 = vld [vmem:[#allocation7 + $0x54] sm:$0xf]
    %v153 = vld [vmem:[#allocation7 + $0x58] sm:$0xf]
    %v154 = vld [vmem:[#allocation7 + $0x5c] sm:$0xf]
    %v155 = vld [vmem:[#allocation7 + $0x60] sm:$0xf]
    %v156 = vld [vmem:[#allocation7 + $0x64] sm:$0xf]
    %v157 = vld [vmem:[#allocation7 + $0x68] sm:$0xf]
    %v158 = vld [vmem:[#allocation7 + $0x6c] sm:$0xf]
    %v159 = vld [vmem:[#allocation7 + $0x70] sm:$0xf]
    %v160 = vld [vmem:[#allocation7 + $0x74] sm:$0xf]
    %v161 = vld [vmem:[#allocation7 + $0x78] sm:$0xf]
    %v162 = vld [vmem:[#allocation7 + $0x7c] sm:$0xf]
    %v163 = vld [vmem:[#allocation7 + $0x80] sm:$0xf]
    %v164 = vld [vmem:[#allocation7 + $0x84] sm:$0xf]
    %v165 = vld [vmem:[#allocation7 + $0x88] sm:$0xf]
    %v166 = vld [vmem:[#allocation7 + $0x8c] sm:$0xf]
    %v167 = vld [vmem:[#allocation7 + $0x90] sm:$0xf]
    %v168 = vld [vmem:[#allocation7 + $0x94] sm:$0xf]
    %v169 = vld [vmem:[#allocation7 + $0x98] sm:$0xf]
    %v170 = vld [vmem:[#allocation7 + $0x9c] sm:$0xf]
    %v171 = vld [vmem:[#allocation7 + $0xa0] sm:$0xf]
    %v172 = vld [vmem:[#allocation7 + $0xa4] sm:$0xf]
    %v173 = vld [vmem:[#allocation7 + $0xa8] sm:$0xf]
    %v174 = vld [vmem:[#allocation7 + $0xac] sm:$0xf]
    %v175 = vld [vmem:[#allocation7 + $0xb0] sm:$0xf]
    %v176 = vld [vmem:[#allocation7 + $0xb4] sm:$0xf]
    %v177 = vld [vmem:[#allocation7 + $0xb8] sm:$0xf]
    %v178 = vld [vmem:[#allocation7 + $0xbc] sm:$0xf]
    %v179 = vld [vmem:[#allocation7 + $0xc0] sm:$0xf]
    %v180 = vld [vmem:[#allocation7 + $0xc4] sm:$0xf]
    %v181 = vld [vmem:[#allocation7 + $0xc8] sm:$0xf]
    %v182 = vld [vmem:[#allocation7 + $0xcc] sm:$0xf]
    %v183 = vld [vmem:[#allocation7 + $0xd0] sm:$0xf]
    %v184 = vld [vmem:[#allocation7 + $0xd4] sm:$0xf]
    %v185 = vld [vmem:[#allocation7 + $0xd8] sm:$0xf]
    %v186 = vld [vmem:[#allocation7 + $0xdc] sm:$0xf]
    %v187 = vld [vmem:[#allocation7 + $0xe0] sm:$0xf]
    %v188 = vld [vmem:[#allocation7 + $0xe4] sm:$0xf]
    %v189 = vld [vmem:[#allocation7 + $0xe8] sm:$0xf]
    %v190 = vld [vmem:[#allocation7 + $0xec] sm:$0xf]
    %v191 = vld [vmem:[#allocation7 + $0xf0] sm:$0xf]
    %v192 = vld [vmem:[#allocation7 + $0xf4] sm:$0xf]
    %v193 = vld [vmem:[#allocation7 + $0xf8] sm:$0xf]
    %v194 = vld [vmem:[#allocation7 + $0xfc] sm:$0xf]
    %v195 = vld [vmem:[#allocation7 + $0x100] sm:$0xf]
    %v196 = vld [vmem:[#allocation7 + $0x104] sm:$0xf]
    %v197 = vld [vmem:[#allocation7 + $0x108] sm:$0xf]
    %v198 = vld [vmem:[#allocation7 + $0x10c] sm:$0xf]
    %v199 = vld [vmem:[#allocation7 + $0x110] sm:$0xf]
    %v200 = vld [vmem:[#allocation7 + $0x114] sm:$0xf]
    %v201 = vld [vmem:[#allocation7 + $0x118] sm:$0xf]
    %v202 = vld [vmem:[#allocation7 + $0x11c] sm:$0xf]
    %v203 = vld [vmem:[#allocation7 + $0x120] sm:$0xf]
    %v204 = vld [vmem:[#allocation7 + $0x124] sm:$0xf]
    %v205 = vld [vmem:[#allocation7 + $0x128] sm:$0xf]
    %v206 = vld [vmem:[#allocation7 + $0x12c] sm:$0xf]
    %v207 = vld [vmem:[#allocation7 + $0x130] sm:$0xf]
    %v208 = vld [vmem:[#allocation7 + $0x134] sm:$0xf]
    %v209 = vld [vmem:[#allocation7 + $0x138] sm:$0xf]
    %v210 = vld [vmem:[#allocation7 + $0x13c] sm:$0xf]
    %v211 = vld [vmem:[#allocation7 + $0x140] sm:$0xf]
    %v212 = vld [vmem:[#allocation7 + $0x144] sm:$0xf]
    %v213 = vld [vmem:[#allocation7 + $0x148] sm:$0xf]
    %v214 = vld [vmem:[#allocation7 + $0x14c] sm:$0xf]
    %v215 = vld [vmem:[#allocation7 + $0x150] sm:$0xf]
    %v216 = vld [vmem:[#allocation7 + $0x154] sm:$0xf]
    %v217 = vld [vmem:[#allocation7 + $0x158] sm:$0xf]
    %v218 = vld [vmem:[#allocation7 + $0x15c] sm:$0xf]
    %v219 = vld [vmem:[#allocation7 + $0x160] sm:$0xf]
    %v220 = vld [vmem:[#allocation7 + $0x164] sm:$0xf]
    %v221 = vld [vmem:[#allocation7 + $0x168] sm:$0xf]
    %v222 = vld [vmem:[#allocation7 + $0x16c] sm:$0xf]
    %v223 = vld [vmem:[#allocation7 + $0x170] sm:$0xf]
    %v224 = vld [vmem:[#allocation7 + $0x174] sm:$0xf]
    %v225 = vld [vmem:[#allocation7 + $0x178] sm:$0xf]
    %v226 = vld [vmem:[#allocation7 + $0x17c] sm:$0xf]
    %v227 = vld [vmem:[#allocation7 + $0x180] sm:$0xf]
    %v228 = vld [vmem:[#allocation7 + $0x184] sm:$0xf]
    %v229 = vld [vmem:[#allocation7 + $0x188] sm:$0xf]
    %v230 = vld [vmem:[#allocation7 + $0x18c] sm:$0xf]
    %v231 = vld [vmem:[#allocation7 + $0x190] sm:$0xf]
    %v232 = vld [vmem:[#allocation7 + $0x194] sm:$0xf]
    %v233 = vld [vmem:[#allocation7 + $0x198] sm:$0xf]
    %v234 = vld [vmem:[#allocation7 + $0x19c] sm:$0xf]
    %v235 = vld [vmem:[#allocation7 + $0x1a0] sm:$0xf]
    %v236 = vld [vmem:[#allocation7 + $0x1a4] sm:$0xf]
    %v237 = vld [vmem:[#allocation7 + $0x1a8] sm:$0xf]
    %v238 = vld [vmem:[#allocation7 + $0x1ac] sm:$0xf]
    %v239 = vld [vmem:[#allocation7 + $0x1b0] sm:$0xf]
    %v240 = vld [vmem:[#allocation7 + $0x1b4] sm:$0xf]
    %v241 = vld [vmem:[#allocation7 + $0x1b8] sm:$0xf]
    %v242 = vld [vmem:[#allocation7 + $0x1bc] sm:$0xf]
    %v243 = vld [vmem:[#allocation7 + $0x1c0] sm:$0xf]
    %v244 = vld [vmem:[#allocation7 + $0x1c4] sm:$0xf]
    %v245 = vld [vmem:[#allocation7 + $0x1c8] sm:$0xf]
    %v246 = vld [vmem:[#allocation7 + $0x1cc] sm:$0xf]
    %v247 = vld [vmem:[#allocation7 + $0x1d0] sm:$0xf]
    %v248 = vld [vmem:[#allocation7 + $0x1d4] sm:$0xf]
    %v249 = vld [vmem:[#allocation7 + $0x1d8] sm:$0xf]
    %v250 = vld [vmem:[#allocation7 + $0x1dc] sm:$0xf]
    %v251 = vld [vmem:[#allocation7 + $0x1e0] sm:$0xf]
    %v252 = vld [vmem:[#allocation7 + $0x1e4] sm:$0xf]
    %v253 = vld [vmem:[#allocation7 + $0x1e8] sm:$0xf]
    %v254 = vld [vmem:[#allocation7 + $0x1ec] sm:$0xf]
    %v255 = vld [vmem:[#allocation7 + $0x1f0] sm:$0xf]
    %v256 = vld [vmem:[#allocation7 + $0x1f4] sm:$0xf]
    %v257 = vld [vmem:[#allocation7 + $0x1f8] sm:$0xf]
    %v258 = vld [vmem:[#allocation7 + $0x1fc] sm:$0xf]
    %v259 = vld [vmem:[%s3] sm:$0x1]
    %v261 = vlaneseq
    %v262 = vshrl.u32 %v261, 7
    %v263 = vsub.s32 0, %v262
    %v264 = vrot.slane %v259, %v263
    %v274 = vunpack.c.l.b16 %v123
    %v275 = vunpack.c.h.b16 %v123
    %v276 = vunpack.c.l.b16 %v124
    %v277 = vunpack.c.h.b16 %v124
    %v278 = vunpack.c.l.b16 %v125
    %v279 = vunpack.c.h.b16 %v125
    %v280 = vunpack.c.l.b16 %v126
    %v281 = vunpack.c.h.b16 %v126
    %v282 = vunpack.c.l.b16 %v127
    %v283 = vunpack.c.h.b16 %v127
    %v284 = vunpack.c.l.b16 %v128
    %v285 = vunpack.c.h.b16 %v128
    %v286 = vunpack.c.l.b16 %v129
    %v287 = vunpack.c.h.b16 %v129
    %v288 = vunpack.c.l.b16 %v130
    %v289 = vunpack.c.h.b16 %v130
    %v290 = vpack.c.b16 %v282, %v274
    %v291 = vpack.c.b16 %v283, %v275
    %v292 = vpack.c.b16 %v284, %v276
    %v293 = vpack.c.b16 %v285, %v277
    %v294 = vpack.c.b16 %v286, %v278
    %v295 = vpack.c.b16 %v287, %v279
    %v296 = vpack.c.b16 %v288, %v280
    %v297 = vpack.c.b16 %v289, %v281
    %v434 = vunpack.c.l.b16 %v131
    %v435 = vunpack.c.l.b16 %v132
    %v436 = vunpack.c.l.b16 %v133
    %v437 = vunpack.c.l.b16 %v134
    %v438 = vunpack.c.l.b16 %v135
    %v439 = vunpack.c.l.b16 %v136
    %v440 = vunpack.c.l.b16 %v137
    %v441 = vunpack.c.l.b16 %v138
    %v442 = vunpack.c.l.b16 %v139
    %v443 = vunpack.c.l.b16 %v140
    %v444 = vunpack.c.l.b16 %v141
    %v445 = vunpack.c.l.b16 %v142
    %v446 = vunpack.c.l.b16 %v143
    %v447 = vunpack.c.l.b16 %v144
    %v448 = vunpack.c.l.b16 %v145
    %v449 = vunpack.c.l.b16 %v146
    %v450 = vunpack.c.l.b16 %v147
    %v451 = vunpack.c.l.b16 %v148
    %v452 = vunpack.c.l.b16 %v149
    %v453 = vunpack.c.l.b16 %v150
    %v454 = vunpack.c.l.b16 %v151
    %v455 = vunpack.c.l.b16 %v152
    %v456 = vunpack.c.l.b16 %v153
    %v457 = vunpack.c.l.b16 %v154
    %v458 = vunpack.c.l.b16 %v155
    %v459 = vunpack.c.l.b16 %v156
    %v460 = vunpack.c.l.b16 %v157
    %v461 = vunpack.c.l.b16 %v158
    %v462 = vunpack.c.l.b16 %v159
    %v463 = vunpack.c.l.b16 %v160
    %v464 = vunpack.c.l.b16 %v161
    %v465 = vunpack.c.l.b16 %v162
    %v466 = vunpack.c.l.b16 %v163
    %v467 = vunpack.c.l.b16 %v164
    %v468 = vunpack.c.l.b16 %v165
    %v469 = vunpack.c.l.b16 %v166
    %v470 = vunpack.c.l.b16 %v167
    %v471 = vunpack.c.l.b16 %v168
    %v472 = vunpack.c.l.b16 %v169
    %v473 = vunpack.c.l.b16 %v170
    %v474 = vunpack.c.l.b16 %v171
    %v475 = vunpack.c.l.b16 %v172
    %v476 = vunpack.c.l.b16 %v173
    %v477 = vunpack.c.l.b16 %v174
    %v478 = vunpack.c.l.b16 %v175
    %v479 = vunpack.c.l.b16 %v176
    %v480 = vunpack.c.l.b16 %v177
    %v481 = vunpack.c.l.b16 %v178
    %v482 = vunpack.c.l.b16 %v179
    %v483 = vunpack.c.l.b16 %v180
    %v484 = vunpack.c.l.b16 %v181
    %v485 = vunpack.c.l.b16 %v182
    %v486 = vunpack.c.l.b16 %v183
    %v487 = vunpack.c.l.b16 %v184
    %v488 = vunpack.c.l.b16 %v185
    %v489 = vunpack.c.l.b16 %v186
    %v490 = vunpack.c.l.b16 %v187
    %v491 = vunpack.c.l.b16 %v188
    %v492 = vunpack.c.l.b16 %v189
    %v493 = vunpack.c.l.b16 %v190
    %v494 = vunpack.c.l.b16 %v191
    %v495 = vunpack.c.l.b16 %v192
    %v496 = vunpack.c.l.b16 %v193
    %v497 = vunpack.c.l.b16 %v194
    %v498 = vunpack.c.l.b16 %v195
    %v499 = vunpack.c.l.b16 %v196
    %v500 = vunpack.c.l.b16 %v197
    %v501 = vunpack.c.l.b16 %v198
    %v502 = vunpack.c.l.b16 %v199
    %v503 = vunpack.c.l.b16 %v200
    %v504 = vunpack.c.l.b16 %v201
    %v505 = vunpack.c.l.b16 %v202
    %v506 = vunpack.c.l.b16 %v203
    %v507 = vunpack.c.l.b16 %v204
    %v508 = vunpack.c.l.b16 %v205
    %v509 = vunpack.c.l.b16 %v206
    %v510 = vunpack.c.l.b16 %v207
    %v511 = vunpack.c.l.b16 %v208
    %v512 = vunpack.c.l.b16 %v209
    %v513 = vunpack.c.l.b16 %v210
    %v514 = vunpack.c.l.b16 %v211
    %v515 = vunpack.c.l.b16 %v212
    %v516 = vunpack.c.l.b16 %v213
    %v517 = vunpack.c.l.b16 %v214
    %v518 = vunpack.c.l.b16 %v215
    %v519 = vunpack.c.l.b16 %v216
    %v520 = vunpack.c.l.b16 %v217
    %v521 = vunpack.c.l.b16 %v218
    %v522 = vunpack.c.l.b16 %v219
    %v523 = vunpack.c.l.b16 %v220
    %v524 = vunpack.c.l.b16 %v221
    %v525 = vunpack.c.l.b16 %v222
    %v526 = vunpack.c.l.b16 %v223
    %v527 = vunpack.c.l.b16 %v224
    %v528 = vunpack.c.l.b16 %v225
    %v529 = vunpack.c.l.b16 %v226
    %v530 = vunpack.c.l.b16 %v227
    %v531 = vunpack.c.l.b16 %v228
    %v532 = vunpack.c.l.b16 %v229
    %v533 = vunpack.c.l.b16 %v230
    %v534 = vunpack.c.l.b16 %v231
    %v535 = vunpack.c.l.b16 %v232
    %v536 = vunpack.c.l.b16 %v233
    %v537 = vunpack.c.l.b16 %v234
    %v538 = vunpack.c.l.b16 %v235
    %v539 = vunpack.c.l.b16 %v236
    %v540 = vunpack.c.l.b16 %v237
    %v541 = vunpack.c.l.b16 %v238
    %v542 = vunpack.c.l.b16 %v239
    %v543 = vunpack.c.l.b16 %v240
    %v544 = vunpack.c.l.b16 %v241
    %v545 = vunpack.c.l.b16 %v242
    %v546 = vunpack.c.l.b16 %v243
    %v547 = vunpack.c.l.b16 %v244
    %v548 = vunpack.c.l.b16 %v245
    %v549 = vunpack.c.l.b16 %v246
    %v550 = vunpack.c.l.b16 %v247
    %v551 = vunpack.c.l.b16 %v248
    %v552 = vunpack.c.l.b16 %v249
    %v553 = vunpack.c.l.b16 %v250
    %v554 = vunpack.c.l.b16 %v251
    %v555 = vunpack.c.l.b16 %v252
    %v556 = vunpack.c.l.b16 %v253
    %v557 = vunpack.c.l.b16 %v254
    %v558 = vunpack.c.l.b16 %v255
    %v559 = vunpack.c.l.b16 %v256
    %v560 = vunpack.c.l.b16 %v257
    %v561 = vunpack.c.l.b16 %v258
    %v562 = vpack.c.b16 %v435, %v434
    %v563 = vpack.c.b16 %v437, %v436
    %v564 = vpack.c.b16 %v439, %v438
    %v565 = vpack.c.b16 %v441, %v440
    %v566 = vpack.c.b16 %v443, %v442
    %v567 = vpack.c.b16 %v445, %v444
    %v568 = vpack.c.b16 %v447, %v446
    %v569 = vpack.c.b16 %v449, %v448
    %v570 = vpack.c.b16 %v451, %v450
    %v571 = vpack.c.b16 %v453, %v452
    %v572 = vpack.c.b16 %v455, %v454
    %v573 = vpack.c.b16 %v457, %v456
    %v574 = vpack.c.b16 %v459, %v458
    %v575 = vpack.c.b16 %v461, %v460
    %v576 = vpack.c.b16 %v463, %v462
    %v577 = vpack.c.b16 %v465, %v464
    %v578 = vpack.c.b16 %v467, %v466
    %v579 = vpack.c.b16 %v469, %v468
    %v580 = vpack.c.b16 %v471, %v470
    %v581 = vpack.c.b16 %v473, %v472
    %v582 = vpack.c.b16 %v475, %v474
    %v583 = vpack.c.b16 %v477, %v476
    %v584 = vpack.c.b16 %v479, %v478
    %v585 = vpack.c.b16 %v481, %v480
    %v586 = vpack.c.b16 %v483, %v482
    %v587 = vpack.c.b16 %v485, %v484
    %v588 = vpack.c.b16 %v487, %v486
    %v589 = vpack.c.b16 %v489, %v488
    %v590 = vpack.c.b16 %v491, %v490
    %v591 = vpack.c.b16 %v493, %v492
    %v592 = vpack.c.b16 %v495, %v494
    %v593 = vpack.c.b16 %v497, %v496
    %v594 = vpack.c.b16 %v499, %v498
    %v595 = vpack.c.b16 %v501, %v500
    %v596 = vpack.c.b16 %v503, %v502
    %v597 = vpack.c.b16 %v505, %v504
    %v598 = vpack.c.b16 %v507, %v506
    %v599 = vpack.c.b16 %v509, %v508
    %v600 = vpack.c.b16 %v511, %v510
    %v601 = vpack.c.b16 %v513, %v512
    %v602 = vpack.c.b16 %v515, %v514
    %v603 = vpack.c.b16 %v517, %v516
    %v604 = vpack.c.b16 %v519, %v518
    %v605 = vpack.c.b16 %v521, %v520
    %v606 = vpack.c.b16 %v523, %v522
    %v607 = vpack.c.b16 %v525, %v524
    %v608 = vpack.c.b16 %v527, %v526
    %v609 = vpack.c.b16 %v529, %v528
    %v610 = vpack.c.b16 %v531, %v530
    %v611 = vpack.c.b16 %v533, %v532
    %v612 = vpack.c.b16 %v535, %v534
    %v613 = vpack.c.b16 %v537, %v536
    %v614 = vpack.c.b16 %v539, %v538
    %v615 = vpack.c.b16 %v541, %v540
    %v616 = vpack.c.b16 %v543, %v542
    %v617 = vpack.c.b16 %v545, %v544
    %v618 = vpack.c.b16 %v547, %v546
    %v619 = vpack.c.b16 %v549, %v548
    %v620 = vpack.c.b16 %v551, %v550
    %v621 = vpack.c.b16 %v553, %v552
    %v622 = vpack.c.b16 %v555, %v554
    %v623 = vpack.c.b16 %v557, %v556
    %v624 = vpack.c.b16 %v559, %v558
    %v625 = vpack.c.b16 %v561, %v560
    %690 = vmatprep.subr.bf16.mxu0 0
    %691 = vmatpush1.bf16.msra.mxu0 %v569
    %692 = vmatprep.subr.bf16.mxu0 0
    %693 = vmatpush1.bf16.msra.mxu0 %v568
    %694 = vmatprep.subr.bf16.mxu0 0
    %695 = vmatpush1.bf16.msra.mxu0 %v567
    %696 = vmatprep.subr.bf16.mxu0 0
    %697 = vmatpush1.bf16.msra.mxu0 %v566
    %698 = vmatprep.subr.bf16.mxu0 0
    %699 = vmatpush1.bf16.msra.mxu0 %v565
    %700 = vmatprep.subr.bf16.mxu0 0
    %701 = vmatpush1.bf16.msra.mxu0 %v564
    %702 = vmatprep.subr.bf16.mxu0 0
    %703 = vmatpush1.bf16.msra.mxu0 %v563
    %704 = vmatprep.subr.bf16.mxu0 0
    %705 = vmatpush1.bf16.msra.mxu0 %v562
    %706 = vmatprep.subr.bf16.mxu0 0
    %707 = vmatpush2.bf16.msra.mxu0 %v577
    %708 = vmatprep.subr.bf16.mxu0 0
    %709 = vmatpush2.bf16.msra.mxu0 %v576
    %710 = vmatprep.subr.bf16.mxu0 0
    %711 = vmatpush2.bf16.msra.mxu0 %v575
    %712 = vmatprep.subr.bf16.mxu0 0
    %713 = vmatpush2.bf16.msra.mxu0 %v574
    %714 = vmatprep.subr.bf16.mxu0 0
    %715 = vmatpush2.bf16.msra.mxu0 %v573
    %716 = vmatprep.subr.bf16.mxu0 0
    %717 = vmatpush2.bf16.msra.mxu0 %v572
    %718 = vmatprep.subr.bf16.mxu0 0
    %719 = vmatpush2.bf16.msra.mxu0 %v571
    %720 = vmatprep.subr.bf16.mxu0 0
    %721 = vmatpush2.bf16.msra.mxu0 %v570
    %722 = vmatprep.mubr.bf16.mxu0 %v291
    %723 = vmatmul.mubr.bf16.gmra.mxu0 %v290
    %v724 = vpop.f32.mrf.mxu0
    %v725 = vadd.f32 %v264, %v724
    %v726 = vpop.f32.mrf.mxu0
    %v727 = vpop.f32.mrf.mxu0
    %v728 = vadd.f32 %v264, %v727
    %v729 = vpop.f32.mrf.mxu0
    %730 = vdwg.mxu0
    %731 = vmatprep.subr.bf16.mxu0 0
    %732 = vmatpush1.bf16.msra.mxu0 %v585
    %733 = vmatprep.subr.bf16.mxu0 0
    %734 = vmatpush1.bf16.msra.mxu0 %v584
    %735 = vmatprep.subr.bf16.mxu0 0
    %736 = vmatpush1.bf16.msra.mxu0 %v583
    %737 = vmatprep.subr.bf16.mxu0 0
    %738 = vmatpush1.bf16.msra.mxu0 %v582
    %739 = vmatprep.subr.bf16.mxu0 0
    %740 = vmatpush1.bf16.msra.mxu0 %v581
    %741 = vmatprep.subr.bf16.mxu0 0
    %742 = vmatpush1.bf16.msra.mxu0 %v580
    %743 = vmatprep.subr.bf16.mxu0 0
    %744 = vmatpush1.bf16.msra.mxu0 %v579
    %745 = vmatprep.subr.bf16.mxu0 0
    %746 = vmatpush1.bf16.msra.mxu0 %v578
    %747 = vmatprep.subr.bf16.mxu0 0
    %748 = vmatpush2.bf16.msra.mxu0 %v593
    %749 = vmatprep.subr.bf16.mxu0 0
    %750 = vmatpush2.bf16.msra.mxu0 %v592
    %751 = vmatprep.subr.bf16.mxu0 0
    %752 = vmatpush2.bf16.msra.mxu0 %v591
    %753 = vmatprep.subr.bf16.mxu0 0
    %754 = vmatpush2.bf16.msra.mxu0 %v590
    %755 = vmatprep.subr.bf16.mxu0 0
    %756 = vmatpush2.bf16.msra.mxu0 %v589
    %757 = vmatprep.subr.bf16.mxu0 0
    %758 = vmatpush2.bf16.msra.mxu0 %v588
    %759 = vmatprep.subr.bf16.mxu0 0
    %760 = vmatpush2.bf16.msra.mxu0 %v587
    %761 = vmatprep.subr.bf16.mxu0 0
    %762 = vmatpush2.bf16.msra.mxu0 %v586
    %763 = vmatprep.mubr.bf16.mxu0 %v293
    %764 = vmatmul.mubr.bf16.gmra.mxu0 %v292
    %v765 = vpop.f32.mrf.mxu0
    %v766 = vadd.f32 %v725, %v765
    %v767 = vpop.f32.mrf.mxu0
    %v768 = vpop.f32.mrf.mxu0
    %v769 = vadd.f32 %v728, %v768
    %v770 = vpop.f32.mrf.mxu0
    %771 = vdwg.mxu0
    %772 = vmatprep.subr.bf16.mxu0 0
    %773 = vmatpush1.bf16.msra.mxu0 %v601
    %774 = vmatprep.subr.bf16.mxu0 0
    %775 = vmatpush1.bf16.msra.mxu0 %v600
    %776 = vmatprep.subr.bf16.mxu0 0
    %777 = vmatpush1.bf16.msra.mxu0 %v599
    %778 = vmatprep.subr.bf16.mxu0 0
    %779 = vmatpush1.bf16.msra.mxu0 %v598
    %780 = vmatprep.subr.bf16.mxu0 0
    %781 = vmatpush1.bf16.msra.mxu0 %v597
    %782 = vmatprep.subr.bf16.mxu0 0
    %783 = vmatpush1.bf16.msra.mxu0 %v596
    %784 = vmatprep.subr.bf16.mxu0 0
    %785 = vmatpush1.bf16.msra.mxu0 %v595
    %786 = vmatprep.subr.bf16.mxu0 0
    %787 = vmatpush1.bf16.msra.mxu0 %v594
    %788 = vmatprep.subr.bf16.mxu0 0
    %789 = vmatpush2.bf16.msra.mxu0 %v609
    %790 = vmatprep.subr.bf16.mxu0 0
    %791 = vmatpush2.bf16.msra.mxu0 %v608
    %792 = vmatprep.subr.bf16.mxu0 0
    %793 = vmatpush2.bf16.msra.mxu0 %v607
    %794 = vmatprep.subr.bf16.mxu0 0
    %795 = vmatpush2.bf16.msra.mxu0 %v606
    %796 = vmatprep.subr.bf16.mxu0 0
    %797 = vmatpush2.bf16.msra.mxu0 %v605
    %798 = vmatprep.subr.bf16.mxu0 0
    %799 = vmatpush2.bf16.msra.mxu0 %v604
    %800 = vmatprep.subr.bf16.mxu0 0
    %801 = vmatpush2.bf16.msra.mxu0 %v603
    %802 = vmatprep.subr.bf16.mxu0 0
    %803 = vmatpush2.bf16.msra.mxu0 %v602
    %804 = vmatprep.mubr.bf16.mxu0 %v295
    %805 = vmatmul.mubr.bf16.gmra.mxu0 %v294
    %v806 = vpop.f32.mrf.mxu0
    %v807 = vadd.f32 %v766, %v806
    %v808 = vpop.f32.mrf.mxu0
    %v809 = vpop.f32.mrf.mxu0
    %v810 = vadd.f32 %v769, %v809
    %v811 = vpop.f32.mrf.mxu0
    %812 = vdwg.mxu0
    %813 = vmatprep.subr.bf16.mxu0 0
    %814 = vmatpush1.bf16.msra.mxu0 %v617
    %815 = vmatprep.subr.bf16.mxu0 0
    %816 = vmatpush1.bf16.msra.mxu0 %v616
    %817 = vmatprep.subr.bf16.mxu0 0
    %818 = vmatpush1.bf16.msra.mxu0 %v615
    %819 = vmatprep.subr.bf16.mxu0 0
    %820 = vmatpush1.bf16.msra.mxu0 %v614
    %821 = vmatprep.subr.bf16.mxu0 0
    %822 = vmatpush1.bf16.msra.mxu0 %v613
    %823 = vmatprep.subr.bf16.mxu0 0
    %824 = vmatpush1.bf16.msra.mxu0 %v612
    %825 = vmatprep.subr.bf16.mxu0 0
    %826 = vmatpush1.bf16.msra.mxu0 %v611
    %827 = vmatprep.subr.bf16.mxu0 0
    %828 = vmatpush1.bf16.msra.mxu0 %v610
    %829 = vmatprep.subr.bf16.mxu0 0
    %830 = vmatpush2.bf16.msra.mxu0 %v625
    %831 = vmatprep.subr.bf16.mxu0 0
    %832 = vmatpush2.bf16.msra.mxu0 %v624
    %833 = vmatprep.subr.bf16.mxu0 0
    %834 = vmatpush2.bf16.msra.mxu0 %v623
    %835 = vmatprep.subr.bf16.mxu0 0
    %836 = vmatpush2.bf16.msra.mxu0 %v622
    %837 = vmatprep.subr.bf16.mxu0 0
    %838 = vmatpush2.bf16.msra.mxu0 %v621
    %839 = vmatprep.subr.bf16.mxu0 0
    %840 = vmatpush2.bf16.msra.mxu0 %v620
    %841 = vmatprep.subr.bf16.mxu0 0
    %842 = vmatpush2.bf16.msra.mxu0 %v619
    %843 = vmatprep.subr.bf16.mxu0 0
    %844 = vmatpush2.bf16.msra.mxu0 %v618
    %845 = vmatprep.mubr.bf16.mxu0 %v297
    %846 = vmatmul.mubr.bf16.gmra.mxu0 %v296
    %v847 = vpop.f32.mrf.mxu0
    %v848 = vadd.f32 %v807, %v847
    %v849 = vpop.f32.mrf.mxu0
    %v850 = vpop.f32.mrf.mxu0
    %v851 = vadd.f32 %v810, %v850
    %v852 = vpop.f32.mrf.mxu0
    %853 = vdwg.mxu0
    %v854 = vmax.f32 %v848, 0.0
    %v855 = vmax.f32 %v851, 0.0
    %v856 = vpack.c.bf16 %v855, %v854
    %v857 = vld [vmem:[#allocation8] sm:$0xff]
    %v858 = vld [vmem:[#allocation8 + $0x8] sm:$0xff]
    %v859 = vld [vmem:[#allocation8 + $0x10] sm:$0xff]
    %v860 = vld [vmem:[#allocation8 + $0x18] sm:$0xff]
    %v861 = vld [vmem:[#allocation8 + $0x20] sm:$0xff]
    %v862 = vld [vmem:[#allocation8 + $0x28] sm:$0xff]
    %v863 = vld [vmem:[#allocation8 + $0x30] sm:$0xff]
    %v864 = vld [vmem:[#allocation8 + $0x38] sm:$0xff]
    %v865 = vld [vmem:[#allocation8 + $0x40] sm:$0xff]
    %v866 = vld [vmem:[#allocation8 + $0x48] sm:$0xff]
    %v867 = vld [vmem:[#allocation8 + $0x50] sm:$0xff]
    %v868 = vld [vmem:[#allocation8 + $0x58] sm:$0xff]
    %v869 = vld [vmem:[#allocation8 + $0x60] sm:$0xff]
    %v870 = vld [vmem:[#allocation8 + $0x68] sm:$0xff]
    %v871 = vld [vmem:[#allocation8 + $0x70] sm:$0xff]
    %v872 = vld [vmem:[#allocation8 + $0x78] sm:$0xff]
    %v873 = vld [vmem:[%s5] sm:$0x3]
    %v875 = vlaneseq
    %v876 = vshrl.u32 %v875, 7
    %v877 = vsub.s32 0, %v876
    %v878 = vrot.slane %v873, %v877
    %v879 = vlaneseq
    %v880 = vshrl.u32 %v879, 7
    %v881 = vsub.s32 1, %v880
    %v882 = vrot.slane %v873, %v881
    %v901 = vunpack.c.l.b16 %v857
    %v902 = vunpack.c.h.b16 %v857
    %v903 = vunpack.c.l.b16 %v858
    %v904 = vunpack.c.h.b16 %v858
    %v905 = vunpack.c.l.b16 %v859
    %v906 = vunpack.c.h.b16 %v859
    %v907 = vunpack.c.l.b16 %v860
    %v908 = vunpack.c.h.b16 %v860
    %v909 = vunpack.c.l.b16 %v861
    %v910 = vunpack.c.h.b16 %v861
    %v911 = vunpack.c.l.b16 %v862
    %v912 = vunpack.c.h.b16 %v862
    %v913 = vunpack.c.l.b16 %v863
    %v914 = vunpack.c.h.b16 %v863
    %v915 = vunpack.c.l.b16 %v864
    %v916 = vunpack.c.h.b16 %v864
    %v917 = vunpack.c.l.b16 %v865
    %v918 = vunpack.c.h.b16 %v865
    %v919 = vunpack.c.l.b16 %v866
    %v920 = vunpack.c.h.b16 %v866
    %v921 = vunpack.c.l.b16 %v867
    %v922 = vunpack.c.h.b16 %v867
    %v923 = vunpack.c.l.b16 %v868
    %v924 = vunpack.c.h.b16 %v868
    %v925 = vunpack.c.l.b16 %v869
    %v926 = vunpack.c.h.b16 %v869
    %v927 = vunpack.c.l.b16 %v870
    %v928 = vunpack.c.h.b16 %v870
    %v929 = vunpack.c.l.b16 %v871
    %v930 = vunpack.c.h.b16 %v871
    %v931 = vunpack.c.l.b16 %v872
    %v932 = vunpack.c.h.b16 %v872
    %v933 = vpack.c.b16 %v903, %v901
    %v934 = vpack.c.b16 %v904, %v902
    %v935 = vpack.c.b16 %v907, %v905
    %v936 = vpack.c.b16 %v908, %v906
    %v937 = vpack.c.b16 %v911, %v909
    %v938 = vpack.c.b16 %v912, %v910
    %v939 = vpack.c.b16 %v915, %v913
    %v940 = vpack.c.b16 %v916, %v914
    %v941 = vpack.c.b16 %v919, %v917
    %v942 = vpack.c.b16 %v920, %v918
    %v943 = vpack.c.b16 %v923, %v921
    %v944 = vpack.c.b16 %v924, %v922
    %v945 = vpack.c.b16 %v927, %v925
    %v946 = vpack.c.b16 %v928, %v926
    %v947 = vpack.c.b16 %v931, %v929
    %v948 = vpack.c.b16 %v932, %v930
    %965 = vmatprep.subr.bf16.mxu0 %v948
    %966 = vmatpush1.bf16.msra.mxu0 %v947
    %967 = vmatprep.subr.bf16.mxu0 %v946
    %968 = vmatpush1.bf16.msra.mxu0 %v945
    %969 = vmatprep.subr.bf16.mxu0 %v944
    %970 = vmatpush1.bf16.msra.mxu0 %v943
    %971 = vmatprep.subr.bf16.mxu0 %v942
    %972 = vmatpush1.bf16.msra.mxu0 %v941
    %973 = vmatprep.subr.bf16.mxu0 %v940
    %974 = vmatpush1.bf16.msra.mxu0 %v939
    %975 = vmatprep.subr.bf16.mxu0 %v938
    %976 = vmatpush1.bf16.msra.mxu0 %v937
    %977 = vmatprep.subr.bf16.mxu0 %v936
    %978 = vmatpush1.bf16.msra.mxu0 %v935
    %979 = vmatprep.subr.bf16.mxu0 %v934
    %980 = vmatpush1.bf16.msra.mxu0 %v933
    %981 = vmatprep.subr.bf16.mxu0 0
    %982 = vmatpush2.bf16.msra.mxu0 0
    %983 = vmatprep.subr.bf16.mxu0 0
    %984 = vmatpush2.bf16.msra.mxu0 0
    %985 = vmatprep.subr.bf16.mxu0 0
    %986 = vmatpush2.bf16.msra.mxu0 0
    %987 = vmatprep.subr.bf16.mxu0 0
    %988 = vmatpush2.bf16.msra.mxu0 0
    %989 = vmatprep.subr.bf16.mxu0 0
    %990 = vmatpush2.bf16.msra.mxu0 0
    %991 = vmatprep.subr.bf16.mxu0 0
    %992 = vmatpush2.bf16.msra.mxu0 0
    %993 = vmatprep.subr.bf16.mxu0 0
    %994 = vmatpush2.bf16.msra.mxu0 0
    %995 = vmatprep.subr.bf16.mxu0 0
    %996 = vmatpush2.bf16.msra.mxu0 0
    %997 = vmatprep.mubr.bf16.mxu0 0
    %998 = vmatmul.mubr.bf16.gmra.mxu0 %v856
    %v999 = vpop.f32.mrf.mxu0
    %v1000 = vadd.f32 %v878, %v999
    %v1001 = vpop.f32.mrf.mxu0
    %v1002 = vadd.f32 %v882, %v1001
    %v1003 = vpop.f32.mrf.mxu0
    %v1004 = vadd.f32 %v878, %v1003
    %v1005 = vpop.f32.mrf.mxu0
    %v1006 = vadd.f32 %v882, %v1005
    %1007 = vdwg.mxu0
    %v1008 = vmul.f32 %v1002, 0.5
    %v1009 = vmul.f32 %v1006, 0.5
    %v1010 = vmul.f32 %v1008, 1.442695
    %v1011 = vpow.pop %v1010
    %v1012 = vmul.f32 %v1009, 1.442695
    %v1013 = vpow.pop %v1012
    %v1014 = vld [vmem:[#allocation5] sm:$0xff]
    %v1015 = vld [vmem:[#allocation5 + $0x8] sm:$0xff]
    %v1016 = vmul.f32 %v1011, %v1014
    %v1017 = vmul.f32 %v1013, %v1015
    %v1018 = vadd.f32 %v1000, %v1016
    %v1019 = vadd.f32 %v1004, %v1017
    %v1020 = vpack.c.bf16 %v1019, %v1018
    %v1021 = vld [vmem:[#allocation10] sm:$0xf]
    %v1022 = vld [vmem:[#allocation10 + $0x4] sm:$0xf]
    %v1023 = vld [vmem:[#allocation10 + $0x8] sm:$0xf]
    %v1024 = vld [vmem:[#allocation10 + $0xc] sm:$0xf]
    %v1025 = vld [vmem:[#allocation10 + $0x10] sm:$0xf]
    %v1026 = vld [vmem:[#allocation10 + $0x14] sm:$0xf]
    %v1027 = vld [vmem:[#allocation10 + $0x18] sm:$0xf]
    %v1028 = vld [vmem:[#allocation10 + $0x1c] sm:$0xf]
    %v1029 = vld [vmem:[#allocation10 + $0x20] sm:$0xf]
    %v1030 = vld [vmem:[#allocation10 + $0x24] sm:$0xf]
    %v1031 = vld [vmem:[#allocation10 + $0x28] sm:$0xf]
    %v1032 = vld [vmem:[#allocation10 + $0x2c] sm:$0xf]
    %v1033 = vld [vmem:[#allocation10 + $0x30] sm:$0xf]
    %v1034 = vld [vmem:[#allocation10 + $0x34] sm:$0xf]
    %v1035 = vld [vmem:[#allocation10 + $0x38] sm:$0xf]
    %v1036 = vld [vmem:[#allocation10 + $0x3c] sm:$0xf]
    %v1037 = vld [vmem:[%s7] sm:$0x1]
    %v1039 = vlaneseq
    %v1040 = vshrl.u32 %v1039, 7
    %v1041 = vsub.s32 0, %v1040
    %v1042 = vrot.slane %v1037, %v1041
    %v1060 = vunpack.c.l.b16 %v1021
    %v1061 = vunpack.c.l.b16 %v1022
    %v1062 = vunpack.c.l.b16 %v1023
    %v1063 = vunpack.c.l.b16 %v1024
    %v1064 = vunpack.c.l.b16 %v1025
    %v1065 = vunpack.c.l.b16 %v1026
    %v1066 = vunpack.c.l.b16 %v1027
    %v1067 = vunpack.c.l.b16 %v1028
    %v1068 = vunpack.c.l.b16 %v1029
    %v1069 = vunpack.c.l.b16 %v1030
    %v1070 = vunpack.c.l.b16 %v1031
    %v1071 = vunpack.c.l.b16 %v1032
    %v1072 = vunpack.c.l.b16 %v1033
    %v1073 = vunpack.c.l.b16 %v1034
    %v1074 = vunpack.c.l.b16 %v1035
    %v1075 = vunpack.c.l.b16 %v1036
    %v1076 = vpack.c.b16 %v1061, %v1060
    %v1077 = vpack.c.b16 %v1063, %v1062
    %v1078 = vpack.c.b16 %v1065, %v1064
    %v1079 = vpack.c.b16 %v1067, %v1066
    %v1080 = vpack.c.b16 %v1069, %v1068
    %v1081 = vpack.c.b16 %v1071, %v1070
    %v1082 = vpack.c.b16 %v1073, %v1072
    %v1083 = vpack.c.b16 %v1075, %v1074
    %1092 = vmatprep.subr.bf16.mxu0 0
    %1093 = vmatpush1.bf16.msra.mxu0 %v1083
    %1094 = vmatprep.subr.bf16.mxu0 0
    %1095 = vmatpush1.bf16.msra.mxu0 %v1082
    %1096 = vmatprep.subr.bf16.mxu0 0
    %1097 = vmatpush1.bf16.msra.mxu0 %v1081
    %1098 = vmatprep.subr.bf16.mxu0 0
    %1099 = vmatpush1.bf16.msra.mxu0 %v1080
    %1100 = vmatprep.subr.bf16.mxu0 0
    %1101 = vmatpush1.bf16.msra.mxu0 %v1079
    %1102 = vmatprep.subr.bf16.mxu0 0
    %1103 = vmatpush1.bf16.msra.mxu0 %v1078
    %1104 = vmatprep.subr.bf16.mxu0 0
    %1105 = vmatpush1.bf16.msra.mxu0 %v1077
    %1106 = vmatprep.subr.bf16.mxu0 0
    %1107 = vmatpush1.bf16.msra.mxu0 %v1076
    %1108 = vmatprep.subr.bf16.mxu0 0
    %1109 = vmatpush2.bf16.msra.mxu0 0
    %1110 = vmatprep.subr.bf16.mxu0 0
    %1111 = vmatpush2.bf16.msra.mxu0 0
    %1112 = vmatprep.subr.bf16.mxu0 0
    %1113 = vmatpush2.bf16.msra.mxu0 0
    %1114 = vmatprep.subr.bf16.mxu0 0
    %1115 = vmatpush2.bf16.msra.mxu0 0
    %1116 = vmatprep.subr.bf16.mxu0 0
    %1117 = vmatpush2.bf16.msra.mxu0 0
    %1118 = vmatprep.subr.bf16.mxu0 0
    %1119 = vmatpush2.bf16.msra.mxu0 0
    %1120 = vmatprep.subr.bf16.mxu0 0
    %1121 = vmatpush2.bf16.msra.mxu0 0
    %1122 = vmatprep.subr.bf16.mxu0 0
    %1123 = vmatpush2.bf16.msra.mxu0 0
    %1124 = vmatprep.mubr.bf16.mxu0 0
    %1125 = vmatmul.mubr.bf16.gmra.mxu0 %v1020
    %v1126 = vpop.f32.mrf.mxu0
    %v1127 = vadd.f32 %v1042, %v1126
    %v1128 = vpop.f32.mrf.mxu0
    %v1129 = vpop.f32.mrf.mxu0
    %v1130 = vadd.f32 %v1042, %v1129
    %v1131 = vpop.f32.mrf.mxu0
    %1132 = vdwg.mxu0
    %v1133 = vmax.f32 %v1127, 0.0
    %v1134 = vmax.f32 %v1130, 0.0
    %v1135 = vpack.c.bf16 %v1134, %v1133
    %v1136 = vld [vmem:[#allocation11] sm:$0xff]
    %v1137 = vld [vmem:[#allocation11 + $0x8] sm:$0xff]
    %v1138 = vld [vmem:[#allocation11 + $0x10] sm:$0xff]
    %v1139 = vld [vmem:[#allocation11 + $0x18] sm:$0xff]
    %v1140 = vld [vmem:[#allocation11 + $0x20] sm:$0xff]
    %v1141 = vld [vmem:[#allocation11 + $0x28] sm:$0xff]
    %v1142 = vld [vmem:[#allocation11 + $0x30] sm:$0xff]
    %v1143 = vld [vmem:[#allocation11 + $0x38] sm:$0xff]
    %v1144 = vld [vmem:[#allocation11 + $0x40] sm:$0xff]
    %v1145 = vld [vmem:[#allocation11 + $0x48] sm:$0xff]
    %v1146 = vld [vmem:[#allocation11 + $0x50] sm:$0xff]
    %v1147 = vld [vmem:[#allocation11 + $0x58] sm:$0xff]
    %v1148 = vld [vmem:[#allocation11 + $0x60] sm:$0xff]
    %v1149 = vld [vmem:[#allocation11 + $0x68] sm:$0xff]
    %v1150 = vld [vmem:[#allocation11 + $0x70] sm:$0xff]
    %v1151 = vld [vmem:[#allocation11 + $0x78] sm:$0xff]
    %v1152 = vld [vmem:[#allocation11 + $0x80] sm:$0xff]
    %v1153 = vld [vmem:[#allocation11 + $0x88] sm:$0xff]
    %v1154 = vld [vmem:[#allocation11 + $0x90] sm:$0xff]
    %v1155 = vld [vmem:[#allocation11 + $0x98] sm:$0xff]
    %v1156 = vld [vmem:[#allocation11 + $0xa0] sm:$0xff]
    %v1157 = vld [vmem:[#allocation11 + $0xa8] sm:$0xff]
    %v1158 = vld [vmem:[#allocation11 + $0xb0] sm:$0xff]
    %v1159 = vld [vmem:[#allocation11 + $0xb8] sm:$0xff]
    %v1160 = vld [vmem:[#allocation11 + $0xc0] sm:$0xff]
    %v1161 = vld [vmem:[#allocation11 + $0xc8] sm:$0xff]
    %v1162 = vld [vmem:[#allocation11 + $0xd0] sm:$0xff]
    %v1163 = vld [vmem:[#allocation11 + $0xd8] sm:$0xff]
    %v1164 = vld [vmem:[#allocation11 + $0xe0] sm:$0xff]
    %v1165 = vld [vmem:[#allocation11 + $0xe8] sm:$0xff]
    %v1166 = vld [vmem:[#allocation11 + $0xf0] sm:$0xff]
    %v1167 = vld [vmem:[#allocation11 + $0xf8] sm:$0xff]
    %v1168 = vld [vmem:[#allocation11 + $0x100] sm:$0xff]
    %v1169 = vld [vmem:[#allocation11 + $0x108] sm:$0xff]
    %v1170 = vld [vmem:[#allocation11 + $0x110] sm:$0xff]
    %v1171 = vld [vmem:[#allocation11 + $0x118] sm:$0xff]
    %v1172 = vld [vmem:[#allocation11 + $0x120] sm:$0xff]
    %v1173 = vld [vmem:[#allocation11 + $0x128] sm:$0xff]
    %v1174 = vld [vmem:[#allocation11 + $0x130] sm:$0xff]
    %v1175 = vld [vmem:[#allocation11 + $0x138] sm:$0xff]
    %v1176 = vld [vmem:[#allocation11 + $0x140] sm:$0xff]
    %v1177 = vld [vmem:[#allocation11 + $0x148] sm:$0xff]
    %v1178 = vld [vmem:[#allocation11 + $0x150] sm:$0xff]
    %v1179 = vld [vmem:[#allocation11 + $0x158] sm:$0xff]
    %v1180 = vld [vmem:[#allocation11 + $0x160] sm:$0xff]
    %v1181 = vld [vmem:[#allocation11 + $0x168] sm:$0xff]
    %v1182 = vld [vmem:[#allocation11 + $0x170] sm:$0xff]
    %v1183 = vld [vmem:[#allocation11 + $0x178] sm:$0xff]
    %v1184 = vld [vmem:[#allocation11 + $0x180] sm:$0xff]
    %v1185 = vld [vmem:[#allocation11 + $0x188] sm:$0xff]
    %v1186 = vld [vmem:[#allocation11 + $0x190] sm:$0xff]
    %v1187 = vld [vmem:[#allocation11 + $0x198] sm:$0xff]
    %v1188 = vld [vmem:[#allocation11 + $0x1a0] sm:$0xff]
    %v1189 = vld [vmem:[#allocation11 + $0x1a8] sm:$0xff]
    %v1190 = vld [vmem:[#allocation11 + $0x1b0] sm:$0xff]
    %v1191 = vld [vmem:[#allocation11 + $0x1b8] sm:$0xff]
    %v1192 = vld [vmem:[#allocation11 + $0x1c0] sm:$0xff]
    %v1193 = vld [vmem:[#allocation11 + $0x1c8] sm:$0xff]
    %v1194 = vld [vmem:[#allocation11 + $0x1d0] sm:$0xff]
    %v1195 = vld [vmem:[#allocation11 + $0x1d8] sm:$0xff]
    %v1196 = vld [vmem:[#allocation11 + $0x1e0] sm:$0xff]
    %v1197 = vld [vmem:[#allocation11 + $0x1e8] sm:$0xff]
    %v1198 = vld [vmem:[#allocation11 + $0x1f0] sm:$0xff]
    %v1199 = vld [vmem:[#allocation11 + $0x1f8] sm:$0xff]
    %v1200 = vld [vmem:[%s9] sm:$0xff]
    %v1202 = vlaneseq
    %v1203 = vshrl.u32 %v1202, 7
    %v1204 = vsub.s32 0, %v1203
    %v1205 = vrot.slane %v1200, %v1204
    %v1206 = vlaneseq
    %v1207 = vshrl.u32 %v1206, 7
    %v1208 = vsub.s32 1, %v1207
    %v1209 = vrot.slane %v1200, %v1208
    %v1210 = vlaneseq
    %v1211 = vshrl.u32 %v1210, 7
    %v1212 = vsub.s32 2, %v1211
    %v1213 = vrot.slane %v1200, %v1212
    %v1214 = vlaneseq
    %v1215 = vshrl.u32 %v1214, 7
    %v1216 = vsub.s32 3, %v1215
    %v1217 = vrot.slane %v1200, %v1216
    %v1218 = vlaneseq
    %v1219 = vshrl.u32 %v1218, 7
    %v1220 = vsub.s32 4, %v1219
    %v1221 = vrot.slane %v1200, %v1220
    %v1222 = vlaneseq
    %v1223 = vshrl.u32 %v1222, 7
    %v1224 = vsub.s32 5, %v1223
    %v1225 = vrot.slane %v1200, %v1224
    %v1226 = vlaneseq
    %v1227 = vshrl.u32 %v1226, 7
    %v1228 = vsub.s32 6, %v1227
    %v1229 = vrot.slane %v1200, %v1228
    %v1230 = vlaneseq
    %v1231 = vshrl.u32 %v1230, 7
    %v1232 = vsub.s32 7, %v1231
    %v1233 = vrot.slane %v1200, %v1232
    %v1306 = vunpack.c.l.b16 %v1136
    %v1307 = vunpack.c.h.b16 %v1136
    %v1308 = vunpack.c.l.b16 %v1137
    %v1309 = vunpack.c.h.b16 %v1137
    %v1310 = vunpack.c.l.b16 %v1138
    %v1311 = vunpack.c.h.b16 %v1138
    %v1312 = vunpack.c.l.b16 %v1139
    %v1313 = vunpack.c.h.b16 %v1139
    %v1314 = vunpack.c.l.b16 %v1140
    %v1315 = vunpack.c.h.b16 %v1140
    %v1316 = vunpack.c.l.b16 %v1141
    %v1317 = vunpack.c.h.b16 %v1141
    %v1318 = vunpack.c.l.b16 %v1142
    %v1319 = vunpack.c.h.b16 %v1142
    %v1320 = vunpack.c.l.b16 %v1143
    %v1321 = vunpack.c.h.b16 %v1143
    %v1322 = vunpack.c.l.b16 %v1144
    %v1323 = vunpack.c.h.b16 %v1144
    %v1324 = vunpack.c.l.b16 %v1145
    %v1325 = vunpack.c.h.b16 %v1145
    %v1326 = vunpack.c.l.b16 %v1146
    %v1327 = vunpack.c.h.b16 %v1146
    %v1328 = vunpack.c.l.b16 %v1147
    %v1329 = vunpack.c.h.b16 %v1147
    %v1330 = vunpack.c.l.b16 %v1148
    %v1331 = vunpack.c.h.b16 %v1148
    %v1332 = vunpack.c.l.b16 %v1149
    %v1333 = vunpack.c.h.b16 %v1149
    %v1334 = vunpack.c.l.b16 %v1150
    %v1335 = vunpack.c.h.b16 %v1150
    %v1336 = vunpack.c.l.b16 %v1151
    %v1337 = vunpack.c.h.b16 %v1151
    %v1338 = vunpack.c.l.b16 %v1152
    %v1339 = vunpack.c.h.b16 %v1152
    %v1340 = vunpack.c.l.b16 %v1153
    %v1341 = vunpack.c.h.b16 %v1153
    %v1342 = vunpack.c.l.b16 %v1154
    %v1343 = vunpack.c.h.b16 %v1154
    %v1344 = vunpack.c.l.b16 %v1155
    %v1345 = vunpack.c.h.b16 %v1155
    %v1346 = vunpack.c.l.b16 %v1156
    %v1347 = vunpack.c.h.b16 %v1156
    %v1348 = vunpack.c.l.b16 %v1157
    %v1349 = vunpack.c.h.b16 %v1157
    %v1350 = vunpack.c.l.b16 %v1158
    %v1351 = vunpack.c.h.b16 %v1158
    %v1352 = vunpack.c.l.b16 %v1159
    %v1353 = vunpack.c.h.b16 %v1159
    %v1354 = vunpack.c.l.b16 %v1160
    %v1355 = vunpack.c.h.b16 %v1160
    %v1356 = vunpack.c.l.b16 %v1161
    %v1357 = vunpack.c.h.b16 %v1161
    %v1358 = vunpack.c.l.b16 %v1162
    %v1359 = vunpack.c.h.b16 %v1162
    %v1360 = vunpack.c.l.b16 %v1163
    %v1361 = vunpack.c.h.b16 %v1163
    %v1362 = vunpack.c.l.b16 %v1164
    %v1363 = vunpack.c.h.b16 %v1164
    %v1364 = vunpack.c.l.b16 %v1165
    %v1365 = vunpack.c.h.b16 %v1165
    %v1366 = vunpack.c.l.b16 %v1166
    %v1367 = vunpack.c.h.b16 %v1166
    %v1368 = vunpack.c.l.b16 %v1167
    %v1369 = vunpack.c.h.b16 %v1167
    %v1370 = vunpack.c.l.b16 %v1168
    %v1371 = vunpack.c.h.b16 %v1168
    %v1372 = vunpack.c.l.b16 %v1169
    %v1373 = vunpack.c.h.b16 %v1169
    %v1374 = vunpack.c.l.b16 %v1170
    %v1375 = vunpack.c.h.b16 %v1170
    %v1376 = vunpack.c.l.b16 %v1171
    %v1377 = vunpack.c.h.b16 %v1171
    %v1378 = vunpack.c.l.b16 %v1172
    %v1379 = vunpack.c.h.b16 %v1172
    %v1380 = vunpack.c.l.b16 %v1173
    %v1381 = vunpack.c.h.b16 %v1173
    %v1382 = vunpack.c.l.b16 %v1174
    %v1383 = vunpack.c.h.b16 %v1174
    %v1384 = vunpack.c.l.b16 %v1175
    %v1385 = vunpack.c.h.b16 %v1175
    %v1386 = vunpack.c.l.b16 %v1176
    %v1387 = vunpack.c.h.b16 %v1176
    %v1388 = vunpack.c.l.b16 %v1177
    %v1389 = vunpack.c.h.b16 %v1177
    %v1390 = vunpack.c.l.b16 %v1178
    %v1391 = vunpack.c.h.b16 %v1178
    %v1392 = vunpack.c.l.b16 %v1179
    %v1393 = vunpack.c.h.b16 %v1179
    %v1394 = vunpack.c.l.b16 %v1180
    %v1395 = vunpack.c.h.b16 %v1180
    %v1396 = vunpack.c.l.b16 %v1181
    %v1397 = vunpack.c.h.b16 %v1181
    %v1398 = vunpack.c.l.b16 %v1182
    %v1399 = vunpack.c.h.b16 %v1182
    %v1400 = vunpack.c.l.b16 %v1183
    %v1401 = vunpack.c.h.b16 %v1183
    %v1402 = vunpack.c.l.b16 %v1184
    %v1403 = vunpack.c.h.b16 %v1184
    %v1404 = vunpack.c.l.b16 %v1185
    %v1405 = vunpack.c.h.b16 %v1185
    %v1406 = vunpack.c.l.b16 %v1186
    %v1407 = vunpack.c.h.b16 %v1186
    %v1408 = vunpack.c.l.b16 %v1187
    %v1409 = vunpack.c.h.b16 %v1187
    %v1410 = vunpack.c.l.b16 %v1188
    %v1411 = vunpack.c.h.b16 %v1188
    %v1412 = vunpack.c.l.b16 %v1189
    %v1413 = vunpack.c.h.b16 %v1189
    %v1414 = vunpack.c.l.b16 %v1190
    %v1415 = vunpack.c.h.b16 %v1190
    %v1416 = vunpack.c.l.b16 %v1191
    %v1417 = vunpack.c.h.b16 %v1191
    %v1418 = vunpack.c.l.b16 %v1192
    %v1419 = vunpack.c.h.b16 %v1192
    %v1420 = vunpack.c.l.b16 %v1193
    %v1421 = vunpack.c.h.b16 %v1193
    %v1422 = vunpack.c.l.b16 %v1194
    %v1423 = vunpack.c.h.b16 %v1194
    %v1424 = vunpack.c.l.b16 %v1195
    %v1425 = vunpack.c.h.b16 %v1195
    %v1426 = vunpack.c.l.b16 %v1196
    %v1427 = vunpack.c.h.b16 %v1196
    %v1428 = vunpack.c.l.b16 %v1197
    %v1429 = vunpack.c.h.b16 %v1197
    %v1430 = vunpack.c.l.b16 %v1198
    %v1431 = vunpack.c.h.b16 %v1198
    %v1432 = vunpack.c.l.b16 %v1199
    %v1433 = vunpack.c.h.b16 %v1199
    %v1434 = vpack.c.b16 %v1314, %v1306
    %v1435 = vpack.c.b16 %v1315, %v1307
    %v1436 = vpack.c.b16 %v1316, %v1308
    %v1437 = vpack.c.b16 %v1317, %v1309
    %v1438 = vpack.c.b16 %v1318, %v1310
    %v1439 = vpack.c.b16 %v1319, %v1311
    %v1440 = vpack.c.b16 %v1320, %v1312
    %v1441 = vpack.c.b16 %v1321, %v1313
    %v1442 = vpack.c.b16 %v1330, %v1322
    %v1443 = vpack.c.b16 %v1331, %v1323
    %v1444 = vpack.c.b16 %v1332, %v1324
    %v1445 = vpack.c.b16 %v1333, %v1325
    %v1446 = vpack.c.b16 %v1334, %v1326
    %v1447 = vpack.c.b16 %v1335, %v1327
    %v1448 = vpack.c.b16 %v1336, %v1328
    %v1449 = vpack.c.b16 %v1337, %v1329
    %v1450 = vpack.c.b16 %v1346, %v1338
    %v1451 = vpack.c.b16 %v1347, %v1339
    %v1452 = vpack.c.b16 %v1348, %v1340
    %v1453 = vpack.c.b16 %v1349, %v1341
    %v1454 = vpack.c.b16 %v1350, %v1342
    %v1455 = vpack.c.b16 %v1351, %v1343
    %v1456 = vpack.c.b16 %v1352, %v1344
    %v1457 = vpack.c.b16 %v1353, %v1345
    %v1458 = vpack.c.b16 %v1362, %v1354
    %v1459 = vpack.c.b16 %v1363, %v1355
    %v1460 = vpack.c.b16 %v1364, %v1356
    %v1461 = vpack.c.b16 %v1365, %v1357
    %v1462 = vpack.c.b16 %v1366, %v1358
    %v1463 = vpack.c.b16 %v1367, %v1359
    %v1464 = vpack.c.b16 %v1368, %v1360
    %v1465 = vpack.c.b16 %v1369, %v1361
    %v1466 = vpack.c.b16 %v1378, %v1370
    %v1467 = vpack.c.b16 %v1379, %v1371
    %v1468 = vpack.c.b16 %v1380, %v1372
    %v1469 = vpack.c.b16 %v1381, %v1373
    %v1470 = vpack.c.b16 %v1382, %v1374
    %v1471 = vpack.c.b16 %v1383, %v1375
    %v1472 = vpack.c.b16 %v1384, %v1376
    %v1473 = vpack.c.b16 %v1385, %v1377
    %v1474 = vpack.c.b16 %v1394, %v1386
    %v1475 = vpack.c.b16 %v1395, %v1387
    %v1476 = vpack.c.b16 %v1396, %v1388
    %v1477 = vpack.c.b16 %v1397, %v1389
    %v1478 = vpack.c.b16 %v1398, %v1390
    %v1479 = vpack.c.b16 %v1399, %v1391
    %v1480 = vpack.c.b16 %v1400, %v1392
    %v1481 = vpack.c.b16 %v1401, %v1393
    %v1482 = vpack.c.b16 %v1410, %v1402
    %v1483 = vpack.c.b16 %v1411, %v1403
    %v1484 = vpack.c.b16 %v1412, %v1404
    %v1485 = vpack.c.b16 %v1413, %v1405
    %v1486 = vpack.c.b16 %v1414, %v1406
    %v1487 = vpack.c.b16 %v1415, %v1407
    %v1488 = vpack.c.b16 %v1416, %v1408
    %v1489 = vpack.c.b16 %v1417, %v1409
    %v1490 = vpack.c.b16 %v1426, %v1418
    %v1491 = vpack.c.b16 %v1427, %v1419
    %v1492 = vpack.c.b16 %v1428, %v1420
    %v1493 = vpack.c.b16 %v1429, %v1421
    %v1494 = vpack.c.b16 %v1430, %v1422
    %v1495 = vpack.c.b16 %v1431, %v1423
    %v1496 = vpack.c.b16 %v1432, %v1424
    %v1497 = vpack.c.b16 %v1433, %v1425
    %1562 = vmatprep.subr.bf16.mxu0 %v1491
    %1563 = vmatpush1.bf16.msra.mxu0 %v1490
    %1564 = vmatprep.subr.bf16.mxu0 %v1483
    %1565 = vmatpush1.bf16.msra.mxu0 %v1482
    %1566 = vmatprep.subr.bf16.mxu0 %v1475
    %1567 = vmatpush1.bf16.msra.mxu0 %v1474
    %1568 = vmatprep.subr.bf16.mxu0 %v1467
    %1569 = vmatpush1.bf16.msra.mxu0 %v1466
    %1570 = vmatprep.subr.bf16.mxu0 %v1459
    %1571 = vmatpush1.bf16.msra.mxu0 %v1458
    %1572 = vmatprep.subr.bf16.mxu0 %v1451
    %1573 = vmatpush1.bf16.msra.mxu0 %v1450
    %1574 = vmatprep.subr.bf16.mxu0 %v1443
    %1575 = vmatpush1.bf16.msra.mxu0 %v1442
    %1576 = vmatprep.subr.bf16.mxu0 %v1435
    %1577 = vmatpush1.bf16.msra.mxu0 %v1434
    %1578 = vmatprep.subr.bf16.mxu0 0
    %1579 = vmatpush2.bf16.msra.mxu0 0
    %1580 = vmatprep.subr.bf16.mxu0 0
    %1581 = vmatpush2.bf16.msra.mxu0 0
    %1582 = vmatprep.subr.bf16.mxu0 0
    %1583 = vmatpush2.bf16.msra.mxu0 0
    %1584 = vmatprep.subr.bf16.mxu0 0
    %1585 = vmatpush2.bf16.msra.mxu0 0
    %1586 = vmatprep.subr.bf16.mxu0 0
    %1587 = vmatpush2.bf16.msra.mxu0 0
    %1588 = vmatprep.subr.bf16.mxu0 0
    %1589 = vmatpush2.bf16.msra.mxu0 0
    %1590 = vmatprep.subr.bf16.mxu0 0
    %1591 = vmatpush2.bf16.msra.mxu0 0
    %1592 = vmatprep.subr.bf16.mxu0 0
    %1593 = vmatpush2.bf16.msra.mxu0 0
    %1594 = vmatprep.mubr.bf16.mxu0 0
    %1595 = vmatmul.mubr.bf16.gmra.mxu0 %v1135
    %v1596 = vpop.f32.mrf.mxu0
    %v1597 = vadd.f32 %v1205, %v1596
    %v1598 = vpop.f32.mrf.mxu0
    %v1599 = vadd.f32 %v1209, %v1598
    %v1600 = vpop.f32.mrf.mxu0
    %v1601 = vadd.f32 %v1205, %v1600
    %v1602 = vpop.f32.mrf.mxu0
    %v1603 = vadd.f32 %v1209, %v1602
    %1604 = vdwg.mxu0
    %1605 = vmatprep.subr.bf16.mxu0 %v1493
    %1606 = vmatpush1.bf16.msra.mxu0 %v1492
    %1607 = vmatprep.subr.bf16.mxu0 %v1485
    %1608 = vmatpush1.bf16.msra.mxu0 %v1484
    %1609 = vmatprep.subr.bf16.mxu0 %v1477
    %1610 = vmatpush1.bf16.msra.mxu0 %v1476
    %1611 = vmatprep.subr.bf16.mxu0 %v1469
    %1612 = vmatpush1.bf16.msra.mxu0 %v1468
    %1613 = vmatprep.subr.bf16.mxu0 %v1461
    %1614 = vmatpush1.bf16.msra.mxu0 %v1460
    %1615 = vmatprep.subr.bf16.mxu0 %v1453
    %1616 = vmatpush1.bf16.msra.mxu0 %v1452
    %1617 = vmatprep.subr.bf16.mxu0 %v1445
    %1618 = vmatpush1.bf16.msra.mxu0 %v1444
    %1619 = vmatprep.subr.bf16.mxu0 %v1437
    %1620 = vmatpush1.bf16.msra.mxu0 %v1436
    %1621 = vmatprep.subr.bf16.mxu0 0
    %1622 = vmatpush2.bf16.msra.mxu0 0
    %1623 = vmatprep.subr.bf16.mxu0 0
    %1624 = vmatpush2.bf16.msra.mxu0 0
    %1625 = vmatprep.subr.bf16.mxu0 0
    %1626 = vmatpush2.bf16.msra.mxu0 0
    %1627 = vmatprep.subr.bf16.mxu0 0
    %1628 = vmatpush2.bf16.msra.mxu0 0
    %1629 = vmatprep.subr.bf16.mxu0 0
    %1630 = vmatpush2.bf16.msra.mxu0 0
    %1631 = vmatprep.subr.bf16.mxu0 0
    %1632 = vmatpush2.bf16.msra.mxu0 0
    %1633 = vmatprep.subr.bf16.mxu0 0
    %1634 = vmatpush2.bf16.msra.mxu0 0
    %1635 = vmatprep.subr.bf16.mxu0 0
    %1636 = vmatpush2.bf16.msra.mxu0 0
    %1637 = vmatprep.mubr.bf16.mxu0 0
    %1638 = vmatmul.mubr.bf16.gmra.mxu0 %v1135
    %v1639 = vpop.f32.mrf.mxu0
    %v1640 = vadd.f32 %v1213, %v1639
    %v1641 = vpop.f32.mrf.mxu0
    %v1642 = vadd.f32 %v1217, %v1641
    %v1643 = vpop.f32.mrf.mxu0
    %v1644 = vadd.f32 %v1213, %v1643
    %v1645 = vpop.f32.mrf.mxu0
    %v1646 = vadd.f32 %v1217, %v1645
    %1647 = vdwg.mxu0
    %1648 = vmatprep.subr.bf16.mxu0 %v1495
    %1649 = vmatpush1.bf16.msra.mxu0 %v1494
    %1650 = vmatprep.subr.bf16.mxu0 %v1487
    %1651 = vmatpush1.bf16.msra.mxu0 %v1486
    %1652 = vmatprep.subr.bf16.mxu0 %v1479
    %1653 = vmatpush1.bf16.msra.mxu0 %v1478
    %1654 = vmatprep.subr.bf16.mxu0 %v1471
    %1655 = vmatpush1.bf16.msra.mxu0 %v1470
    %1656 = vmatprep.subr.bf16.mxu0 %v1463
    %1657 = vmatpush1.bf16.msra.mxu0 %v1462
    %1658 = vmatprep.subr.bf16.mxu0 %v1455
    %1659 = vmatpush1.bf16.msra.mxu0 %v1454
    %1660 = vmatprep.subr.bf16.mxu0 %v1447
    %1661 = vmatpush1.bf16.msra.mxu0 %v1446
    %1662 = vmatprep.subr.bf16.mxu0 %v1439
    %1663 = vmatpush1.bf16.msra.mxu0 %v1438
    %1664 = vmatprep.subr.bf16.mxu0 0
    %1665 = vmatpush2.bf16.msra.mxu0 0
    %1666 = vmatprep.subr.bf16.mxu0 0
    %1667 = vmatpush2.bf16.msra.mxu0 0
    %1668 = vmatprep.subr.bf16.mxu0 0
    %1669 = vmatpush2.bf16.msra.mxu0 0
    %1670 = vmatprep.subr.bf16.mxu0 0
    %1671 = vmatpush2.bf16.msra.mxu0 0
    %1672 = vmatprep.subr.bf16.mxu0 0
    %1673 = vmatpush2.bf16.msra.mxu0 0
    %1674 = vmatprep.subr.bf16.mxu0 0
    %1675 = vmatpush2.bf16.msra.mxu0 0
    %1676 = vmatprep.subr.bf16.mxu0 0
    %1677 = vmatpush2.bf16.msra.mxu0 0
    %1678 = vmatprep.subr.bf16.mxu0 0
    %1679 = vmatpush2.bf16.msra.mxu0 0
    %1680 = vmatprep.mubr.bf16.mxu0 0
    %1681 = vmatmul.mubr.bf16.gmra.mxu0 %v1135
    %v1682 = vpop.f32.mrf.mxu0
    %v1683 = vadd.f32 %v1221, %v1682
    %v1684 = vpop.f32.mrf.mxu0
    %v1685 = vadd.f32 %v1225, %v1684
    %v1686 = vpop.f32.mrf.mxu0
    %v1687 = vadd.f32 %v1221, %v1686
    %v1688 = vpop.f32.mrf.mxu0
    %v1689 = vadd.f32 %v1225, %v1688
    %1690 = vdwg.mxu0
    %1691 = vmatprep.subr.bf16.mxu0 %v1497
    %1692 = vmatpush1.bf16.msra.mxu0 %v1496
    %1693 = vmatprep.subr.bf16.mxu0 %v1489
    %1694 = vmatpush1.bf16.msra.mxu0 %v1488
    %1695 = vmatprep.subr.bf16.mxu0 %v1481
    %1696 = vmatpush1.bf16.msra.mxu0 %v1480
    %1697 = vmatprep.subr.bf16.mxu0 %v1473
    %1698 = vmatpush1.bf16.msra.mxu0 %v1472
    %1699 = vmatprep.subr.bf16.mxu0 %v1465
    %1700 = vmatpush1.bf16.msra.mxu0 %v1464
    %1701 = vmatprep.subr.bf16.mxu0 %v1457
    %1702 = vmatpush1.bf16.msra.mxu0 %v1456
    %1703 = vmatprep.subr.bf16.mxu0 %v1449
    %1704 = vmatpush1.bf16.msra.mxu0 %v1448
    %1705 = vmatprep.subr.bf16.mxu0 %v1441
    %1706 = vmatpush1.bf16.msra.mxu0 %v1440
    %1707 = vmatprep.subr.bf16.mxu0 0
    %1708 = vmatpush2.bf16.msra.mxu0 0
    %1709 = vmatprep.subr.bf16.mxu0 0
    %1710 = vmatpush2.bf16.msra.mxu0 0
    %1711 = vmatprep.subr.bf16.mxu0 0
    %1712 = vmatpush2.bf16.msra.mxu0 0
    %1713 = vmatprep.subr.bf16.mxu0 0
    %1714 = vmatpush2.bf16.msra.mxu0 0
    %1715 = vmatprep.subr.bf16.mxu0 0
    %1716 = vmatpush2.bf16.msra.mxu0 0
    %1717 = vmatprep.subr.bf16.mxu0 0
    %1718 = vmatpush2.bf16.msra.mxu0 0
    %1719 = vmatprep.subr.bf16.mxu0 0
    %1720 = vmatpush2.bf16.msra.mxu0 0
    %1721 = vmatprep.subr.bf16.mxu0 0
    %1722 = vmatpush2.bf16.msra.mxu0 0
    %1723 = vmatprep.mubr.bf16.mxu0 0
    %1724 = vmatmul.mubr.bf16.gmra.mxu0 %v1135
    %v1725 = vpop.f32.mrf.mxu0
    %v1726 = vadd.f32 %v1229, %v1725
    %v1727 = vpop.f32.mrf.mxu0
    %v1728 = vadd.f32 %v1233, %v1727
    %v1729 = vpop.f32.mrf.mxu0
    %v1730 = vadd.f32 %v1229, %v1729
    %v1731 = vpop.f32.mrf.mxu0
    %v1732 = vadd.f32 %v1233, %v1731
    %1733 = vdwg.mxu0
    %v1734 = vpack.c.bf16 %v1601, %v1597
    %v1735 = vpack.c.bf16 %v1603, %v1599
    %v1736 = vpack.c.bf16 %v1644, %v1640
    %v1737 = vpack.c.bf16 %v1646, %v1642
    %v1738 = vpack.c.bf16 %v1687, %v1683
    %v1739 = vpack.c.bf16 %v1689, %v1685
    %v1740 = vpack.c.bf16 %v1730, %v1726
    %v1741 = vpack.c.bf16 %v1732, %v1728
    %v1742 = vxor.u32 %v1734, 2147516416
    %v1743 = vxor.u32 %v1735, 2147516416
    %v1744 = vxor.u32 %v1736, 2147516416
    %v1745 = vxor.u32 %v1737, 2147516416
    %v1746 = vxor.u32 %v1738, 2147516416
    %v1747 = vxor.u32 %v1739, 2147516416
    %v1748 = vxor.u32 %v1740, 2147516416
    %v1749 = vxor.u32 %v1741, 2147516416
    %v1751 = vmul.bf16 %v1742, 1069105081
    %v1752 = vpow.bf16.pop %v1751
    %v1754 = vmul.bf16 %v1743, 1069105081
    %v1755 = vpow.bf16.pop %v1754
    %v1757 = vmul.bf16 %v1744, 1069105081
    %v1758 = vpow.bf16.pop %v1757
    %v1760 = vmul.bf16 %v1745, 1069105081
    %v1761 = vpow.bf16.pop %v1760
    %v1763 = vmul.bf16 %v1746, 1069105081
    %v1764 = vpow.bf16.pop %v1763
    %v1766 = vmul.bf16 %v1747, 1069105081
    %v1767 = vpow.bf16.pop %v1766
    %v1769 = vmul.bf16 %v1748, 1069105081
    %v1770 = vpow.bf16.pop %v1769
    %v1772 = vmul.bf16 %v1749, 1069105081
    %v1773 = vpow.bf16.pop %v1772
    %v1774 = vadd.bf16 %v1752, 1065369472
    %v1775 = vadd.bf16 %v1755, 1065369472
    %v1776 = vadd.bf16 %v1758, 1065369472
    %v1777 = vadd.bf16 %v1761, 1065369472
    %v1778 = vadd.bf16 %v1764, 1065369472
    %v1779 = vadd.bf16 %v1767, 1065369472
    %v1780 = vadd.bf16 %v1770, 1065369472
    %v1781 = vadd.bf16 %v1773, 1065369472
    %v1782 = vrcp.bf16.pop %v1774
    %v1783 = vmul.bf16 1065369472, %v1782
    %v1784 = vrcp.bf16.pop %v1775
    %v1785 = vmul.bf16 1065369472, %v1784
    %v1786 = vrcp.bf16.pop %v1776
    %v1787 = vmul.bf16 1065369472, %v1786
    %v1788 = vrcp.bf16.pop %v1777
    %v1789 = vmul.bf16 1065369472, %v1788
    %v1790 = vrcp.bf16.pop %v1778
    %v1791 = vmul.bf16 1065369472, %v1790
    %v1792 = vrcp.bf16.pop %v1779
    %v1793 = vmul.bf16 1065369472, %v1792
    %v1794 = vrcp.bf16.pop %v1780
    %v1795 = vmul.bf16 1065369472, %v1794
    %v1796 = vrcp.bf16.pop %v1781
    %v1797 = vmul.bf16 1065369472, %v1796
    %v1806 = vunpack.c.l.b16 %v1783
    %v1807 = vunpack.c.l.b16 %v1785
    %v1808 = vunpack.c.l.b16 %v1787
    %v1809 = vunpack.c.l.b16 %v1789
    %v1810 = vunpack.c.l.b16 %v1791
    %v1811 = vunpack.c.l.b16 %v1793
    %v1812 = vunpack.c.l.b16 %v1795
    %v1813 = vunpack.c.l.b16 %v1797
    %v1814 = vunpack.c.h.b16 %v1783
    %v1815 = vunpack.c.h.b16 %v1785
    %v1816 = vunpack.c.h.b16 %v1787
    %v1817 = vunpack.c.h.b16 %v1789
    %v1818 = vunpack.c.h.b16 %v1791
    %v1819 = vunpack.c.h.b16 %v1793
    %v1820 = vunpack.c.h.b16 %v1795
    %v1821 = vunpack.c.h.b16 %v1797
    %v1822 = vpack.c.b16 %v1807, %v1806
    %v1823 = vpack.c.b16 %v1809, %v1808
    %v1824 = vpack.c.b16 %v1811, %v1810
    %v1825 = vpack.c.b16 %v1813, %v1812
    %v1826 = vpack.c.b16 %v1815, %v1814
    %v1827 = vpack.c.b16 %v1817, %v1816
    %v1828 = vpack.c.b16 %v1819, %v1818
    %v1829 = vpack.c.b16 %v1821, %v1820
    %1838 = vst [vmem:[#allocation13] sm:$0xff] %v1822
    %1839 = vst [vmem:[#allocation13 + $0x8] sm:$0xff] %v1823
    %1840 = vst [vmem:[#allocation13 + $0x10] sm:$0xff] %v1824
    %1841 = vst [vmem:[#allocation13 + $0x18] sm:$0xff] %v1825
    %1842 = vst [vmem:[#allocation13 + $0x20] sm:$0xff] %v1826
    %1843 = vst [vmem:[#allocation13 + $0x28] sm:$0xff] %v1827
    %1844 = vst [vmem:[#allocation13 + $0x30] sm:$0xff] %v1828
    %1845 = vst [vmem:[#allocation13 + $0x38] sm:$0xff] %v1829
    %1846 = vst [vmem:[#allocation14] sm:$0xff] %v1000
    %1847 = vst [vmem:[#allocation14 + $0x8] sm:$0xff] %v1002
    %1848 = vst [vmem:[#allocation14 + $0x10] sm:$0xff] %v1004
    %1849 = vst [vmem:[#allocation14 + $0x18] sm:$0xff] %v1006
    // Predicated region
    $region66: #{tpu_custom_call.1} parent=1 // pred_check
      _
    $region67: #{tpu_custom_call.1} parent=1 // pred_check_branch
      %1851 = sbr.rel (0) target = $region69
    $region68: #{tpu_custom_call.1} parent=1 // pred_region
      %s1853 = ssub.s32 1024, 1024
      %1854 = vsyncadd [#allocation4], %s1853
      %s1855 = sshll.u32 [#allocation13], 4
      %s1856 = int_to_ptr.vmem [resolvable:$true] %s1855
      %1861 = dma.vmem_to_hbm [thread:$0]  %s1856, 1024, %s10, [#allocation4], 512, 512, 32
    $region69: #{tpu_custom_call.1} parent=1 // pred_fallthru
      _
    // Predicated region
    $region70: #{tpu_custom_call.1} parent=1 // pred_check
      _
    $region71: #{tpu_custom_call.1} parent=1 // pred_check_branch
      %1863 = sbr.rel (0) target = $region73
    $region72: #{tpu_custom_call.1} parent=1 // pred_region
      %s1865 = ssub.s32 512, 512
      %1866 = vsyncadd [#allocation15], %s1865
      %s1867 = sshll.u32 [#allocation14], 4
      %s1868 = int_to_ptr.vmem [resolvable:$true] %s1867
      %1873 = dma.vmem_to_hbm [thread:$0]  %s1868, 512, %s11, [#allocation15], 256, 256, 16
    $region73: #{tpu_custom_call.1} parent=1 // pred_fallthru
      _
    // Predicated region
    $region74: #{tpu_custom_call.1} parent=1 // pred_check
      _
    $region75: #{tpu_custom_call.1} parent=1 // pred_check_branch
      %1875 = sbr.rel (0) target = $region77
    $region76: #{tpu_custom_call.1} parent=1 // pred_region
      %1876 = dma.done [#allocation4], 1024
    $region77: #{tpu_custom_call.1} parent=1 // pred_fallthru
      _
    // Predicated region
    $region78: #{tpu_custom_call.1} parent=1 // pred_check
      _
    $region79: #{tpu_custom_call.1} parent=1 // pred_check_branch
      %1878 = sbr.rel (0) target = $region81
    $region80: #{tpu_custom_call.1} parent=1 // pred_region
      %1879 = dma.done [#allocation15], 512
    $region81: #{tpu_custom_call.1} parent=1 // pred_fallthru
      _
    %1880 = vsyncpa [#allocation3], 1
    %1881 = vsyncpa [#allocation6], 1
    %1882 = vsyncpa [#allocation9], 1
    %1883 = vsyncpa [#allocation12], 1
    %1884 = vsyncpa [#allocation4], 1
    %1885 = vsyncpa [#allocation15], 1

</llo_original>
